<compile_context>
chip_gen: v7x
topology: tpu7x:2x2x1
jax: 0.10.0
libtpu: 0.0.40
codegen_flags: <defaults>
</compile_context>

<pallas_src>
import jax
import jax.numpy as jnp
import numpy as np
from jax.experimental import pallas as pl
from jax.experimental.pallas import tpu as pltpu


# ---------------------------------------------------------------------------
# Fused kernel: per-point MLP + BN + relu, global max-pool, MLP head.
# All per-point tensors are (channels, points): channels on sublanes,
# points on lanes.
# ---------------------------------------------------------------------------
def _pointnet_kernel(
    x_ref,                       # (1, Cin, N) f32 : one batch element, channels-first
    w1_ref, s1_ref, t1_ref,      # conv1 weight (64, Cin) f32, folded BN1 (64, 1) f32
    w2_ref, s2_ref, t2_ref,      # conv2 weight (128, 64) bf16, BN2 (128, 1) f32
    w3_ref, s3_ref, t3_ref,      # conv3 weight (L, 128) bf16,  BN3 (L, 1) f32
    l1_ref, s4_ref, t4_ref,      # lin1 weight (L, L) bf16,     BN4 (L, 1) f32
    l2_ref, s5_ref, t5_ref,      # lin2 weight (L, L) bf16,     BN5 (L, 1) f32
    out_ref,                     # (1, L, 1) f32
):
    x = x_ref[0]                                        # (Cin, N) f32
    w1 = w1_ref[...]                                    # (64, Cin) f32
    cin = x.shape[0]

    # conv1 (K = Cin = 3) on the VPU: broadcast FMAs, no padded MXU pass.
    h = w1[:, 0:1] * x[0:1, :]                          # (64, 1)*(1, N) -> (64, N)
    for c in range(1, cin):
        h = h + w1[:, c:c + 1] * x[c:c + 1, :]
    h = jnp.maximum(h * s1_ref[...] + t1_ref[...], 0.0)            # (64, N) f32
    h = h.astype(jnp.bfloat16)

    # conv2 + BN2 + relu (bf16 operands, f32 accumulate, f32 epilogue)
    h = jnp.dot(w2_ref[...], h, preferred_element_type=jnp.float32)
    h = jnp.maximum(h * s2_ref[...] + t2_ref[...], 0.0)            # (128, N) f32
    h = h.astype(jnp.bfloat16)

    # conv3 + BN3 (no relu)
    h = jnp.dot(w3_ref[...], h, preferred_element_type=jnp.float32)
    h = h * s3_ref[...] + t3_ref[...]                              # (L, N) f32

    # global max over the point (lane) axis
    g = jnp.max(h, axis=1, keepdims=True)                          # (L, 1) f32

    # fused MLP head: lin1/lin2 + BN4/BN5 + relu on the pooled code
    z = jnp.dot(l1_ref[...], g.astype(l1_ref.dtype),
                preferred_element_type=jnp.float32)
    z = jnp.maximum(z * s4_ref[...] + t4_ref[...], 0.0)
    z = jnp.dot(l2_ref[...], z.astype(l2_ref.dtype),
                preferred_element_type=jnp.float32)
    z = jnp.maximum(z * s5_ref[...] + t5_ref[...], 0.0)            # (L, 1) f32

    out_ref[0] = z.astype(out_ref.dtype)


def pointnet_forward(x_bcn, params):
    """x_bcn: (B, dim_input, N) float32 — native PyTorch Conv1d layout.

    Returns (B, nlatent) float32 latent codes.
    """
    B, Cin, N = x_bcn.shape
    L = params["w3"].shape[1]

    # Transposed ("channels-on-sublane") weights / column scale-shift vectors
    # for the kernel.  Pure layout plumbing on tiny arrays.
    col = lambda v: v.reshape(-1, 1)                    # (1, C) -> (C, 1)
    weights = (
        params["w1"].T, col(params["s1"]), col(params["t1"]),
        params["w2"].T, col(params["s2"]), col(params["t2"]),
        params["w3"].T, col(params["s3"]), col(params["t3"]),
        params["wl1"].T, col(params["s4"]), col(params["t4"]),
        params["wl2"].T, col(params["s5"]), col(params["t5"]),
    )

    def full_spec(a):
        nd = a.ndim
        return pl.BlockSpec(a.shape, lambda i: (0,) * nd)

    out = pl.pallas_call(
        _pointnet_kernel,
        out_shape=jax.ShapeDtypeStruct((B, L, 1), jnp.float32),
        grid_spec=pltpu.PrefetchScalarGridSpec(
            num_scalar_prefetch=0,
            grid=(B,),
            in_specs=[pl.BlockSpec((1, Cin, N), lambda i: (i, 0, 0))]
            + [full_spec(a) for a in weights],
            out_specs=pl.BlockSpec((1, L, 1), lambda i: (i, 0, 0)),
        ),
        compiler_params=pltpu.CompilerParams(
            dimension_semantics=("parallel",),
            # Above every generation's scoped-VMEM default, below v7x's 64 MiB
            # physical; per-step usage is only ~N * 1.4 KiB + ~1.7 MiB weights.
            vmem_limit_bytes=48 * 1024 * 1024,
        ),
    )(x_bcn, *weights)

    return out.reshape(B, L)


# ---------------------------------------------------------------------------
# Parameters (eval-mode BN folded into per-channel scale/shift).
# ---------------------------------------------------------------------------
def _fold_bn(bias, gamma, beta, mean, var, eps=1e-5):
    """Fold (pre-activation bias) + eval-mode BatchNorm into scale/shift."""
    scale = gamma / jnp.sqrt(var + eps)
    shift = (bias - mean) * scale + beta
    return (scale[None, :].astype(jnp.float32),
            shift[None, :].astype(jnp.float32))          # (1, C)


def make_params(key, dim_input=3, nlatent=256):
    ks = jax.random.split(key, 16)
    f = jnp.float32

    def w(k, shape, fan_in):
        return (jax.random.normal(k, shape, f) / jnp.sqrt(fan_in)).astype(f)

    def bn(k, c):
        k1, k2, k3, k4 = jax.random.split(k, 4)
        gamma = 1.0 + 0.1 * jax.random.normal(k1, (c,), f)
        beta = 0.1 * jax.random.normal(k2, (c,), f)
        mean = 0.1 * jax.random.normal(k3, (c,), f)
        var = 1.0 + 0.1 * jax.random.uniform(k4, (c,), f)
        return gamma, beta, mean, var

    L = nlatent
    # conv weights (kernel size 1) stored as (Cin, Cout); linear as (in, out).
    w1 = w(ks[0], (dim_input, 64), dim_input)
    b1 = 0.05 * jax.random.normal(ks[1], (64,), f)
    w2 = w(ks[2], (64, 128), 64)
    b2 = 0.05 * jax.random.normal(ks[3], (128,), f)
    w3 = w(ks[4], (128, L), 128)
    b3 = 0.05 * jax.random.normal(ks[5], (L,), f)
    wl1 = w(ks[6], (L, L), L)
    bl1 = 0.05 * jax.random.normal(ks[7], (L,), f)
    wl2 = w(ks[8], (L, L), L)
    bl2 = 0.05 * jax.random.normal(ks[9], (L,), f)

    s1, t1 = _fold_bn(b1, *bn(ks[10], 64))
    s2, t2 = _fold_bn(b2, *bn(ks[11], 128))
    s3, t3 = _fold_bn(b3, *bn(ks[12], L))
    s4, t4 = _fold_bn(bl1, *bn(ks[13], L))
    s5, t5 = _fold_bn(bl2, *bn(ks[14], L))

    bf = jnp.bfloat16
    return dict(
        w1=w1, s1=s1, t1=t1,                              # conv1 stays f32 (VPU)
        w2=w2.astype(bf), s2=s2, t2=t2,
        w3=w3.astype(bf), s3=s3, t3=t3,
        wl1=wl1.astype(bf), s4=s4, t4=t4,
        wl2=wl2.astype(bf), s5=s5, t5=t5,
    )


def reference_forward(x_bcn, p):
    """Pure-JAX reference with the same eval-mode BN folding and the same
    bf16-operand / f32-accumulate matmul semantics as the kernel."""
    HI = jax.lax.Precision.HIGHEST

    def mm_bf16(a, w_bf16):
        # emulate bf16 operands with f32 accumulation
        return jnp.matmul(a.astype(jnp.bfloat16).astype(jnp.float32),
                          w_bf16.astype(jnp.float32), precision=HI)

    x = jnp.transpose(x_bcn, (0, 2, 1)).astype(jnp.float32)   # (B, N, Cin)
    h = jnp.matmul(x, p["w1"], precision=HI)                  # conv1 in f32
    h = jnp.maximum(h * p["s1"] + p["t1"], 0.0)
    h = mm_bf16(h, p["w2"])
    h = jnp.maximum(h * p["s2"] + p["t2"], 0.0)
    h = mm_bf16(h, p["w3"])
    h = h * p["s3"] + p["t3"]
    g = jnp.max(h, axis=1)                                    # (B, L)
    z = mm_bf16(g, p["wl1"])
    z = jnp.maximum(z * p["s4"] + p["t4"], 0.0)
    z = mm_bf16(z, p["wl2"])
    z = jnp.maximum(z * p["s5"] + p["t5"], 0.0)
    return z


if __name__ == "__main__":
    B, N, DIM_INPUT, NLATENT = 2, 64, 3, 256

    key = jax.random.PRNGKey(0)
    k_x, k_p = jax.random.split(key)
    # PyTorch Conv1d input layout: (B, DIM_INPUT, N)
    x = jax.random.normal(k_x, (B, DIM_INPUT, N), jnp.float32)
    params = make_params(k_p, dim_input=DIM_INPUT, nlatent=NLATENT)

    out = jax.block_until_ready(pointnet_forward(x, params))

    ref = reference_forward(x, params)
    np.testing.assert_allclose(np.asarray(out), np.asarray(ref),
                               rtol=1e-2, atol=1e-2)
    assert out.shape == (B, NLATENT)
    print("KERNEL_OK")
</pallas_src>

<mosaic_0001>
module attributes {stable_mosaic.version = 11 : i64} {
  func.func @_pointnet_kernel(%arg0: i32, %arg1: memref<1x3x64xf32, #tpu.memory_space<vmem>>, %arg2: memref<64x3xf32, #tpu.memory_space<vmem>>, %arg3: memref<64x1xf32, #tpu.memory_space<vmem>>, %arg4: memref<64x1xf32, #tpu.memory_space<vmem>>, %arg5: memref<128x64xbf16, #tpu.memory_space<vmem>>, %arg6: memref<128x1xf32, #tpu.memory_space<vmem>>, %arg7: memref<128x1xf32, #tpu.memory_space<vmem>>, %arg8: memref<256x128xbf16, #tpu.memory_space<vmem>>, %arg9: memref<256x1xf32, #tpu.memory_space<vmem>>, %arg10: memref<256x1xf32, #tpu.memory_space<vmem>>, %arg11: memref<256x256xbf16, #tpu.memory_space<vmem>>, %arg12: memref<256x1xf32, #tpu.memory_space<vmem>>, %arg13: memref<256x1xf32, #tpu.memory_space<vmem>>, %arg14: memref<256x256xbf16, #tpu.memory_space<vmem>>, %arg15: memref<256x1xf32, #tpu.memory_space<vmem>>, %arg16: memref<256x1xf32, #tpu.memory_space<vmem>>, %arg17: memref<1x256x1xf32, #tpu.memory_space<vmem>>) attributes {dimension_semantics = [#tpu.dimension_semantics<parallel>], iteration_bounds = array<i64: 2>, scalar_prefetch = 0 : i64, scratch_operands = 0 : i64, tpu.core_type = #tpu.core_type<tc>, window_params = [{transform_indices = @transform_0, window_bounds = array<i64: 1, 3, 64>}, {pipeline_mode = #tpu.pipeline_mode<synchronous>, transform_indices = @transform_1, window_bounds = array<i64: 64, 3>}, {pipeline_mode = #tpu.pipeline_mode<synchronous>, transform_indices = @transform_2, window_bounds = array<i64: 64, 1>}, {pipeline_mode = #tpu.pipeline_mode<synchronous>, transform_indices = @transform_3, window_bounds = array<i64: 64, 1>}, {pipeline_mode = #tpu.pipeline_mode<synchronous>, transform_indices = @transform_4, window_bounds = array<i64: 128, 64>}, {pipeline_mode = #tpu.pipeline_mode<synchronous>, transform_indices = @transform_5, window_bounds = array<i64: 128, 1>}, {pipeline_mode = #tpu.pipeline_mode<synchronous>, transform_indices = @transform_6, window_bounds = array<i64: 128, 1>}, {pipeline_mode = #tpu.pipeline_mode<synchronous>, transform_indices = @transform_7, window_bounds = array<i64: 256, 128>}, {pipeline_mode = #tpu.pipeline_mode<synchronous>, transform_indices = @transform_8, window_bounds = array<i64: 256, 1>}, {pipeline_mode = #tpu.pipeline_mode<synchronous>, transform_indices = @transform_9, window_bounds = array<i64: 256, 1>}, {pipeline_mode = #tpu.pipeline_mode<synchronous>, transform_indices = @transform_10, window_bounds = array<i64: 256, 256>}, {pipeline_mode = #tpu.pipeline_mode<synchronous>, transform_indices = @transform_11, window_bounds = array<i64: 256, 1>}, {pipeline_mode = #tpu.pipeline_mode<synchronous>, transform_indices = @transform_12, window_bounds = array<i64: 256, 1>}, {pipeline_mode = #tpu.pipeline_mode<synchronous>, transform_indices = @transform_13, window_bounds = array<i64: 256, 256>}, {pipeline_mode = #tpu.pipeline_mode<synchronous>, transform_indices = @transform_14, window_bounds = array<i64: 256, 1>}, {pipeline_mode = #tpu.pipeline_mode<synchronous>, transform_indices = @transform_15, window_bounds = array<i64: 256, 1>}, {transform_indices = @transform_16, window_bounds = array<i64: 1, 256, 1>}]} {
    %c0 = arith.constant 0 : index
    %c0_0 = arith.constant 0 : index
    %c0_1 = arith.constant 0 : index
    %0 = vector.load %arg1[%c0, %c0_0, %c0_1] : memref<1x3x64xf32, #tpu.memory_space<vmem>>, vector<1x3x64xf32>
    %1 = vector.shape_cast %0 : vector<1x3x64xf32> to vector<3x64xf32>
    %c0_2 = arith.constant 0 : index
    %c0_3 = arith.constant 0 : index
    %2 = vector.load %arg2[%c0_2, %c0_3] : memref<64x3xf32, #tpu.memory_space<vmem>>, vector<64x3xf32>
    %3 = vector.extract_strided_slice %2 {offsets = [0, 0], sizes = [64, 1], strides = [1, 1]} : vector<64x3xf32> to vector<64x1xf32>
    %4 = vector.extract_strided_slice %1 {offsets = [0, 0], sizes = [1, 64], strides = [1, 1]} : vector<3x64xf32> to vector<1x64xf32>
    %5 = vector.broadcast %3 : vector<64x1xf32> to vector<64x64xf32>
    %6 = vector.broadcast %4 : vector<1x64xf32> to vector<64x64xf32>
    %7 = arith.mulf %5, %6 : vector<64x64xf32>
    %8 = vector.extract_strided_slice %2 {offsets = [0, 1], sizes = [64, 1], strides = [1, 1]} : vector<64x3xf32> to vector<64x1xf32>
    %9 = vector.extract_strided_slice %1 {offsets = [1, 0], sizes = [1, 64], strides = [1, 1]} : vector<3x64xf32> to vector<1x64xf32>
    %10 = vector.broadcast %8 : vector<64x1xf32> to vector<64x64xf32>
    %11 = vector.broadcast %9 : vector<1x64xf32> to vector<64x64xf32>
    %12 = arith.mulf %10, %11 : vector<64x64xf32>
    %13 = arith.addf %7, %12 : vector<64x64xf32>
    %14 = vector.extract_strided_slice %2 {offsets = [0, 2], sizes = [64, 1], strides = [1, 1]} : vector<64x3xf32> to vector<64x1xf32>
    %15 = vector.extract_strided_slice %1 {offsets = [2, 0], sizes = [1, 64], strides = [1, 1]} : vector<3x64xf32> to vector<1x64xf32>
    %16 = vector.broadcast %14 : vector<64x1xf32> to vector<64x64xf32>
    %17 = vector.broadcast %15 : vector<1x64xf32> to vector<64x64xf32>
    %18 = arith.mulf %16, %17 : vector<64x64xf32>
    %19 = arith.addf %13, %18 : vector<64x64xf32>
    %c0_4 = arith.constant 0 : index
    %c0_5 = arith.constant 0 : index
    %20 = vector.load %arg3[%c0_4, %c0_5] : memref<64x1xf32, #tpu.memory_space<vmem>>, vector<64x1xf32>
    %21 = vector.broadcast %20 : vector<64x1xf32> to vector<64x64xf32>
    %22 = arith.mulf %19, %21 : vector<64x64xf32>
    %c0_6 = arith.constant 0 : index
    %c0_7 = arith.constant 0 : index
    %23 = vector.load %arg4[%c0_6, %c0_7] : memref<64x1xf32, #tpu.memory_space<vmem>>, vector<64x1xf32>
    %24 = vector.broadcast %23 : vector<64x1xf32> to vector<64x64xf32>
    %25 = arith.addf %22, %24 : vector<64x64xf32>
    %cst = arith.constant 0.000000e+00 : f32
    %26 = vector.broadcast %cst : f32 to vector<64x64xf32>
    %27 = arith.maximumf %25, %26 : vector<64x64xf32>
    %28 = arith.truncf %27 : vector<64x64xf32> to vector<64x64xbf16>
    %c0_8 = arith.constant 0 : index
    %c0_9 = arith.constant 0 : index
    %29 = vector.load %arg5[%c0_8, %c0_9] : memref<128x64xbf16, #tpu.memory_space<vmem>>, vector<128x64xbf16>
    %cst_10 = arith.constant dense<0.000000e+00> : vector<128x64xf32>
    %30 = tpu.matmul %29, %28, %cst_10 {dimension_numbers = #tpu.dot_dimension_numbers<[1], [0], [0], [1], [0, 0, 1, 1], [], []>} : vector<128x64xbf16>, vector<64x64xbf16>, vector<128x64xf32> -> vector<128x64xf32>
    %c0_11 = arith.constant 0 : index
    %c0_12 = arith.constant 0 : index
    %31 = vector.load %arg6[%c0_11, %c0_12] : memref<128x1xf32, #tpu.memory_space<vmem>>, vector<128x1xf32>
    %32 = vector.broadcast %31 : vector<128x1xf32> to vector<128x64xf32>
    %33 = arith.mulf %30, %32 : vector<128x64xf32>
    %c0_13 = arith.constant 0 : index
    %c0_14 = arith.constant 0 : index
    %34 = vector.load %arg7[%c0_13, %c0_14] : memref<128x1xf32, #tpu.memory_space<vmem>>, vector<128x1xf32>
    %35 = vector.broadcast %34 : vector<128x1xf32> to vector<128x64xf32>
    %36 = arith.addf %33, %35 : vector<128x64xf32>
    %cst_15 = arith.constant 0.000000e+00 : f32
    %37 = vector.broadcast %cst_15 : f32 to vector<128x64xf32>
    %38 = arith.maximumf %36, %37 : vector<128x64xf32>
    %39 = arith.truncf %38 : vector<128x64xf32> to vector<128x64xbf16>
    %c0_16 = arith.constant 0 : index
    %c0_17 = arith.constant 0 : index
    %40 = vector.load %arg8[%c0_16, %c0_17] : memref<256x128xbf16, #tpu.memory_space<vmem>>, vector<256x128xbf16>
    %cst_18 = arith.constant dense<0.000000e+00> : vector<256x64xf32>
    %41 = tpu.matmul %40, %39, %cst_18 {dimension_numbers = #tpu.dot_dimension_numbers<[1], [0], [0], [1], [0, 0, 1, 1], [], []>} : vector<256x128xbf16>, vector<128x64xbf16>, vector<256x64xf32> -> vector<256x64xf32>
    %c0_19 = arith.constant 0 : index
    %c0_20 = arith.constant 0 : index
    %42 = vector.load %arg9[%c0_19, %c0_20] : memref<256x1xf32, #tpu.memory_space<vmem>>, vector<256x1xf32>
    %43 = vector.broadcast %42 : vector<256x1xf32> to vector<256x64xf32>
    %44 = arith.mulf %41, %43 : vector<256x64xf32>
    %c0_21 = arith.constant 0 : index
    %c0_22 = arith.constant 0 : index
    %45 = vector.load %arg10[%c0_21, %c0_22] : memref<256x1xf32, #tpu.memory_space<vmem>>, vector<256x1xf32>
    %46 = vector.broadcast %45 : vector<256x1xf32> to vector<256x64xf32>
    %47 = arith.addf %44, %46 : vector<256x64xf32>
    %cst_23 = arith.constant dense<0xFF800000> : vector<256xf32>
    %48 = vector.multi_reduction <maximumf>, %47, %cst_23 [1] : vector<256x64xf32> to vector<256xf32>
    %49 = vector.shape_cast %48 : vector<256xf32> to vector<256x1xf32>
    %c0_24 = arith.constant 0 : index
    %c0_25 = arith.constant 0 : index
    %50 = vector.load %arg11[%c0_24, %c0_25] : memref<256x256xbf16, #tpu.memory_space<vmem>>, vector<256x256xbf16>
    %51 = arith.truncf %49 : vector<256x1xf32> to vector<256x1xbf16>
    %cst_26 = arith.constant dense<0.000000e+00> : vector<256x1xf32>
    %52 = tpu.matmul %50, %51, %cst_26 {dimension_numbers = #tpu.dot_dimension_numbers<[1], [0], [0], [1], [0, 0, 1, 1], [], []>} : vector<256x256xbf16>, vector<256x1xbf16>, vector<256x1xf32> -> vector<256x1xf32>
    %c0_27 = arith.constant 0 : index
    %c0_28 = arith.constant 0 : index
    %53 = vector.load %arg12[%c0_27, %c0_28] : memref<256x1xf32, #tpu.memory_space<vmem>>, vector<256x1xf32>
    %54 = arith.mulf %52, %53 : vector<256x1xf32>
    %c0_29 = arith.constant 0 : index
    %c0_30 = arith.constant 0 : index
    %55 = vector.load %arg13[%c0_29, %c0_30] : memref<256x1xf32, #tpu.memory_space<vmem>>, vector<256x1xf32>
    %56 = arith.addf %54, %55 : vector<256x1xf32>
    %cst_31 = arith.constant 0.000000e+00 : f32
    %57 = vector.broadcast %cst_31 : f32 to vector<256x1xf32>
    %58 = arith.maximumf %56, %57 : vector<256x1xf32>
    %c0_32 = arith.constant 0 : index
    %c0_33 = arith.constant 0 : index
    %59 = vector.load %arg14[%c0_32, %c0_33] : memref<256x256xbf16, #tpu.memory_space<vmem>>, vector<256x256xbf16>
    %60 = arith.truncf %58 : vector<256x1xf32> to vector<256x1xbf16>
    %cst_34 = arith.constant dense<0.000000e+00> : vector<256x1xf32>
    %61 = tpu.matmul %59, %60, %cst_34 {dimension_numbers = #tpu.dot_dimension_numbers<[1], [0], [0], [1], [0, 0, 1, 1], [], []>} : vector<256x256xbf16>, vector<256x1xbf16>, vector<256x1xf32> -> vector<256x1xf32>
    %c0_35 = arith.constant 0 : index
    %c0_36 = arith.constant 0 : index
    %62 = vector.load %arg15[%c0_35, %c0_36] : memref<256x1xf32, #tpu.memory_space<vmem>>, vector<256x1xf32>
    %63 = arith.mulf %61, %62 : vector<256x1xf32>
    %c0_37 = arith.constant 0 : index
    %c0_38 = arith.constant 0 : index
    %64 = vector.load %arg16[%c0_37, %c0_38] : memref<256x1xf32, #tpu.memory_space<vmem>>, vector<256x1xf32>
    %65 = arith.addf %63, %64 : vector<256x1xf32>
    %cst_39 = arith.constant 0.000000e+00 : f32
    %66 = vector.broadcast %cst_39 : f32 to vector<256x1xf32>
    %67 = arith.maximumf %65, %66 : vector<256x1xf32>
    %c0_40 = arith.constant 0 : index
    %c0_41 = arith.constant 0 : index
    %c0_42 = arith.constant 0 : index
    %68 = vector.load %arg17[%c0_40, %c0_41, %c0_42] : memref<1x256x1xf32, #tpu.memory_space<vmem>>, vector<1x256x1xf32>
    %69 = vector.shape_cast %68 : vector<1x256x1xf32> to vector<256x1xf32>
    %70 = vector.shape_cast %67 : vector<256x1xf32> to vector<1x256x1xf32>
    tpu.vector_store %arg17[%c0_40, %c0_41, %c0_42], %70 {strides = array<i32>} : memref<1x256x1xf32, #tpu.memory_space<vmem>>, vector<1x256x1xf32>,
    return
  }
  func.func @transform_0(%arg0: i32) -> (i32, i32, i32) {
    %c0_i32 = arith.constant 0 : i32
    %c0_i32_0 = arith.constant 0 : i32
    %c0_i32_1 = arith.constant 0 : i32
    return %arg0, %c0_i32, %c0_i32_0 : i32, i32, i32
  }
  func.func @transform_1(%arg0: i32) -> (i32, i32) {
    %c0_i32 = arith.constant 0 : i32
    %c0_i32_0 = arith.constant 0 : i32
    %c0_i32_1 = arith.constant 0 : i32
    return %c0_i32, %c0_i32_0 : i32, i32
  }
  func.func @transform_2(%arg0: i32) -> (i32, i32) {
    %c0_i32 = arith.constant 0 : i32
    %c0_i32_0 = arith.constant 0 : i32
    %c0_i32_1 = arith.constant 0 : i32
    return %c0_i32, %c0_i32_0 : i32, i32
  }
  func.func @transform_3(%arg0: i32) -> (i32, i32) {
    %c0_i32 = arith.constant 0 : i32
    %c0_i32_0 = arith.constant 0 : i32
    %c0_i32_1 = arith.constant 0 : i32
    return %c0_i32, %c0_i32_0 : i32, i32
  }
  func.func @transform_4(%arg0: i32) -> (i32, i32) {
    %c0_i32 = arith.constant 0 : i32
    %c0_i32_0 = arith.constant 0 : i32
    %c0_i32_1 = arith.constant 0 : i32
    return %c0_i32, %c0_i32_0 : i32, i32
  }
  func.func @transform_5(%arg0: i32) -> (i32, i32) {
    %c0_i32 = arith.constant 0 : i32
    %c0_i32_0 = arith.constant 0 : i32
    %c0_i32_1 = arith.constant 0 : i32
    return %c0_i32, %c0_i32_0 : i32, i32
  }
  func.func @transform_6(%arg0: i32) -> (i32, i32) {
    %c0_i32 = arith.constant 0 : i32
    %c0_i32_0 = arith.constant 0 : i32
    %c0_i32_1 = arith.constant 0 : i32
    return %c0_i32, %c0_i32_0 : i32, i32
  }
  func.func @transform_7(%arg0: i32) -> (i32, i32) {
    %c0_i32 = arith.constant 0 : i32
    %c0_i32_0 = arith.constant 0 : i32
    %c0_i32_1 = arith.constant 0 : i32
    return %c0_i32, %c0_i32_0 : i32, i32
  }
  func.func @transform_8(%arg0: i32) -> (i32, i32) {
    %c0_i32 = arith.constant 0 : i32
    %c0_i32_0 = arith.constant 0 : i32
    %c0_i32_1 = arith.constant 0 : i32
    return %c0_i32, %c0_i32_0 : i32, i32
  }
  func.func @transform_9(%arg0: i32) -> (i32, i32) {
    %c0_i32 = arith.constant 0 : i32
    %c0_i32_0 = arith.constant 0 : i32
    %c0_i32_1 = arith.constant 0 : i32
    return %c0_i32, %c0_i32_0 : i32, i32
  }
  func.func @transform_10(%arg0: i32) -> (i32, i32) {
    %c0_i32 = arith.constant 0 : i32
    %c0_i32_0 = arith.constant 0 : i32
    %c0_i32_1 = arith.constant 0 : i32
    return %c0_i32, %c0_i32_0 : i32, i32
  }
  func.func @transform_11(%arg0: i32) -> (i32, i32) {
    %c0_i32 = arith.constant 0 : i32
    %c0_i32_0 = arith.constant 0 : i32
    %c0_i32_1 = arith.constant 0 : i32
    return %c0_i32, %c0_i32_0 : i32, i32
  }
  func.func @transform_12(%arg0: i32) -> (i32, i32) {
    %c0_i32 = arith.constant 0 : i32
    %c0_i32_0 = arith.constant 0 : i32
    %c0_i32_1 = arith.constant 0 : i32
    return %c0_i32, %c0_i32_0 : i32, i32
  }
  func.func @transform_13(%arg0: i32) -> (i32, i32) {
    %c0_i32 = arith.constant 0 : i32
    %c0_i32_0 = arith.constant 0 : i32
    %c0_i32_1 = arith.constant 0 : i32
    return %c0_i32, %c0_i32_0 : i32, i32
  }
  func.func @transform_14(%arg0: i32) -> (i32, i32) {
    %c0_i32 = arith.constant 0 : i32
    %c0_i32_0 = arith.constant 0 : i32
    %c0_i32_1 = arith.constant 0 : i32
    return %c0_i32, %c0_i32_0 : i32, i32
  }
  func.func @transform_15(%arg0: i32) -> (i32, i32) {
    %c0_i32 = arith.constant 0 : i32
    %c0_i32_0 = arith.constant 0 : i32
    %c0_i32_1 = arith.constant 0 : i32
    return %c0_i32, %c0_i32_0 : i32, i32
  }
  func.func @transform_16(%arg0: i32) -> (i32, i32, i32) {
    %c0_i32 = arith.constant 0 : i32
    %c0_i32_0 = arith.constant 0 : i32
    %c0_i32_1 = arith.constant 0 : i32
    return %arg0, %c0_i32, %c0_i32_0 : i32, i32, i32
  }
}

</mosaic_0001>

<llo_original>
// kernel: tpu_custom_call.1
$region0: #{tpu_custom_call.1}
  #allocation0 [shape = 'u32[]', space=smem, size = 0x4, offset = 0x4, fixed_abs, tag = 'smem constant byte address 0x4 - core index']
  #allocation1 [shape = 'u32[144,128]{1,0:T(1,128)}', space=vmem, size = 0x12000, scoped, tag = 'internal scratch']
  %s0 = inlined_call_operand.vmem [shape: f32[2,3,64], index: 0, kind: input, shape index: {}]
  %s1 = inlined_call_operand.vmem [shape: f32[64,3], index: 1, kind: input, shape index: {}]
  %s2 = inlined_call_operand.vmem [shape: f32[64,1], index: 2, kind: input, shape index: {}]
  %s3 = inlined_call_operand.vmem [shape: f32[64,1], index: 3, kind: input, shape index: {}]
  %s4 = inlined_call_operand.vmem [shape: bf16[128,64], index: 4, kind: input, shape index: {}]
  %s5 = inlined_call_operand.vmem [shape: f32[128,1], index: 5, kind: input, shape index: {}]
  %s6 = inlined_call_operand.vmem [shape: f32[128,1], index: 6, kind: input, shape index: {}]
  %s7 = inlined_call_operand.vmem [shape: bf16[256,128], index: 7, kind: input, shape index: {}]
  %s8 = inlined_call_operand.vmem [shape: f32[256,1], index: 8, kind: input, shape index: {}]
  %s9 = inlined_call_operand.vmem [shape: f32[256,1], index: 9, kind: input, shape index: {}]
  %s10 = inlined_call_operand.vmem [shape: bf16[256,256], index: 10, kind: input, shape index: {}]
  %s11 = inlined_call_operand.vmem [shape: f32[256,1], index: 11, kind: input, shape index: {}]
  %s12 = inlined_call_operand.vmem [shape: f32[256,1], index: 12, kind: input, shape index: {}]
  %s13 = inlined_call_operand.vmem [shape: bf16[256,256], index: 13, kind: input, shape index: {}]
  %s14 = inlined_call_operand.vmem [shape: f32[256,1], index: 14, kind: input, shape index: {}]
  %s15 = inlined_call_operand.vmem [shape: f32[256,1], index: 15, kind: input, shape index: {}]
  %s16 = inlined_call_operand.vmem [shape: f32[2,256,1], index: 16, kind: output, shape index: {}]
  %s17 = sld [smem:[#allocation0]]
  $region97: #{tpu_custom_call.1} parent=0
    _
  %s19 = ssub.s32 1, %s17
  %s20 = scalar_select 0, %s19, %s17
  loop: start=0, step=1, limit=4
  $region2: #{tpu_custom_call.1} parent=0 // loop_pre_header
    _
  $region3: #{tpu_custom_call.1} parent=0 // loop_header
    %s22 = sphi 0, %s26
    %p23 = scmp.ge.s32.totalorder %s22, 4
    %s32 = sphi 0, %s34
    %s35 = sphi 0, %s32
    %s36 = sphi 0, %s35
    %s52 = sphi 0, %s36
    %s56 = sphi 0, %s56
    %s58 = sphi 0, %s56
    %s59 = sphi 0, %s58
    %s73 = sphi 0, %s59
    %s77 = sphi 0, %s77
    %s79 = sphi 0, %s77
    %s80 = sphi 0, %s79
    %s94 = sphi 0, %s80
    %s98 = sphi 0, %s98
    %s100 = sphi 0, %s98
    %s101 = sphi 0, %s100
    %s115 = sphi 0, %s101
    %s119 = sphi 0, %s119
    %s121 = sphi 0, %s119
    %s122 = sphi 0, %s121
    %s136 = sphi 0, %s122
    %s140 = sphi 0, %s140
    %s142 = sphi 0, %s140
    %s143 = sphi 0, %s142
    %s157 = sphi 0, %s143
    %s161 = sphi 0, %s161
    %s163 = sphi 0, %s161
    %s164 = sphi 0, %s163
    %s178 = sphi 0, %s164
    %s182 = sphi 0, %s182
    %s184 = sphi 0, %s182
    %s185 = sphi 0, %s184
    %s199 = sphi 0, %s185
    %s203 = sphi 0, %s203
    %s205 = sphi 0, %s203
    %s206 = sphi 0, %s205
    %s220 = sphi 0, %s206
    %s224 = sphi 0, %s224
    %s226 = sphi 0, %s224
    %s227 = sphi 0, %s226
    %s241 = sphi 0, %s227
    %s245 = sphi 0, %s245
    %s247 = sphi 0, %s245
    %s248 = sphi 0, %s247
    %s262 = sphi 0, %s248
    %s266 = sphi 0, %s266
    %s268 = sphi 0, %s266
    %s269 = sphi 0, %s268
    %s283 = sphi 0, %s269
    %s287 = sphi 0, %s287
    %s289 = sphi 0, %s287
    %s290 = sphi 0, %s289
    %s304 = sphi 0, %s290
    %s308 = sphi 0, %s308
    %s310 = sphi 0, %s308
    %s311 = sphi 0, %s310
    %s325 = sphi 0, %s311
    %s329 = sphi 0, %s329
    %s331 = sphi 0, %s329
    %s332 = sphi 0, %s331
    %s346 = sphi 0, %s332
    %s350 = sphi 0, %s350
    %s352 = sphi 0, %s350
    %s353 = sphi 0, %s352
    %s367 = sphi 0, %s353
    %s373 = sphi 0, %s375
    %s376 = sphi 0, %s373
    %s377 = sphi 0, %s376
    %s393 = sphi 0, %s377
  $region4: #{tpu_custom_call.1} parent=0 // loop_header_branch
    %25 = sbr.rel (%p23) target = $region8
  $region5: #{tpu_custom_call.1} parent=0 // loop_body
    %s27 = ssub.s32 %s22, 1
    %s28 = ssub.s32 %s22, 2
    %s29 = sadd.s32 %s22, 1
    %s30 = ssub.s32 %s22, %s29
    %p31 = scmp.eq.s32.totalorder %s30, 0
    %s33 = sadd.s32 %s32, 1
    %s34 = scalar_select %p31, %s32, %s33
    %p37 = pneg %p31
    %p38 = scmp.eq.s32.totalorder %s22, 1
    %p39 = por %p37, %p38
    %p40 = scmp.ne.s32.totalorder %s32, %s35
    %p41 = scmp.eq.s32.totalorder %s22, 0
    %p42 = por %p40, %p41
    %p43 = scmp.ne.s32.totalorder %s32, %s35
    %p44 = scmp.eq.s32.totalorder %s27, 1
    %p45 = por %p43, %p44
    %p46 = scmp.ne.s32.totalorder %s35, %s36
    %p47 = scmp.eq.s32.totalorder %s27, 0
    %p48 = por %p46, %p47
    %p49 = scmp.ne.s32.totalorder %s35, %s36
    %p50 = scmp.eq.s32.totalorder %s28, 1
    %p51 = por %p49, %p50
    %p53 = scmp.ne.s32.totalorder %s36, %s52
    %p54 = scmp.eq.s32.totalorder %s28, 0
    %p55 = por %p53, %p54
    %s57 = sadd.s32 %s56, 1
    %p60 = scmp.eq.s32.totalorder %s22, 1
    %p61 = scmp.ne.s32.totalorder %s56, %s58
    %p62 = scmp.eq.s32.totalorder %s22, 0
    %p63 = por %p61, %p62
    %p64 = scmp.ne.s32.totalorder %s56, %s58
    %p65 = scmp.eq.s32.totalorder %s27, 1
    %p66 = por %p64, %p65
    %p67 = scmp.ne.s32.totalorder %s58, %s59
    %p68 = scmp.eq.s32.totalorder %s27, 0
    %p69 = por %p67, %p68
    %p70 = scmp.ne.s32.totalorder %s58, %s59
    %p71 = scmp.eq.s32.totalorder %s28, 1
    %p72 = por %p70, %p71
    %p74 = scmp.ne.s32.totalorder %s59, %s73
    %p75 = scmp.eq.s32.totalorder %s28, 0
    %p76 = por %p74, %p75
    %s78 = sadd.s32 %s77, 1
    %p81 = scmp.eq.s32.totalorder %s22, 1
    %p82 = scmp.ne.s32.totalorder %s77, %s79
    %p83 = scmp.eq.s32.totalorder %s22, 0
    %p84 = por %p82, %p83
    %p85 = scmp.ne.s32.totalorder %s77, %s79
    %p86 = scmp.eq.s32.totalorder %s27, 1
    %p87 = por %p85, %p86
    %p88 = scmp.ne.s32.totalorder %s79, %s80
    %p89 = scmp.eq.s32.totalorder %s27, 0
    %p90 = por %p88, %p89
    %p91 = scmp.ne.s32.totalorder %s79, %s80
    %p92 = scmp.eq.s32.totalorder %s28, 1
    %p93 = por %p91, %p92
    %p95 = scmp.ne.s32.totalorder %s80, %s94
    %p96 = scmp.eq.s32.totalorder %s28, 0
    %p97 = por %p95, %p96
    %s99 = sadd.s32 %s98, 1
    %p102 = scmp.eq.s32.totalorder %s22, 1
    %p103 = scmp.ne.s32.totalorder %s98, %s100
    %p104 = scmp.eq.s32.totalorder %s22, 0
    %p105 = por %p103, %p104
    %p106 = scmp.ne.s32.totalorder %s98, %s100
    %p107 = scmp.eq.s32.totalorder %s27, 1
    %p108 = por %p106, %p107
    %p109 = scmp.ne.s32.totalorder %s100, %s101
    %p110 = scmp.eq.s32.totalorder %s27, 0
    %p111 = por %p109, %p110
    %p112 = scmp.ne.s32.totalorder %s100, %s101
    %p113 = scmp.eq.s32.totalorder %s28, 1
    %p114 = por %p112, %p113
    %p116 = scmp.ne.s32.totalorder %s101, %s115
    %p117 = scmp.eq.s32.totalorder %s28, 0
    %p118 = por %p116, %p117
    %s120 = sadd.s32 %s119, 1
    %p123 = scmp.eq.s32.totalorder %s22, 1
    %p124 = scmp.ne.s32.totalorder %s119, %s121
    %p125 = scmp.eq.s32.totalorder %s22, 0
    %p126 = por %p124, %p125
    %p127 = scmp.ne.s32.totalorder %s119, %s121
    %p128 = scmp.eq.s32.totalorder %s27, 1
    %p129 = por %p127, %p128
    %p130 = scmp.ne.s32.totalorder %s121, %s122
    %p131 = scmp.eq.s32.totalorder %s27, 0
    %p132 = por %p130, %p131
    %p133 = scmp.ne.s32.totalorder %s121, %s122
    %p134 = scmp.eq.s32.totalorder %s28, 1
    %p135 = por %p133, %p134
    %p137 = scmp.ne.s32.totalorder %s122, %s136
    %p138 = scmp.eq.s32.totalorder %s28, 0
    %p139 = por %p137, %p138
    %s141 = sadd.s32 %s140, 1
    %p144 = scmp.eq.s32.totalorder %s22, 1
    %p145 = scmp.ne.s32.totalorder %s140, %s142
    %p146 = scmp.eq.s32.totalorder %s22, 0
    %p147 = por %p145, %p146
    %p148 = scmp.ne.s32.totalorder %s140, %s142
    %p149 = scmp.eq.s32.totalorder %s27, 1
    %p150 = por %p148, %p149
    %p151 = scmp.ne.s32.totalorder %s142, %s143
    %p152 = scmp.eq.s32.totalorder %s27, 0
    %p153 = por %p151, %p152
    %p154 = scmp.ne.s32.totalorder %s142, %s143
    %p155 = scmp.eq.s32.totalorder %s28, 1
    %p156 = por %p154, %p155
    %p158 = scmp.ne.s32.totalorder %s143, %s157
    %p159 = scmp.eq.s32.totalorder %s28, 0
    %p160 = por %p158, %p159
    %s162 = sadd.s32 %s161, 1
    %p165 = scmp.eq.s32.totalorder %s22, 1
    %p166 = scmp.ne.s32.totalorder %s161, %s163
    %p167 = scmp.eq.s32.totalorder %s22, 0
    %p168 = por %p166, %p167
    %p169 = scmp.ne.s32.totalorder %s161, %s163
    %p170 = scmp.eq.s32.totalorder %s27, 1
    %p171 = por %p169, %p170
    %p172 = scmp.ne.s32.totalorder %s163, %s164
    %p173 = scmp.eq.s32.totalorder %s27, 0
    %p174 = por %p172, %p173
    %p175 = scmp.ne.s32.totalorder %s163, %s164
    %p176 = scmp.eq.s32.totalorder %s28, 1
    %p177 = por %p175, %p176
    %p179 = scmp.ne.s32.totalorder %s164, %s178
    %p180 = scmp.eq.s32.totalorder %s28, 0
    %p181 = por %p179, %p180
    %s183 = sadd.s32 %s182, 1
    %p186 = scmp.eq.s32.totalorder %s22, 1
    %p187 = scmp.ne.s32.totalorder %s182, %s184
    %p188 = scmp.eq.s32.totalorder %s22, 0
    %p189 = por %p187, %p188
    %p190 = scmp.ne.s32.totalorder %s182, %s184
    %p191 = scmp.eq.s32.totalorder %s27, 1
    %p192 = por %p190, %p191
    %p193 = scmp.ne.s32.totalorder %s184, %s185
    %p194 = scmp.eq.s32.totalorder %s27, 0
    %p195 = por %p193, %p194
    %p196 = scmp.ne.s32.totalorder %s184, %s185
    %p197 = scmp.eq.s32.totalorder %s28, 1
    %p198 = por %p196, %p197
    %p200 = scmp.ne.s32.totalorder %s185, %s199
    %p201 = scmp.eq.s32.totalorder %s28, 0
    %p202 = por %p200, %p201
    %s204 = sadd.s32 %s203, 1
    %p207 = scmp.eq.s32.totalorder %s22, 1
    %p208 = scmp.ne.s32.totalorder %s203, %s205
    %p209 = scmp.eq.s32.totalorder %s22, 0
    %p210 = por %p208, %p209
    %p211 = scmp.ne.s32.totalorder %s203, %s205
    %p212 = scmp.eq.s32.totalorder %s27, 1
    %p213 = por %p211, %p212
    %p214 = scmp.ne.s32.totalorder %s205, %s206
    %p215 = scmp.eq.s32.totalorder %s27, 0
    %p216 = por %p214, %p215
    %p217 = scmp.ne.s32.totalorder %s205, %s206
    %p218 = scmp.eq.s32.totalorder %s28, 1
    %p219 = por %p217, %p218
    %p221 = scmp.ne.s32.totalorder %s206, %s220
    %p222 = scmp.eq.s32.totalorder %s28, 0
    %p223 = por %p221, %p222
    %s225 = sadd.s32 %s224, 1
    %p228 = scmp.eq.s32.totalorder %s22, 1
    %p229 = scmp.ne.s32.totalorder %s224, %s226
    %p230 = scmp.eq.s32.totalorder %s22, 0
    %p231 = por %p229, %p230
    %p232 = scmp.ne.s32.totalorder %s224, %s226
    %p233 = scmp.eq.s32.totalorder %s27, 1
    %p234 = por %p232, %p233
    %p235 = scmp.ne.s32.totalorder %s226, %s227
    %p236 = scmp.eq.s32.totalorder %s27, 0
    %p237 = por %p235, %p236
    %p238 = scmp.ne.s32.totalorder %s226, %s227
    %p239 = scmp.eq.s32.totalorder %s28, 1
    %p240 = por %p238, %p239
    %p242 = scmp.ne.s32.totalorder %s227, %s241
    %p243 = scmp.eq.s32.totalorder %s28, 0
    %p244 = por %p242, %p243
    %s246 = sadd.s32 %s245, 1
    %p249 = scmp.eq.s32.totalorder %s22, 1
    %p250 = scmp.ne.s32.totalorder %s245, %s247
    %p251 = scmp.eq.s32.totalorder %s22, 0
    %p252 = por %p250, %p251
    %p253 = scmp.ne.s32.totalorder %s245, %s247
    %p254 = scmp.eq.s32.totalorder %s27, 1
    %p255 = por %p253, %p254
    %p256 = scmp.ne.s32.totalorder %s247, %s248
    %p257 = scmp.eq.s32.totalorder %s27, 0
    %p258 = por %p256, %p257
    %p259 = scmp.ne.s32.totalorder %s247, %s248
    %p260 = scmp.eq.s32.totalorder %s28, 1
    %p261 = por %p259, %p260
    %p263 = scmp.ne.s32.totalorder %s248, %s262
    %p264 = scmp.eq.s32.totalorder %s28, 0
    %p265 = por %p263, %p264
    %s267 = sadd.s32 %s266, 1
    %p270 = scmp.eq.s32.totalorder %s22, 1
    %p271 = scmp.ne.s32.totalorder %s266, %s268
    %p272 = scmp.eq.s32.totalorder %s22, 0
    %p273 = por %p271, %p272
    %p274 = scmp.ne.s32.totalorder %s266, %s268
    %p275 = scmp.eq.s32.totalorder %s27, 1
    %p276 = por %p274, %p275
    %p277 = scmp.ne.s32.totalorder %s268, %s269
    %p278 = scmp.eq.s32.totalorder %s27, 0
    %p279 = por %p277, %p278
    %p280 = scmp.ne.s32.totalorder %s268, %s269
    %p281 = scmp.eq.s32.totalorder %s28, 1
    %p282 = por %p280, %p281
    %p284 = scmp.ne.s32.totalorder %s269, %s283
    %p285 = scmp.eq.s32.totalorder %s28, 0
    %p286 = por %p284, %p285
    %s288 = sadd.s32 %s287, 1
    %p291 = scmp.eq.s32.totalorder %s22, 1
    %p292 = scmp.ne.s32.totalorder %s287, %s289
    %p293 = scmp.eq.s32.totalorder %s22, 0
    %p294 = por %p292, %p293
    %p295 = scmp.ne.s32.totalorder %s287, %s289
    %p296 = scmp.eq.s32.totalorder %s27, 1
    %p297 = por %p295, %p296
    %p298 = scmp.ne.s32.totalorder %s289, %s290
    %p299 = scmp.eq.s32.totalorder %s27, 0
    %p300 = por %p298, %p299
    %p301 = scmp.ne.s32.totalorder %s289, %s290
    %p302 = scmp.eq.s32.totalorder %s28, 1
    %p303 = por %p301, %p302
    %p305 = scmp.ne.s32.totalorder %s290, %s304
    %p306 = scmp.eq.s32.totalorder %s28, 0
    %p307 = por %p305, %p306
    %s309 = sadd.s32 %s308, 1
    %p312 = scmp.eq.s32.totalorder %s22, 1
    %p313 = scmp.ne.s32.totalorder %s308, %s310
    %p314 = scmp.eq.s32.totalorder %s22, 0
    %p315 = por %p313, %p314
    %p316 = scmp.ne.s32.totalorder %s308, %s310
    %p317 = scmp.eq.s32.totalorder %s27, 1
    %p318 = por %p316, %p317
    %p319 = scmp.ne.s32.totalorder %s310, %s311
    %p320 = scmp.eq.s32.totalorder %s27, 0
    %p321 = por %p319, %p320
    %p322 = scmp.ne.s32.totalorder %s310, %s311
    %p323 = scmp.eq.s32.totalorder %s28, 1
    %p324 = por %p322, %p323
    %p326 = scmp.ne.s32.totalorder %s311, %s325
    %p327 = scmp.eq.s32.totalorder %s28, 0
    %p328 = por %p326, %p327
    %s330 = sadd.s32 %s329, 1
    %p333 = scmp.eq.s32.totalorder %s22, 1
    %p334 = scmp.ne.s32.totalorder %s329, %s331
    %p335 = scmp.eq.s32.totalorder %s22, 0
    %p336 = por %p334, %p335
    %p337 = scmp.ne.s32.totalorder %s329, %s331
    %p338 = scmp.eq.s32.totalorder %s27, 1
    %p339 = por %p337, %p338
    %p340 = scmp.ne.s32.totalorder %s331, %s332
    %p341 = scmp.eq.s32.totalorder %s27, 0
    %p342 = por %p340, %p341
    %p343 = scmp.ne.s32.totalorder %s331, %s332
    %p344 = scmp.eq.s32.totalorder %s28, 1
    %p345 = por %p343, %p344
    %p347 = scmp.ne.s32.totalorder %s332, %s346
    %p348 = scmp.eq.s32.totalorder %s28, 0
    %p349 = por %p347, %p348
    %s351 = sadd.s32 %s350, 1
    %p354 = scmp.eq.s32.totalorder %s22, 1
    %p355 = scmp.ne.s32.totalorder %s350, %s352
    %p356 = scmp.eq.s32.totalorder %s22, 0
    %p357 = por %p355, %p356
    %p358 = scmp.ne.s32.totalorder %s350, %s352
    %p359 = scmp.eq.s32.totalorder %s27, 1
    %p360 = por %p358, %p359
    %p361 = scmp.ne.s32.totalorder %s352, %s353
    %p362 = scmp.eq.s32.totalorder %s27, 0
    %p363 = por %p361, %p362
    %p364 = scmp.ne.s32.totalorder %s352, %s353
    %p365 = scmp.eq.s32.totalorder %s28, 1
    %p366 = por %p364, %p365
    %p368 = scmp.ne.s32.totalorder %s353, %s367
    %p369 = scmp.eq.s32.totalorder %s28, 0
    %p370 = por %p368, %p369
    %s371 = ssub.s32 %s22, %s29
    %p372 = scmp.eq.s32.totalorder %s371, 0
    %s374 = sadd.s32 %s373, 1
    %s375 = scalar_select %p372, %s373, %s374
    %p378 = pneg %p372
    %p379 = scmp.eq.s32.totalorder %s22, 1
    %p380 = por %p378, %p379
    %p381 = scmp.ne.s32.totalorder %s373, %s376
    %p382 = scmp.eq.s32.totalorder %s22, 0
    %p383 = por %p381, %p382
    %p384 = scmp.ne.s32.totalorder %s373, %s376
    %p385 = scmp.eq.s32.totalorder %s27, 1
    %p386 = por %p384, %p385
    %p387 = scmp.ne.s32.totalorder %s376, %s377
    %p388 = scmp.eq.s32.totalorder %s27, 0
    %p389 = por %p387, %p388
    %p390 = scmp.ne.s32.totalorder %s376, %s377
    %p391 = scmp.eq.s32.totalorder %s28, 1
    %p392 = por %p390, %p391
    %p394 = scmp.ne.s32.totalorder %s377, %s393
    %p395 = scmp.eq.s32.totalorder %s28, 0
    %p396 = por %p394, %p395
    %p397 = scmp.le.s32.totalorder 1, %s22
    %p398 = scmp.lt.s32.totalorder %s22, 3
    %p399 = pnand %p397, %p398
    %p400 = pneg %p399
    // Predicated region
    $region9: #{tpu_custom_call.1} parent=5 // pred_check
      _
    $region10: #{tpu_custom_call.1} parent=5 // pred_check_branch
      %402 = sbr.rel (%p399) target = $region12
    $region11: #{tpu_custom_call.1} parent=5 // pred_region
      %s403 = ssub.s32 %s22, 1
      // Predicated region
      $region13: #{tpu_custom_call.1} parent=11 // pred_check
        %p404 = pneg %p69
      $region14: #{tpu_custom_call.1} parent=11 // pred_check_branch
        %406 = sbr.rel (%p404) target = $region16
      $region15: #{tpu_custom_call.1} parent=11 // pred_region
        _
      $region16: #{tpu_custom_call.1} parent=11 // pred_fallthru
        _
      // Predicated region
      $region17: #{tpu_custom_call.1} parent=11 // pred_check
        %p407 = pneg %p90
      $region18: #{tpu_custom_call.1} parent=11 // pred_check_branch
        %409 = sbr.rel (%p407) target = $region20
      $region19: #{tpu_custom_call.1} parent=11 // pred_region
        _
      $region20: #{tpu_custom_call.1} parent=11 // pred_fallthru
        _
      // Predicated region
      $region21: #{tpu_custom_call.1} parent=11 // pred_check
        %p410 = pneg %p111
      $region22: #{tpu_custom_call.1} parent=11 // pred_check_branch
        %412 = sbr.rel (%p410) target = $region24
      $region23: #{tpu_custom_call.1} parent=11 // pred_region
        _
      $region24: #{tpu_custom_call.1} parent=11 // pred_fallthru
        _
      // Predicated region
      $region25: #{tpu_custom_call.1} parent=11 // pred_check
        %p413 = pneg %p132
      $region26: #{tpu_custom_call.1} parent=11 // pred_check_branch
        %415 = sbr.rel (%p413) target = $region28
      $region27: #{tpu_custom_call.1} parent=11 // pred_region
        _
      $region28: #{tpu_custom_call.1} parent=11 // pred_fallthru
        _
      // Predicated region
      $region29: #{tpu_custom_call.1} parent=11 // pred_check
        %p416 = pneg %p153
      $region30: #{tpu_custom_call.1} parent=11 // pred_check_branch
        %418 = sbr.rel (%p416) target = $region32
      $region31: #{tpu_custom_call.1} parent=11 // pred_region
        _
      $region32: #{tpu_custom_call.1} parent=11 // pred_fallthru
        _
      // Predicated region
      $region33: #{tpu_custom_call.1} parent=11 // pred_check
        %p419 = pneg %p174
      $region34: #{tpu_custom_call.1} parent=11 // pred_check_branch
        %421 = sbr.rel (%p419) target = $region36
      $region35: #{tpu_custom_call.1} parent=11 // pred_region
        _
      $region36: #{tpu_custom_call.1} parent=11 // pred_fallthru
        _
      // Predicated region
      $region37: #{tpu_custom_call.1} parent=11 // pred_check
        %p422 = pneg %p195
      $region38: #{tpu_custom_call.1} parent=11 // pred_check_branch
        %424 = sbr.rel (%p422) target = $region40
      $region39: #{tpu_custom_call.1} parent=11 // pred_region
        _
      $region40: #{tpu_custom_call.1} parent=11 // pred_fallthru
        _
      // Predicated region
      $region41: #{tpu_custom_call.1} parent=11 // pred_check
        %p425 = pneg %p216
      $region42: #{tpu_custom_call.1} parent=11 // pred_check_branch
        %427 = sbr.rel (%p425) target = $region44
      $region43: #{tpu_custom_call.1} parent=11 // pred_region
        _
      $region44: #{tpu_custom_call.1} parent=11 // pred_fallthru
        _
      // Predicated region
      $region45: #{tpu_custom_call.1} parent=11 // pred_check
        %p428 = pneg %p237
      $region46: #{tpu_custom_call.1} parent=11 // pred_check_branch
        %430 = sbr.rel (%p428) target = $region48
      $region47: #{tpu_custom_call.1} parent=11 // pred_region
        _
      $region48: #{tpu_custom_call.1} parent=11 // pred_fallthru
        _
      // Predicated region
      $region49: #{tpu_custom_call.1} parent=11 // pred_check
        %p431 = pneg %p258
      $region50: #{tpu_custom_call.1} parent=11 // pred_check_branch
        %433 = sbr.rel (%p431) target = $region52
      $region51: #{tpu_custom_call.1} parent=11 // pred_region
        _
      $region52: #{tpu_custom_call.1} parent=11 // pred_fallthru
        _
      // Predicated region
      $region53: #{tpu_custom_call.1} parent=11 // pred_check
        %p434 = pneg %p279
      $region54: #{tpu_custom_call.1} parent=11 // pred_check_branch
        %436 = sbr.rel (%p434) target = $region56
      $region55: #{tpu_custom_call.1} parent=11 // pred_region
        _
      $region56: #{tpu_custom_call.1} parent=11 // pred_fallthru
        _
      // Predicated region
      $region57: #{tpu_custom_call.1} parent=11 // pred_check
        %p437 = pneg %p300
      $region58: #{tpu_custom_call.1} parent=11 // pred_check_branch
        %439 = sbr.rel (%p437) target = $region60
      $region59: #{tpu_custom_call.1} parent=11 // pred_region
        _
      $region60: #{tpu_custom_call.1} parent=11 // pred_fallthru
        _
      // Predicated region
      $region61: #{tpu_custom_call.1} parent=11 // pred_check
        %p440 = pneg %p321
      $region62: #{tpu_custom_call.1} parent=11 // pred_check_branch
        %442 = sbr.rel (%p440) target = $region64
      $region63: #{tpu_custom_call.1} parent=11 // pred_region
        _
      $region64: #{tpu_custom_call.1} parent=11 // pred_fallthru
        _
      // Predicated region
      $region65: #{tpu_custom_call.1} parent=11 // pred_check
        %p443 = pneg %p342
      $region66: #{tpu_custom_call.1} parent=11 // pred_check_branch
        %445 = sbr.rel (%p443) target = $region68
      $region67: #{tpu_custom_call.1} parent=11 // pred_region
        _
      $region68: #{tpu_custom_call.1} parent=11 // pred_fallthru
        _
      // Predicated region
      $region69: #{tpu_custom_call.1} parent=11 // pred_check
        %p446 = pneg %p363
      $region70: #{tpu_custom_call.1} parent=11 // pred_check_branch
        %448 = sbr.rel (%p446) target = $region72
      $region71: #{tpu_custom_call.1} parent=11 // pred_region
        _
      $region72: #{tpu_custom_call.1} parent=11 // pred_fallthru
        _
    $region12: #{tpu_custom_call.1} parent=5 // pred_fallthru
      _
    %p449 = scmp.lt.s32.totalorder %s22, 2
    // Predicated region
    $region73: #{tpu_custom_call.1} parent=5 // pred_check
      %p450 = pneg %p449
    $region74: #{tpu_custom_call.1} parent=5 // pred_check_branch
      %452 = sbr.rel (%p450) target = $region76
    $region75: #{tpu_custom_call.1} parent=5 // pred_region
      // Predicated region
      $region77: #{tpu_custom_call.1} parent=75 // pred_check
        %p453 = pneg %p42
      $region78: #{tpu_custom_call.1} parent=75 // pred_check_branch
        %455 = sbr.rel (%p453) target = $region80
      $region79: #{tpu_custom_call.1} parent=75 // pred_region
        %p456 = scmp.lt.s32.totalorder %s22, 1
        %s457 = scalar_select %p456, %s22, 1
        %s458 = smul.addr %s457, 4
        %s459 = scalar_lea.vmem %s0, %s458
      $region80: #{tpu_custom_call.1} parent=75 // pred_fallthru
        _
    $region76: #{tpu_custom_call.1} parent=5 // pred_fallthru
      _
    %p460 = scmp.le.s32.totalorder 1, %s22
    %p461 = scmp.lt.s32.totalorder %s22, 3
    %p462 = pnand %p460, %p461
    %p463 = pneg %p462
    // Predicated region
    $region81: #{tpu_custom_call.1} parent=5 // pred_check
      _
    $region82: #{tpu_custom_call.1} parent=5 // pred_check_branch
      %465 = sbr.rel (%p462) target = $region84
    $region83: #{tpu_custom_call.1} parent=5 // pred_region
      %s466 = ssub.s32 %s22, 1
      %p467 = scmp.lt.s32.totalorder %s27, 1
      %s468 = scalar_select %p467, %s27, 1
      %s469 = smul.addr %s468, 4
      %s470 = scalar_lea.vmem %s0, %s469
      %p471 = pneg %p48
      %p472 = pneg %p45
      %p473 = pneg %p69
      %p474 = pneg %p66
      %p475 = pneg %p90
      %p476 = pneg %p87
      %p477 = pneg %p111
      %p478 = pneg %p108
      %p479 = pneg %p132
      %p480 = pneg %p129
      %p481 = pneg %p153
      %p482 = pneg %p150
      %p483 = pneg %p174
      %p484 = pneg %p171
      %p485 = pneg %p195
      %p486 = pneg %p192
      %p487 = pneg %p216
      %p488 = pneg %p213
      %p489 = pneg %p237
      %p490 = pneg %p234
      %p491 = pneg %p258
      %p492 = pneg %p255
      %p493 = pneg %p279
      %p494 = pneg %p276
      %p495 = pneg %p300
      %p496 = pneg %p297
      %p497 = pneg %p321
      %p498 = pneg %p318
      %p499 = pneg %p342
      %p500 = pneg %p339
      %p501 = pneg %p363
      %p502 = pneg %p360
      %p503 = pneg %p389
      %p504 = pneg %p386
      %p505 = scmp.lt.s32.totalorder %s27, 1
      %s506 = scalar_select %p505, %s27, 1
      %s507 = smul.addr %s506, 32
      %s508 = smul.addr %s507, 8
      %s509 = scalar_lea.vmem %s16, %s508
      %p510 = scmp.lt.s32.totalorder %s27, 1
      %s511 = scalar_select %p510, %s27, 1
      %s512 = smul.addr %s511, 4
      %s513 = scalar_lea.vmem %s0, %s512
      %p514 = scmp.lt.s32.totalorder %s27, 1
      %s515 = scalar_select %p514, %s27, 1
      %s516 = smul.addr %s515, 32
      %s517 = smul.addr %s516, 8
      %s518 = scalar_lea.vmem %s16, %s517
      %v520 = vld [vmem:[%s513] sm:$0x7]
      %v521 = vld [vmem:[%s1] sm:$0xff]
      %v522 = vld [vmem:[%s1 + $0x8] sm:$0xff]
      %v523 = vld [vmem:[%s1 + $0x10] sm:$0xff]
      %v524 = vld [vmem:[%s1 + $0x18] sm:$0xff]
      %v525 = vld [vmem:[%s1 + $0x20] sm:$0xff]
      %v526 = vld [vmem:[%s1 + $0x28] sm:$0xff]
      %v527 = vld [vmem:[%s1 + $0x30] sm:$0xff]
      %v528 = vld [vmem:[%s1 + $0x38] sm:$0xff]
      %530 = vset.pattern.permute.xlu0 0
      %531 = vperm.xlu0 %530, %v521
      %v532 = vpop.permute.xlu0 %531
      %535 = vset.pattern.permute.xlu0 0
      %536 = vperm.xlu0 %535, %v522
      %v537 = vpop.permute.xlu0 %536
      %540 = vset.pattern.permute.xlu0 0
      %541 = vperm.xlu0 %540, %v523
      %v542 = vpop.permute.xlu0 %541
      %545 = vset.pattern.permute.xlu0 0
      %546 = vperm.xlu0 %545, %v524
      %v547 = vpop.permute.xlu0 %546
      %550 = vset.pattern.permute.xlu0 0
      %551 = vperm.xlu0 %550, %v525
      %v552 = vpop.permute.xlu0 %551
      %555 = vset.pattern.permute.xlu0 0
      %556 = vperm.xlu0 %555, %v526
      %v557 = vpop.permute.xlu0 %556
      %560 = vset.pattern.permute.xlu0 0
      %561 = vperm.xlu0 %560, %v527
      %v562 = vpop.permute.xlu0 %561
      %565 = vset.pattern.permute.xlu0 0
      %566 = vperm.xlu0 %565, %v528
      %v567 = vpop.permute.xlu0 %566
      %v569 = vlaneseq
      %v570 = vshrl.u32 %v569, 7
      %v571 = vsub.s32 0, %v570
      %v572 = vrot.slane %v520, %v571
      %v573 = vmul.f32 %v532, %v572
      %v574 = vmul.f32 %v537, %v572
      %v575 = vmul.f32 %v542, %v572
      %v576 = vmul.f32 %v547, %v572
      %v577 = vmul.f32 %v552, %v572
      %v578 = vmul.f32 %v557, %v572
      %v579 = vmul.f32 %v562, %v572
      %v580 = vmul.f32 %v567, %v572
      %581 = vset.pattern.permute.xlu0 1
      %582 = vperm.xlu0 %581, %v521
      %v583 = vpop.permute.xlu0 %582
      %585 = vset.pattern.permute.xlu0 1
      %586 = vperm.xlu0 %585, %v522
      %v587 = vpop.permute.xlu0 %586
      %589 = vset.pattern.permute.xlu0 1
      %590 = vperm.xlu0 %589, %v523
      %v591 = vpop.permute.xlu0 %590
      %593 = vset.pattern.permute.xlu0 1
      %594 = vperm.xlu0 %593, %v524
      %v595 = vpop.permute.xlu0 %594
      %597 = vset.pattern.permute.xlu0 1
      %598 = vperm.xlu0 %597, %v525
      %v599 = vpop.permute.xlu0 %598
      %601 = vset.pattern.permute.xlu0 1
      %602 = vperm.xlu0 %601, %v526
      %v603 = vpop.permute.xlu0 %602
      %605 = vset.pattern.permute.xlu0 1
      %606 = vperm.xlu0 %605, %v527
      %v607 = vpop.permute.xlu0 %606
      %609 = vset.pattern.permute.xlu0 1
      %610 = vperm.xlu0 %609, %v528
      %v611 = vpop.permute.xlu0 %610
      %v613 = vlaneseq
      %v614 = vshrl.u32 %v613, 7
      %v615 = vsub.s32 1, %v614
      %v616 = vrot.slane %v520, %v615
      %v617 = vmul.f32 %v583, %v616
      %v618 = vmul.f32 %v587, %v616
      %v619 = vmul.f32 %v591, %v616
      %v620 = vmul.f32 %v595, %v616
      %v621 = vmul.f32 %v599, %v616
      %v622 = vmul.f32 %v603, %v616
      %v623 = vmul.f32 %v607, %v616
      %v624 = vmul.f32 %v611, %v616
      %v625 = vadd.f32 %v573, %v617
      %v626 = vadd.f32 %v574, %v618
      %v627 = vadd.f32 %v575, %v619
      %v628 = vadd.f32 %v576, %v620
      %v629 = vadd.f32 %v577, %v621
      %v630 = vadd.f32 %v578, %v622
      %v631 = vadd.f32 %v579, %v623
      %v632 = vadd.f32 %v580, %v624
      %633 = vset.pattern.permute.xlu0 2
      %634 = vperm.xlu0 %633, %v521
      %v635 = vpop.permute.xlu0 %634
      %637 = vset.pattern.permute.xlu0 2
      %638 = vperm.xlu0 %637, %v522
      %v639 = vpop.permute.xlu0 %638
      %641 = vset.pattern.permute.xlu0 2
      %642 = vperm.xlu0 %641, %v523
      %v643 = vpop.permute.xlu0 %642
      %645 = vset.pattern.permute.xlu0 2
      %646 = vperm.xlu0 %645, %v524
      %v647 = vpop.permute.xlu0 %646
      %649 = vset.pattern.permute.xlu0 2
      %650 = vperm.xlu0 %649, %v525
      %v651 = vpop.permute.xlu0 %650
      %653 = vset.pattern.permute.xlu0 2
      %654 = vperm.xlu0 %653, %v526
      %v655 = vpop.permute.xlu0 %654
      %657 = vset.pattern.permute.xlu0 2
      %658 = vperm.xlu0 %657, %v527
      %v659 = vpop.permute.xlu0 %658
      %661 = vset.pattern.permute.xlu0 2
      %662 = vperm.xlu0 %661, %v528
      %v663 = vpop.permute.xlu0 %662
      %v665 = vlaneseq
      %v666 = vshrl.u32 %v665, 7
      %v667 = vsub.s32 2, %v666
      %v668 = vrot.slane %v520, %v667
      %v669 = vmul.f32 %v635, %v668
      %v670 = vmul.f32 %v639, %v668
      %v671 = vmul.f32 %v643, %v668
      %v672 = vmul.f32 %v647, %v668
      %v673 = vmul.f32 %v651, %v668
      %v674 = vmul.f32 %v655, %v668
      %v675 = vmul.f32 %v659, %v668
      %v676 = vmul.f32 %v663, %v668
      %v677 = vadd.f32 %v625, %v669
      %v678 = vadd.f32 %v626, %v670
      %v679 = vadd.f32 %v627, %v671
      %v680 = vadd.f32 %v628, %v672
      %v681 = vadd.f32 %v629, %v673
      %v682 = vadd.f32 %v630, %v674
      %v683 = vadd.f32 %v631, %v675
      %v684 = vadd.f32 %v632, %v676
      %v685 = vld [vmem:[%s2] sm:$0xff]
      %v686 = vld [vmem:[%s2 + $0x8] sm:$0xff]
      %v687 = vld [vmem:[%s2 + $0x10] sm:$0xff]
      %v688 = vld [vmem:[%s2 + $0x18] sm:$0xff]
      %v689 = vld [vmem:[%s2 + $0x20] sm:$0xff]
      %v690 = vld [vmem:[%s2 + $0x28] sm:$0xff]
      %v691 = vld [vmem:[%s2 + $0x30] sm:$0xff]
      %v692 = vld [vmem:[%s2 + $0x38] sm:$0xff]
      %694 = vset.pattern.permute.xlu0 0
      %695 = vperm.xlu0 %694, %v685
      %v696 = vpop.permute.xlu0 %695
      %699 = vset.pattern.permute.xlu0 0
      %700 = vperm.xlu0 %699, %v686
      %v701 = vpop.permute.xlu0 %700
      %704 = vset.pattern.permute.xlu0 0
      %705 = vperm.xlu0 %704, %v687
      %v706 = vpop.permute.xlu0 %705
      %709 = vset.pattern.permute.xlu0 0
      %710 = vperm.xlu0 %709, %v688
      %v711 = vpop.permute.xlu0 %710
      %714 = vset.pattern.permute.xlu0 0
      %715 = vperm.xlu0 %714, %v689
      %v716 = vpop.permute.xlu0 %715
      %719 = vset.pattern.permute.xlu0 0
      %720 = vperm.xlu0 %719, %v690
      %v721 = vpop.permute.xlu0 %720
      %724 = vset.pattern.permute.xlu0 0
      %725 = vperm.xlu0 %724, %v691
      %v726 = vpop.permute.xlu0 %725
      %729 = vset.pattern.permute.xlu0 0
      %730 = vperm.xlu0 %729, %v692
      %v731 = vpop.permute.xlu0 %730
      %v733 = vmul.f32 %v677, %v696
      %v734 = vmul.f32 %v678, %v701
      %v735 = vmul.f32 %v679, %v706
      %v736 = vmul.f32 %v680, %v711
      %v737 = vmul.f32 %v681, %v716
      %v738 = vmul.f32 %v682, %v721
      %v739 = vmul.f32 %v683, %v726
      %v740 = vmul.f32 %v684, %v731
      %v741 = vld [vmem:[%s3] sm:$0xff]
      %v742 = vld [vmem:[%s3 + $0x8] sm:$0xff]
      %v743 = vld [vmem:[%s3 + $0x10] sm:$0xff]
      %v744 = vld [vmem:[%s3 + $0x18] sm:$0xff]
      %v745 = vld [vmem:[%s3 + $0x20] sm:$0xff]
      %v746 = vld [vmem:[%s3 + $0x28] sm:$0xff]
      %v747 = vld [vmem:[%s3 + $0x30] sm:$0xff]
      %v748 = vld [vmem:[%s3 + $0x38] sm:$0xff]
      %750 = vset.pattern.permute.xlu0 0
      %751 = vperm.xlu0 %750, %v741
      %v752 = vpop.permute.xlu0 %751
      %755 = vset.pattern.permute.xlu0 0
      %756 = vperm.xlu0 %755, %v742
      %v757 = vpop.permute.xlu0 %756
      %760 = vset.pattern.permute.xlu0 0
      %761 = vperm.xlu0 %760, %v743
      %v762 = vpop.permute.xlu0 %761
      %765 = vset.pattern.permute.xlu0 0
      %766 = vperm.xlu0 %765, %v744
      %v767 = vpop.permute.xlu0 %766
      %770 = vset.pattern.permute.xlu0 0
      %771 = vperm.xlu0 %770, %v745
      %v772 = vpop.permute.xlu0 %771
      %775 = vset.pattern.permute.xlu0 0
      %776 = vperm.xlu0 %775, %v746
      %v777 = vpop.permute.xlu0 %776
      %780 = vset.pattern.permute.xlu0 0
      %781 = vperm.xlu0 %780, %v747
      %v782 = vpop.permute.xlu0 %781
      %785 = vset.pattern.permute.xlu0 0
      %786 = vperm.xlu0 %785, %v748
      %v787 = vpop.permute.xlu0 %786
      %v789 = vadd.f32 %v733, %v752
      %v790 = vadd.f32 %v734, %v757
      %v791 = vadd.f32 %v735, %v762
      %v792 = vadd.f32 %v736, %v767
      %v793 = vadd.f32 %v737, %v772
      %v794 = vadd.f32 %v738, %v777
      %v795 = vadd.f32 %v739, %v782
      %v796 = vadd.f32 %v740, %v787
      %v797 = vmax.f32 %v789, 0.0
      %v798 = vmax.f32 %v790, 0.0
      %v799 = vmax.f32 %v791, 0.0
      %v800 = vmax.f32 %v792, 0.0
      %v801 = vmax.f32 %v793, 0.0
      %v802 = vmax.f32 %v794, 0.0
      %v803 = vmax.f32 %v795, 0.0
      %v804 = vmax.f32 %v796, 0.0
      %v805 = vpack.c.bf16 %v798, %v797
      %v806 = vpack.c.bf16 %v800, %v799
      %v807 = vpack.c.bf16 %v802, %v801
      %v808 = vpack.c.bf16 %v804, %v803
      %v809 = vld [vmem:[%s4] sm:$0xf]
      %v810 = vld [vmem:[%s4 + $0x4] sm:$0xf]
      %v811 = vld [vmem:[%s4 + $0x8] sm:$0xf]
      %v812 = vld [vmem:[%s4 + $0xc] sm:$0xf]
      %v813 = vld [vmem:[%s4 + $0x10] sm:$0xf]
      %v814 = vld [vmem:[%s4 + $0x14] sm:$0xf]
      %v815 = vld [vmem:[%s4 + $0x18] sm:$0xf]
      %v816 = vld [vmem:[%s4 + $0x1c] sm:$0xf]
      %v817 = vld [vmem:[%s4 + $0x20] sm:$0xf]
      %v818 = vld [vmem:[%s4 + $0x24] sm:$0xf]
      %v819 = vld [vmem:[%s4 + $0x28] sm:$0xf]
      %v820 = vld [vmem:[%s4 + $0x2c] sm:$0xf]
      %v821 = vld [vmem:[%s4 + $0x30] sm:$0xf]
      %v822 = vld [vmem:[%s4 + $0x34] sm:$0xf]
      %v823 = vld [vmem:[%s4 + $0x38] sm:$0xf]
      %v824 = vld [vmem:[%s4 + $0x3c] sm:$0xf]
      %v841 = vunpack.c.l.b16 %v809
      %v842 = vunpack.c.l.b16 %v810
      %v843 = vunpack.c.l.b16 %v811
      %v844 = vunpack.c.l.b16 %v812
      %v845 = vunpack.c.l.b16 %v813
      %v846 = vunpack.c.l.b16 %v814
      %v847 = vunpack.c.l.b16 %v815
      %v848 = vunpack.c.l.b16 %v816
      %v849 = vunpack.c.l.b16 %v817
      %v850 = vunpack.c.l.b16 %v818
      %v851 = vunpack.c.l.b16 %v819
      %v852 = vunpack.c.l.b16 %v820
      %v853 = vunpack.c.l.b16 %v821
      %v854 = vunpack.c.l.b16 %v822
      %v855 = vunpack.c.l.b16 %v823
      %v856 = vunpack.c.l.b16 %v824
      %v857 = vpack.c.b16 %v842, %v841
      %v858 = vpack.c.b16 %v844, %v843
      %v859 = vpack.c.b16 %v846, %v845
      %v860 = vpack.c.b16 %v848, %v847
      %v861 = vpack.c.b16 %v850, %v849
      %v862 = vpack.c.b16 %v852, %v851
      %v863 = vpack.c.b16 %v854, %v853
      %v864 = vpack.c.b16 %v856, %v855
      %vm865 = vcmask 523264
      %v867 = vsel %vm865, %v857, 0
      %v870 = vsel %vm865, %v858, 0
      %v873 = vsel %vm865, %v859, 0
      %v876 = vsel %vm865, %v860, 0
      %v879 = vsel %vm865, %v861, 0
      %v882 = vsel %vm865, %v862, 0
      %v885 = vsel %vm865, %v863, 0
      %v888 = vsel %vm865, %v864, 0
      %890 = vmatprep.subr.bf16.mxu0 0
      %891 = vmatpush1.bf16.msra.mxu0 %v805
      %892 = vmatprep.subr.bf16.mxu0 0
      %893 = vmatpush1.bf16.msra.mxu0 %v806
      %894 = vmatprep.subr.bf16.mxu0 0
      %895 = vmatpush1.bf16.msra.mxu0 %v807
      %896 = vmatprep.subr.bf16.mxu0 0
      %897 = vmatpush1.bf16.msra.mxu0 %v808
      %898 = vmatprep.subr.bf16.mxu0 0
      %899 = vmatpush1.bf16.msra.mxu0 0
      %900 = vmatprep.subr.bf16.mxu0 0
      %901 = vmatpush1.bf16.msra.mxu0 0
      %902 = vmatprep.subr.bf16.mxu0 0
      %903 = vmatpush1.bf16.msra.mxu0 0
      %904 = vmatprep.subr.bf16.mxu0 0
      %905 = vmatpush1.bf16.msra.mxu0 0
      %906 = vmatprep.subr.bf16.mxu0 0
      %907 = vmatpush1.bf16.msra.mxu0 0
      %908 = vmatprep.subr.bf16.mxu0 0
      %909 = vmatpush1.bf16.msra.mxu0 0
      %910 = vmatprep.subr.bf16.mxu0 0
      %911 = vmatpush1.bf16.msra.mxu0 0
      %912 = vmatprep.subr.bf16.mxu0 0
      %913 = vmatpush1.bf16.msra.mxu0 0
      %914 = vmatprep.subr.bf16.mxu0 0
      %915 = vmatpush1.bf16.msra.mxu0 0
      %916 = vmatprep.subr.bf16.mxu0 0
      %917 = vmatpush1.bf16.msra.mxu0 0
      %918 = vmatprep.subr.bf16.mxu0 0
      %919 = vmatpush1.bf16.msra.mxu0 0
      %920 = vmatprep.subr.bf16.mxu0 0
      %921 = vmatpush1.bf16.msra.mxu0 0
      %922 = vmatprep.mubr.bf16.mxu0 0
      %923 = vmatmul.mubr.bf16.gmra.mrb[0].mxu0 %v867
      %v924 = vpop.f32.mrb[0].mxu0
      %v925 = vadd.f32 0.0, %v924
      %v926 = vpop.f32.mrb[0].mxu0
      %v927 = vpop.f32.mrb[0].mxu0
      %v928 = vadd.f32 0.0, %v927
      %v929 = vpop.f32.mrb[0].mxu0
      %930 = vmatprep.mubr.bf16.mxu0 0
      %931 = vmatmul.mubr.bf16.gmra.mrb[0].mxu0 %v870
      %v932 = vpop.f32.mrb[0].mxu0
      %v933 = vadd.f32 0.0, %v932
      %v934 = vpop.f32.mrb[0].mxu0
      %v935 = vpop.f32.mrb[0].mxu0
      %v936 = vadd.f32 0.0, %v935
      %v937 = vpop.f32.mrb[0].mxu0
      %938 = vmatprep.mubr.bf16.mxu0 0
      %939 = vmatmul.mubr.bf16.gmra.mrb[0].mxu0 %v873
      %v940 = vpop.f32.mrb[0].mxu0
      %v941 = vadd.f32 0.0, %v940
      %v942 = vpop.f32.mrb[0].mxu0
      %v943 = vpop.f32.mrb[0].mxu0
      %v944 = vadd.f32 0.0, %v943
      %v945 = vpop.f32.mrb[0].mxu0
      %946 = vmatprep.mubr.bf16.mxu0 0
      %947 = vmatmul.mubr.bf16.gmra.mrb[0].mxu0 %v876
      %v948 = vpop.f32.mrb[0].mxu0
      %v949 = vadd.f32 0.0, %v948
      %v950 = vpop.f32.mrb[0].mxu0
      %v951 = vpop.f32.mrb[0].mxu0
      %v952 = vadd.f32 0.0, %v951
      %v953 = vpop.f32.mrb[0].mxu0
      %954 = vmatprep.mubr.bf16.mxu0 0
      %955 = vmatmul.mubr.bf16.gmra.mrb[0].mxu0 %v879
      %v956 = vpop.f32.mrb[0].mxu0
      %v957 = vadd.f32 0.0, %v956
      %v958 = vpop.f32.mrb[0].mxu0
      %v959 = vpop.f32.mrb[0].mxu0
      %v960 = vadd.f32 0.0, %v959
      %v961 = vpop.f32.mrb[0].mxu0
      %962 = vmatprep.mubr.bf16.mxu0 0
      %963 = vmatmul.mubr.bf16.gmra.mrb[0].mxu0 %v882
      %v964 = vpop.f32.mrb[0].mxu0
      %v965 = vadd.f32 0.0, %v964
      %v966 = vpop.f32.mrb[0].mxu0
      %v967 = vpop.f32.mrb[0].mxu0
      %v968 = vadd.f32 0.0, %v967
      %v969 = vpop.f32.mrb[0].mxu0
      %970 = vmatprep.mubr.bf16.mxu0 0
      %971 = vmatmul.mubr.bf16.gmra.mrb[0].mxu0 %v885
      %v972 = vpop.f32.mrb[0].mxu0
      %v973 = vadd.f32 0.0, %v972
      %v974 = vpop.f32.mrb[0].mxu0
      %v975 = vpop.f32.mrb[0].mxu0
      %v976 = vadd.f32 0.0, %v975
      %v977 = vpop.f32.mrb[0].mxu0
      %978 = vmatprep.mubr.bf16.mxu0 0
      %979 = vmatmul.mubr.bf16.gmra.mrb[0].mxu0 %v888
      %v980 = vpop.f32.mrb[0].mxu0
      %v981 = vadd.f32 0.0, %v980
      %v982 = vpop.f32.mrb[0].mxu0
      %v983 = vpop.f32.mrb[0].mxu0
      %v984 = vadd.f32 0.0, %v983
      %v985 = vpop.f32.mrb[0].mxu0
      %986 = vdwg.mxu0
      %v987 = vld [vmem:[%s5] sm:$0xff]
      %v988 = vld [vmem:[%s5 + $0x8] sm:$0xff]
      %v989 = vld [vmem:[%s5 + $0x10] sm:$0xff]
      %v990 = vld [vmem:[%s5 + $0x18] sm:$0xff]
      %v991 = vld [vmem:[%s5 + $0x20] sm:$0xff]
      %v992 = vld [vmem:[%s5 + $0x28] sm:$0xff]
      %v993 = vld [vmem:[%s5 + $0x30] sm:$0xff]
      %v994 = vld [vmem:[%s5 + $0x38] sm:$0xff]
      %v995 = vld [vmem:[%s5 + $0x40] sm:$0xff]
      %v996 = vld [vmem:[%s5 + $0x48] sm:$0xff]
      %v997 = vld [vmem:[%s5 + $0x50] sm:$0xff]
      %v998 = vld [vmem:[%s5 + $0x58] sm:$0xff]
      %v999 = vld [vmem:[%s5 + $0x60] sm:$0xff]
      %v1000 = vld [vmem:[%s5 + $0x68] sm:$0xff]
      %v1001 = vld [vmem:[%s5 + $0x70] sm:$0xff]
      %v1002 = vld [vmem:[%s5 + $0x78] sm:$0xff]
      %1004 = vset.pattern.permute.xlu0 0
      %1005 = vperm.xlu0 %1004, %v987
      %v1006 = vpop.permute.xlu0 %1005
      %1009 = vset.pattern.permute.xlu0 0
      %1010 = vperm.xlu0 %1009, %v988
      %v1011 = vpop.permute.xlu0 %1010
      %1014 = vset.pattern.permute.xlu0 0
      %1015 = vperm.xlu0 %1014, %v989
      %v1016 = vpop.permute.xlu0 %1015
      %1019 = vset.pattern.permute.xlu0 0
      %1020 = vperm.xlu0 %1019, %v990
      %v1021 = vpop.permute.xlu0 %1020
      %1024 = vset.pattern.permute.xlu0 0
      %1025 = vperm.xlu0 %1024, %v991
      %v1026 = vpop.permute.xlu0 %1025
      %1029 = vset.pattern.permute.xlu0 0
      %1030 = vperm.xlu0 %1029, %v992
      %v1031 = vpop.permute.xlu0 %1030
      %1034 = vset.pattern.permute.xlu0 0
      %1035 = vperm.xlu0 %1034, %v993
      %v1036 = vpop.permute.xlu0 %1035
      %1039 = vset.pattern.permute.xlu0 0
      %1040 = vperm.xlu0 %1039, %v994
      %v1041 = vpop.permute.xlu0 %1040
      %1044 = vset.pattern.permute.xlu0 0
      %1045 = vperm.xlu0 %1044, %v995
      %v1046 = vpop.permute.xlu0 %1045
      %1049 = vset.pattern.permute.xlu0 0
      %1050 = vperm.xlu0 %1049, %v996
      %v1051 = vpop.permute.xlu0 %1050
      %1054 = vset.pattern.permute.xlu0 0
      %1055 = vperm.xlu0 %1054, %v997
      %v1056 = vpop.permute.xlu0 %1055
      %1059 = vset.pattern.permute.xlu0 0
      %1060 = vperm.xlu0 %1059, %v998
      %v1061 = vpop.permute.xlu0 %1060
      %1064 = vset.pattern.permute.xlu0 0
      %1065 = vperm.xlu0 %1064, %v999
      %v1066 = vpop.permute.xlu0 %1065
      %1069 = vset.pattern.permute.xlu0 0
      %1070 = vperm.xlu0 %1069, %v1000
      %v1071 = vpop.permute.xlu0 %1070
      %1074 = vset.pattern.permute.xlu0 0
      %1075 = vperm.xlu0 %1074, %v1001
      %v1076 = vpop.permute.xlu0 %1075
      %1079 = vset.pattern.permute.xlu0 0
      %1080 = vperm.xlu0 %1079, %v1002
      %v1081 = vpop.permute.xlu0 %1080
      %v1083 = vmul.f32 %v925, %v1006
      %v1084 = vmul.f32 %v928, %v1011
      %v1085 = vmul.f32 %v933, %v1016
      %v1086 = vmul.f32 %v936, %v1021
      %v1087 = vmul.f32 %v941, %v1026
      %v1088 = vmul.f32 %v944, %v1031
      %v1089 = vmul.f32 %v949, %v1036
      %v1090 = vmul.f32 %v952, %v1041
      %v1091 = vmul.f32 %v957, %v1046
      %v1092 = vmul.f32 %v960, %v1051
      %v1093 = vmul.f32 %v965, %v1056
      %v1094 = vmul.f32 %v968, %v1061
      %v1095 = vmul.f32 %v973, %v1066
      %v1096 = vmul.f32 %v976, %v1071
      %v1097 = vmul.f32 %v981, %v1076
      %v1098 = vmul.f32 %v984, %v1081
      %v1099 = vld [vmem:[%s6] sm:$0xff]
      %v1100 = vld [vmem:[%s6 + $0x8] sm:$0xff]
      %v1101 = vld [vmem:[%s6 + $0x10] sm:$0xff]
      %v1102 = vld [vmem:[%s6 + $0x18] sm:$0xff]
      %v1103 = vld [vmem:[%s6 + $0x20] sm:$0xff]
      %v1104 = vld [vmem:[%s6 + $0x28] sm:$0xff]
      %v1105 = vld [vmem:[%s6 + $0x30] sm:$0xff]
      %v1106 = vld [vmem:[%s6 + $0x38] sm:$0xff]
      %v1107 = vld [vmem:[%s6 + $0x40] sm:$0xff]
      %v1108 = vld [vmem:[%s6 + $0x48] sm:$0xff]
      %v1109 = vld [vmem:[%s6 + $0x50] sm:$0xff]
      %v1110 = vld [vmem:[%s6 + $0x58] sm:$0xff]
      %v1111 = vld [vmem:[%s6 + $0x60] sm:$0xff]
      %v1112 = vld [vmem:[%s6 + $0x68] sm:$0xff]
      %v1113 = vld [vmem:[%s6 + $0x70] sm:$0xff]
      %v1114 = vld [vmem:[%s6 + $0x78] sm:$0xff]
      %1116 = vset.pattern.permute.xlu0 0
      %1117 = vperm.xlu0 %1116, %v1099
      %v1118 = vpop.permute.xlu0 %1117
      %1121 = vset.pattern.permute.xlu0 0
      %1122 = vperm.xlu0 %1121, %v1100
      %v1123 = vpop.permute.xlu0 %1122
      %1126 = vset.pattern.permute.xlu0 0
      %1127 = vperm.xlu0 %1126, %v1101
      %v1128 = vpop.permute.xlu0 %1127
      %1131 = vset.pattern.permute.xlu0 0
      %1132 = vperm.xlu0 %1131, %v1102
      %v1133 = vpop.permute.xlu0 %1132
      %1136 = vset.pattern.permute.xlu0 0
      %1137 = vperm.xlu0 %1136, %v1103
      %v1138 = vpop.permute.xlu0 %1137
      %1141 = vset.pattern.permute.xlu0 0
      %1142 = vperm.xlu0 %1141, %v1104
      %v1143 = vpop.permute.xlu0 %1142
      %1146 = vset.pattern.permute.xlu0 0
      %1147 = vperm.xlu0 %1146, %v1105
      %v1148 = vpop.permute.xlu0 %1147
      %1151 = vset.pattern.permute.xlu0 0
      %1152 = vperm.xlu0 %1151, %v1106
      %v1153 = vpop.permute.xlu0 %1152
      %1156 = vset.pattern.permute.xlu0 0
      %1157 = vperm.xlu0 %1156, %v1107
      %v1158 = vpop.permute.xlu0 %1157
      %1161 = vset.pattern.permute.xlu0 0
      %1162 = vperm.xlu0 %1161, %v1108
      %v1163 = vpop.permute.xlu0 %1162
      %1166 = vset.pattern.permute.xlu0 0
      %1167 = vperm.xlu0 %1166, %v1109
      %v1168 = vpop.permute.xlu0 %1167
      %1171 = vset.pattern.permute.xlu0 0
      %1172 = vperm.xlu0 %1171, %v1110
      %v1173 = vpop.permute.xlu0 %1172
      %1176 = vset.pattern.permute.xlu0 0
      %1177 = vperm.xlu0 %1176, %v1111
      %v1178 = vpop.permute.xlu0 %1177
      %1181 = vset.pattern.permute.xlu0 0
      %1182 = vperm.xlu0 %1181, %v1112
      %v1183 = vpop.permute.xlu0 %1182
      %1186 = vset.pattern.permute.xlu0 0
      %1187 = vperm.xlu0 %1186, %v1113
      %v1188 = vpop.permute.xlu0 %1187
      %1191 = vset.pattern.permute.xlu0 0
      %1192 = vperm.xlu0 %1191, %v1114
      %v1193 = vpop.permute.xlu0 %1192
      %v1195 = vadd.f32 %v1083, %v1118
      %v1196 = vadd.f32 %v1084, %v1123
      %v1197 = vadd.f32 %v1085, %v1128
      %v1198 = vadd.f32 %v1086, %v1133
      %v1199 = vadd.f32 %v1087, %v1138
      %v1200 = vadd.f32 %v1088, %v1143
      %v1201 = vadd.f32 %v1089, %v1148
      %v1202 = vadd.f32 %v1090, %v1153
      %v1203 = vadd.f32 %v1091, %v1158
      %v1204 = vadd.f32 %v1092, %v1163
      %v1205 = vadd.f32 %v1093, %v1168
      %v1206 = vadd.f32 %v1094, %v1173
      %v1207 = vadd.f32 %v1095, %v1178
      %v1208 = vadd.f32 %v1096, %v1183
      %v1209 = vadd.f32 %v1097, %v1188
      %v1210 = vadd.f32 %v1098, %v1193
      %v1211 = vmax.f32 %v1195, 0.0
      %v1212 = vmax.f32 %v1196, 0.0
      %v1213 = vmax.f32 %v1197, 0.0
      %v1214 = vmax.f32 %v1198, 0.0
      %v1215 = vmax.f32 %v1199, 0.0
      %v1216 = vmax.f32 %v1200, 0.0
      %v1217 = vmax.f32 %v1201, 0.0
      %v1218 = vmax.f32 %v1202, 0.0
      %v1219 = vmax.f32 %v1203, 0.0
      %v1220 = vmax.f32 %v1204, 0.0
      %v1221 = vmax.f32 %v1205, 0.0
      %v1222 = vmax.f32 %v1206, 0.0
      %v1223 = vmax.f32 %v1207, 0.0
      %v1224 = vmax.f32 %v1208, 0.0
      %v1225 = vmax.f32 %v1209, 0.0
      %v1226 = vmax.f32 %v1210, 0.0
      %v1227 = vpack.c.bf16 %v1212, %v1211
      %v1228 = vpack.c.bf16 %v1214, %v1213
      %v1229 = vpack.c.bf16 %v1216, %v1215
      %v1230 = vpack.c.bf16 %v1218, %v1217
      %v1231 = vpack.c.bf16 %v1220, %v1219
      %v1232 = vpack.c.bf16 %v1222, %v1221
      %v1233 = vpack.c.bf16 %v1224, %v1223
      %v1234 = vpack.c.bf16 %v1226, %v1225
      %v1235 = vld [vmem:[%s7] sm:$0xf]
      %v1236 = vld [vmem:[%s7 + $0x4] sm:$0xf]
      %v1237 = vld [vmem:[%s7 + $0x8] sm:$0xf]
      %v1238 = vld [vmem:[%s7 + $0xc] sm:$0xf]
      %v1239 = vld [vmem:[%s7 + $0x10] sm:$0xf]
      %v1240 = vld [vmem:[%s7 + $0x14] sm:$0xf]
      %v1241 = vld [vmem:[%s7 + $0x18] sm:$0xf]
      %v1242 = vld [vmem:[%s7 + $0x1c] sm:$0xf]
      %v1243 = vld [vmem:[%s7 + $0x20] sm:$0xf]
      %v1244 = vld [vmem:[%s7 + $0x24] sm:$0xf]
      %v1245 = vld [vmem:[%s7 + $0x28] sm:$0xf]
      %v1246 = vld [vmem:[%s7 + $0x2c] sm:$0xf]
      %v1247 = vld [vmem:[%s7 + $0x30] sm:$0xf]
      %v1248 = vld [vmem:[%s7 + $0x34] sm:$0xf]
      %v1249 = vld [vmem:[%s7 + $0x38] sm:$0xf]
      %v1250 = vld [vmem:[%s7 + $0x3c] sm:$0xf]
      %v1251 = vld [vmem:[%s7 + $0x40] sm:$0xf]
      %v1252 = vld [vmem:[%s7 + $0x44] sm:$0xf]
      %v1253 = vld [vmem:[%s7 + $0x48] sm:$0xf]
      %v1254 = vld [vmem:[%s7 + $0x4c] sm:$0xf]
      %v1255 = vld [vmem:[%s7 + $0x50] sm:$0xf]
      %v1256 = vld [vmem:[%s7 + $0x54] sm:$0xf]
      %v1257 = vld [vmem:[%s7 + $0x58] sm:$0xf]
      %v1258 = vld [vmem:[%s7 + $0x5c] sm:$0xf]
      %v1259 = vld [vmem:[%s7 + $0x60] sm:$0xf]
      %v1260 = vld [vmem:[%s7 + $0x64] sm:$0xf]
      %v1261 = vld [vmem:[%s7 + $0x68] sm:$0xf]
      %v1262 = vld [vmem:[%s7 + $0x6c] sm:$0xf]
      %v1263 = vld [vmem:[%s7 + $0x70] sm:$0xf]
      %v1264 = vld [vmem:[%s7 + $0x74] sm:$0xf]
      %v1265 = vld [vmem:[%s7 + $0x78] sm:$0xf]
      %v1266 = vld [vmem:[%s7 + $0x7c] sm:$0xf]
      %v1299 = vunpack.c.l.b16 %v1235
      %v1300 = vunpack.c.l.b16 %v1236
      %v1301 = vunpack.c.l.b16 %v1237
      %v1302 = vunpack.c.l.b16 %v1238
      %v1303 = vunpack.c.l.b16 %v1239
      %v1304 = vunpack.c.l.b16 %v1240
      %v1305 = vunpack.c.l.b16 %v1241
      %v1306 = vunpack.c.l.b16 %v1242
      %v1307 = vunpack.c.l.b16 %v1243
      %v1308 = vunpack.c.l.b16 %v1244
      %v1309 = vunpack.c.l.b16 %v1245
      %v1310 = vunpack.c.l.b16 %v1246
      %v1311 = vunpack.c.l.b16 %v1247
      %v1312 = vunpack.c.l.b16 %v1248
      %v1313 = vunpack.c.l.b16 %v1249
      %v1314 = vunpack.c.l.b16 %v1250
      %v1315 = vunpack.c.l.b16 %v1251
      %v1316 = vunpack.c.l.b16 %v1252
      %v1317 = vunpack.c.l.b16 %v1253
      %v1318 = vunpack.c.l.b16 %v1254
      %v1319 = vunpack.c.l.b16 %v1255
      %v1320 = vunpack.c.l.b16 %v1256
      %v1321 = vunpack.c.l.b16 %v1257
      %v1322 = vunpack.c.l.b16 %v1258
      %v1323 = vunpack.c.l.b16 %v1259
      %v1324 = vunpack.c.l.b16 %v1260
      %v1325 = vunpack.c.l.b16 %v1261
      %v1326 = vunpack.c.l.b16 %v1262
      %v1327 = vunpack.c.l.b16 %v1263
      %v1328 = vunpack.c.l.b16 %v1264
      %v1329 = vunpack.c.l.b16 %v1265
      %v1330 = vunpack.c.l.b16 %v1266
      %v1331 = vpack.c.b16 %v1300, %v1299
      %v1332 = vpack.c.b16 %v1302, %v1301
      %v1333 = vpack.c.b16 %v1304, %v1303
      %v1334 = vpack.c.b16 %v1306, %v1305
      %v1335 = vpack.c.b16 %v1308, %v1307
      %v1336 = vpack.c.b16 %v1310, %v1309
      %v1337 = vpack.c.b16 %v1312, %v1311
      %v1338 = vpack.c.b16 %v1314, %v1313
      %v1339 = vpack.c.b16 %v1316, %v1315
      %v1340 = vpack.c.b16 %v1318, %v1317
      %v1341 = vpack.c.b16 %v1320, %v1319
      %v1342 = vpack.c.b16 %v1322, %v1321
      %v1343 = vpack.c.b16 %v1324, %v1323
      %v1344 = vpack.c.b16 %v1326, %v1325
      %v1345 = vpack.c.b16 %v1328, %v1327
      %v1346 = vpack.c.b16 %v1330, %v1329
      %1363 = vmatprep.subr.bf16.mxu0 0
      %1364 = vmatpush1.bf16.msra.mxu0 %v1227
      %1365 = vmatprep.subr.bf16.mxu0 0
      %1366 = vmatpush1.bf16.msra.mxu0 %v1228
      %1367 = vmatprep.subr.bf16.mxu0 0
      %1368 = vmatpush1.bf16.msra.mxu0 %v1229
      %1369 = vmatprep.subr.bf16.mxu0 0
      %1370 = vmatpush1.bf16.msra.mxu0 %v1230
      %1371 = vmatprep.subr.bf16.mxu0 0
      %1372 = vmatpush1.bf16.msra.mxu0 %v1231
      %1373 = vmatprep.subr.bf16.mxu0 0
      %1374 = vmatpush1.bf16.msra.mxu0 %v1232
      %1375 = vmatprep.subr.bf16.mxu0 0
      %1376 = vmatpush1.bf16.msra.mxu0 %v1233
      %1377 = vmatprep.subr.bf16.mxu0 0
      %1378 = vmatpush1.bf16.msra.mxu0 %v1234
      %1379 = vmatprep.subr.bf16.mxu0 0
      %1380 = vmatpush1.bf16.msra.mxu0 0
      %1381 = vmatprep.subr.bf16.mxu0 0
      %1382 = vmatpush1.bf16.msra.mxu0 0
      %1383 = vmatprep.subr.bf16.mxu0 0
      %1384 = vmatpush1.bf16.msra.mxu0 0
      %1385 = vmatprep.subr.bf16.mxu0 0
      %1386 = vmatpush1.bf16.msra.mxu0 0
      %1387 = vmatprep.subr.bf16.mxu0 0
      %1388 = vmatpush1.bf16.msra.mxu0 0
      %1389 = vmatprep.subr.bf16.mxu0 0
      %1390 = vmatpush1.bf16.msra.mxu0 0
      %1391 = vmatprep.subr.bf16.mxu0 0
      %1392 = vmatpush1.bf16.msra.mxu0 0
      %1393 = vmatprep.subr.bf16.mxu0 0
      %1394 = vmatpush1.bf16.msra.mxu0 0
      %1395 = vmatprep.mubr.bf16.mxu0 0
      %1396 = vmatmul.mubr.bf16.gmra.mrb[0].mxu0 %v1331
      %v1397 = vpop.f32.mrb[0].mxu0
      %v1398 = vadd.f32 0.0, %v1397
      %v1399 = vpop.f32.mrb[0].mxu0
      %v1400 = vpop.f32.mrb[0].mxu0
      %v1401 = vadd.f32 0.0, %v1400
      %v1402 = vpop.f32.mrb[0].mxu0
      %1403 = vmatprep.mubr.bf16.mxu0 0
      %1404 = vmatmul.mubr.bf16.gmra.mrb[0].mxu0 %v1332
      %v1405 = vpop.f32.mrb[0].mxu0
      %v1406 = vadd.f32 0.0, %v1405
      %v1407 = vpop.f32.mrb[0].mxu0
      %v1408 = vpop.f32.mrb[0].mxu0
      %v1409 = vadd.f32 0.0, %v1408
      %v1410 = vpop.f32.mrb[0].mxu0
      %1411 = vmatprep.mubr.bf16.mxu0 0
      %1412 = vmatmul.mubr.bf16.gmra.mrb[0].mxu0 %v1333
      %v1413 = vpop.f32.mrb[0].mxu0
      %v1414 = vadd.f32 0.0, %v1413
      %v1415 = vpop.f32.mrb[0].mxu0
      %v1416 = vpop.f32.mrb[0].mxu0
      %v1417 = vadd.f32 0.0, %v1416
      %v1418 = vpop.f32.mrb[0].mxu0
      %1419 = vmatprep.mubr.bf16.mxu0 0
      %1420 = vmatmul.mubr.bf16.gmra.mrb[0].mxu0 %v1334
      %v1421 = vpop.f32.mrb[0].mxu0
      %v1422 = vadd.f32 0.0, %v1421
      %v1423 = vpop.f32.mrb[0].mxu0
      %v1424 = vpop.f32.mrb[0].mxu0
      %v1425 = vadd.f32 0.0, %v1424
      %v1426 = vpop.f32.mrb[0].mxu0
      %1427 = vmatprep.mubr.bf16.mxu0 0
      %1428 = vmatmul.mubr.bf16.gmra.mrb[0].mxu0 %v1335
      %v1429 = vpop.f32.mrb[0].mxu0
      %v1430 = vadd.f32 0.0, %v1429
      %v1431 = vpop.f32.mrb[0].mxu0
      %v1432 = vpop.f32.mrb[0].mxu0
      %v1433 = vadd.f32 0.0, %v1432
      %v1434 = vpop.f32.mrb[0].mxu0
      %1435 = vmatprep.mubr.bf16.mxu0 0
      %1436 = vmatmul.mubr.bf16.gmra.mrb[0].mxu0 %v1336
      %v1437 = vpop.f32.mrb[0].mxu0
      %v1438 = vadd.f32 0.0, %v1437
      %v1439 = vpop.f32.mrb[0].mxu0
      %v1440 = vpop.f32.mrb[0].mxu0
      %v1441 = vadd.f32 0.0, %v1440
      %v1442 = vpop.f32.mrb[0].mxu0
      %1443 = vmatprep.mubr.bf16.mxu0 0
      %1444 = vmatmul.mubr.bf16.gmra.mrb[0].mxu0 %v1337
      %v1445 = vpop.f32.mrb[0].mxu0
      %v1446 = vadd.f32 0.0, %v1445
      %v1447 = vpop.f32.mrb[0].mxu0
      %v1448 = vpop.f32.mrb[0].mxu0
      %v1449 = vadd.f32 0.0, %v1448
      %v1450 = vpop.f32.mrb[0].mxu0
      %1451 = vmatprep.mubr.bf16.mxu0 0
      %1452 = vmatmul.mubr.bf16.gmra.mrb[0].mxu0 %v1338
      %v1453 = vpop.f32.mrb[0].mxu0
      %v1454 = vadd.f32 0.0, %v1453
      %v1455 = vpop.f32.mrb[0].mxu0
      %v1456 = vpop.f32.mrb[0].mxu0
      %v1457 = vadd.f32 0.0, %v1456
      %v1458 = vpop.f32.mrb[0].mxu0
      %1459 = vmatprep.mubr.bf16.mxu0 0
      %1460 = vmatmul.mubr.bf16.gmra.mrb[0].mxu0 %v1339
      %v1461 = vpop.f32.mrb[0].mxu0
      %v1462 = vadd.f32 0.0, %v1461
      %v1463 = vpop.f32.mrb[0].mxu0
      %v1464 = vpop.f32.mrb[0].mxu0
      %v1465 = vadd.f32 0.0, %v1464
      %v1466 = vpop.f32.mrb[0].mxu0
      %1467 = vmatprep.mubr.bf16.mxu0 0
      %1468 = vmatmul.mubr.bf16.gmra.mrb[0].mxu0 %v1340
      %v1469 = vpop.f32.mrb[0].mxu0
      %v1470 = vadd.f32 0.0, %v1469
      %v1471 = vpop.f32.mrb[0].mxu0
      %v1472 = vpop.f32.mrb[0].mxu0
      %v1473 = vadd.f32 0.0, %v1472
      %v1474 = vpop.f32.mrb[0].mxu0
      %1475 = vmatprep.mubr.bf16.mxu0 0
      %1476 = vmatmul.mubr.bf16.gmra.mrb[0].mxu0 %v1341
      %v1477 = vpop.f32.mrb[0].mxu0
      %v1478 = vadd.f32 0.0, %v1477
      %v1479 = vpop.f32.mrb[0].mxu0
      %v1480 = vpop.f32.mrb[0].mxu0
      %v1481 = vadd.f32 0.0, %v1480
      %v1482 = vpop.f32.mrb[0].mxu0
      %1483 = vmatprep.mubr.bf16.mxu0 0
      %1484 = vmatmul.mubr.bf16.gmra.mrb[0].mxu0 %v1342
      %v1485 = vpop.f32.mrb[0].mxu0
      %v1486 = vadd.f32 0.0, %v1485
      %v1487 = vpop.f32.mrb[0].mxu0
      %v1488 = vpop.f32.mrb[0].mxu0
      %v1489 = vadd.f32 0.0, %v1488
      %v1490 = vpop.f32.mrb[0].mxu0
      %1491 = vmatprep.mubr.bf16.mxu0 0
      %1492 = vmatmul.mubr.bf16.gmra.mrb[0].mxu0 %v1343
      %v1493 = vpop.f32.mrb[0].mxu0
      %v1494 = vadd.f32 0.0, %v1493
      %v1495 = vpop.f32.mrb[0].mxu0
      %v1496 = vpop.f32.mrb[0].mxu0
      %v1497 = vadd.f32 0.0, %v1496
      %v1498 = vpop.f32.mrb[0].mxu0
      %1499 = vmatprep.mubr.bf16.mxu0 0
      %1500 = vmatmul.mubr.bf16.gmra.mrb[0].mxu0 %v1344
      %v1501 = vpop.f32.mrb[0].mxu0
      %v1502 = vadd.f32 0.0, %v1501
      %v1503 = vpop.f32.mrb[0].mxu0
      %v1504 = vpop.f32.mrb[0].mxu0
      %v1505 = vadd.f32 0.0, %v1504
      %v1506 = vpop.f32.mrb[0].mxu0
      %1507 = vmatprep.mubr.bf16.mxu0 0
      %1508 = vmatmul.mubr.bf16.gmra.mrb[0].mxu0 %v1345
      %v1509 = vpop.f32.mrb[0].mxu0
      %v1510 = vadd.f32 0.0, %v1509
      %v1511 = vpop.f32.mrb[0].mxu0
      %v1512 = vpop.f32.mrb[0].mxu0
      %v1513 = vadd.f32 0.0, %v1512
      %v1514 = vpop.f32.mrb[0].mxu0
      %1515 = vmatprep.mubr.bf16.mxu0 0
      %1516 = vmatmul.mubr.bf16.gmra.mrb[0].mxu0 %v1346
      %v1517 = vpop.f32.mrb[0].mxu0
      %v1518 = vadd.f32 0.0, %v1517
      %v1519 = vpop.f32.mrb[0].mxu0
      %v1520 = vpop.f32.mrb[0].mxu0
      %v1521 = vadd.f32 0.0, %v1520
      %v1522 = vpop.f32.mrb[0].mxu0
      %1523 = vdwg.mxu0
      %v1524 = vld [vmem:[%s8] sm:$0xff]
      %v1525 = vld [vmem:[%s8 + $0x8] sm:$0xff]
      %v1526 = vld [vmem:[%s8 + $0x10] sm:$0xff]
      %v1527 = vld [vmem:[%s8 + $0x18] sm:$0xff]
      %v1528 = vld [vmem:[%s8 + $0x20] sm:$0xff]
      %v1529 = vld [vmem:[%s8 + $0x28] sm:$0xff]
      %v1530 = vld [vmem:[%s8 + $0x30] sm:$0xff]
      %v1531 = vld [vmem:[%s8 + $0x38] sm:$0xff]
      %v1532 = vld [vmem:[%s8 + $0x40] sm:$0xff]
      %v1533 = vld [vmem:[%s8 + $0x48] sm:$0xff]
      %v1534 = vld [vmem:[%s8 + $0x50] sm:$0xff]
      %v1535 = vld [vmem:[%s8 + $0x58] sm:$0xff]
      %v1536 = vld [vmem:[%s8 + $0x60] sm:$0xff]
      %v1537 = vld [vmem:[%s8 + $0x68] sm:$0xff]
      %v1538 = vld [vmem:[%s8 + $0x70] sm:$0xff]
      %v1539 = vld [vmem:[%s8 + $0x78] sm:$0xff]
      %v1540 = vld [vmem:[%s8 + $0x80] sm:$0xff]
      %v1541 = vld [vmem:[%s8 + $0x88] sm:$0xff]
      %v1542 = vld [vmem:[%s8 + $0x90] sm:$0xff]
      %v1543 = vld [vmem:[%s8 + $0x98] sm:$0xff]
      %v1544 = vld [vmem:[%s8 + $0xa0] sm:$0xff]
      %v1545 = vld [vmem:[%s8 + $0xa8] sm:$0xff]
      %v1546 = vld [vmem:[%s8 + $0xb0] sm:$0xff]
      %v1547 = vld [vmem:[%s8 + $0xb8] sm:$0xff]
      %v1548 = vld [vmem:[%s8 + $0xc0] sm:$0xff]
      %v1549 = vld [vmem:[%s8 + $0xc8] sm:$0xff]
      %v1550 = vld [vmem:[%s8 + $0xd0] sm:$0xff]
      %v1551 = vld [vmem:[%s8 + $0xd8] sm:$0xff]
      %v1552 = vld [vmem:[%s8 + $0xe0] sm:$0xff]
      %v1553 = vld [vmem:[%s8 + $0xe8] sm:$0xff]
      %v1554 = vld [vmem:[%s8 + $0xf0] sm:$0xff]
      %v1555 = vld [vmem:[%s8 + $0xf8] sm:$0xff]
      %1557 = vset.pattern.permute.xlu0 0
      %1558 = vperm.xlu0 %1557, %v1524
      %v1559 = vpop.permute.xlu0 %1558
      %1562 = vset.pattern.permute.xlu0 0
      %1563 = vperm.xlu0 %1562, %v1525
      %v1564 = vpop.permute.xlu0 %1563
      %1567 = vset.pattern.permute.xlu0 0
      %1568 = vperm.xlu0 %1567, %v1526
      %v1569 = vpop.permute.xlu0 %1568
      %1572 = vset.pattern.permute.xlu0 0
      %1573 = vperm.xlu0 %1572, %v1527
      %v1574 = vpop.permute.xlu0 %1573
      %1577 = vset.pattern.permute.xlu0 0
      %1578 = vperm.xlu0 %1577, %v1528
      %v1579 = vpop.permute.xlu0 %1578
      %1582 = vset.pattern.permute.xlu0 0
      %1583 = vperm.xlu0 %1582, %v1529
      %v1584 = vpop.permute.xlu0 %1583
      %1587 = vset.pattern.permute.xlu0 0
      %1588 = vperm.xlu0 %1587, %v1530
      %v1589 = vpop.permute.xlu0 %1588
      %1592 = vset.pattern.permute.xlu0 0
      %1593 = vperm.xlu0 %1592, %v1531
      %v1594 = vpop.permute.xlu0 %1593
      %1597 = vset.pattern.permute.xlu0 0
      %1598 = vperm.xlu0 %1597, %v1532
      %v1599 = vpop.permute.xlu0 %1598
      %1602 = vset.pattern.permute.xlu0 0
      %1603 = vperm.xlu0 %1602, %v1533
      %v1604 = vpop.permute.xlu0 %1603
      %1607 = vset.pattern.permute.xlu0 0
      %1608 = vperm.xlu0 %1607, %v1534
      %v1609 = vpop.permute.xlu0 %1608
      %1612 = vset.pattern.permute.xlu0 0
      %1613 = vperm.xlu0 %1612, %v1535
      %v1614 = vpop.permute.xlu0 %1613
      %1617 = vset.pattern.permute.xlu0 0
      %1618 = vperm.xlu0 %1617, %v1536
      %v1619 = vpop.permute.xlu0 %1618
      %1622 = vset.pattern.permute.xlu0 0
      %1623 = vperm.xlu0 %1622, %v1537
      %v1624 = vpop.permute.xlu0 %1623
      %1627 = vset.pattern.permute.xlu0 0
      %1628 = vperm.xlu0 %1627, %v1538
      %v1629 = vpop.permute.xlu0 %1628
      %1632 = vset.pattern.permute.xlu0 0
      %1633 = vperm.xlu0 %1632, %v1539
      %v1634 = vpop.permute.xlu0 %1633
      %1637 = vset.pattern.permute.xlu0 0
      %1638 = vperm.xlu0 %1637, %v1540
      %v1639 = vpop.permute.xlu0 %1638
      %1642 = vset.pattern.permute.xlu0 0
      %1643 = vperm.xlu0 %1642, %v1541
      %v1644 = vpop.permute.xlu0 %1643
      %1647 = vset.pattern.permute.xlu0 0
      %1648 = vperm.xlu0 %1647, %v1542
      %v1649 = vpop.permute.xlu0 %1648
      %1652 = vset.pattern.permute.xlu0 0
      %1653 = vperm.xlu0 %1652, %v1543
      %v1654 = vpop.permute.xlu0 %1653
      %1657 = vset.pattern.permute.xlu0 0
      %1658 = vperm.xlu0 %1657, %v1544
      %v1659 = vpop.permute.xlu0 %1658
      %1662 = vset.pattern.permute.xlu0 0
      %1663 = vperm.xlu0 %1662, %v1545
      %v1664 = vpop.permute.xlu0 %1663
      %1667 = vset.pattern.permute.xlu0 0
      %1668 = vperm.xlu0 %1667, %v1546
      %v1669 = vpop.permute.xlu0 %1668
      %1672 = vset.pattern.permute.xlu0 0
      %1673 = vperm.xlu0 %1672, %v1547
      %v1674 = vpop.permute.xlu0 %1673
      %1677 = vset.pattern.permute.xlu0 0
      %1678 = vperm.xlu0 %1677, %v1548
      %v1679 = vpop.permute.xlu0 %1678
      %1682 = vset.pattern.permute.xlu0 0
      %1683 = vperm.xlu0 %1682, %v1549
      %v1684 = vpop.permute.xlu0 %1683
      %1687 = vset.pattern.permute.xlu0 0
      %1688 = vperm.xlu0 %1687, %v1550
      %v1689 = vpop.permute.xlu0 %1688
      %1692 = vset.pattern.permute.xlu0 0
      %1693 = vperm.xlu0 %1692, %v1551
      %v1694 = vpop.permute.xlu0 %1693
      %1697 = vset.pattern.permute.xlu0 0
      %1698 = vperm.xlu0 %1697, %v1552
      %v1699 = vpop.permute.xlu0 %1698
      %1702 = vset.pattern.permute.xlu0 0
      %1703 = vperm.xlu0 %1702, %v1553
      %v1704 = vpop.permute.xlu0 %1703
      %1707 = vset.pattern.permute.xlu0 0
      %1708 = vperm.xlu0 %1707, %v1554
      %v1709 = vpop.permute.xlu0 %1708
      %1712 = vset.pattern.permute.xlu0 0
      %1713 = vperm.xlu0 %1712, %v1555
      %v1714 = vpop.permute.xlu0 %1713
      %v1716 = vmul.f32 %v1398, %v1559
      %v1717 = vmul.f32 %v1401, %v1564
      %v1718 = vmul.f32 %v1406, %v1569
      %v1719 = vmul.f32 %v1409, %v1574
      %v1720 = vmul.f32 %v1414, %v1579
      %v1721 = vmul.f32 %v1417, %v1584
      %v1722 = vmul.f32 %v1422, %v1589
      %v1723 = vmul.f32 %v1425, %v1594
      %v1724 = vmul.f32 %v1430, %v1599
      %v1725 = vmul.f32 %v1433, %v1604
      %v1726 = vmul.f32 %v1438, %v1609
      %v1727 = vmul.f32 %v1441, %v1614
      %v1728 = vmul.f32 %v1446, %v1619
      %v1729 = vmul.f32 %v1449, %v1624
      %v1730 = vmul.f32 %v1454, %v1629
      %v1731 = vmul.f32 %v1457, %v1634
      %v1732 = vmul.f32 %v1462, %v1639
      %v1733 = vmul.f32 %v1465, %v1644
      %v1734 = vmul.f32 %v1470, %v1649
      %v1735 = vmul.f32 %v1473, %v1654
      %v1736 = vmul.f32 %v1478, %v1659
      %v1737 = vmul.f32 %v1481, %v1664
      %v1738 = vmul.f32 %v1486, %v1669
      %v1739 = vmul.f32 %v1489, %v1674
      %v1740 = vmul.f32 %v1494, %v1679
      %v1741 = vmul.f32 %v1497, %v1684
      %v1742 = vmul.f32 %v1502, %v1689
      %v1743 = vmul.f32 %v1505, %v1694
      %v1744 = vmul.f32 %v1510, %v1699
      %v1745 = vmul.f32 %v1513, %v1704
      %v1746 = vmul.f32 %v1518, %v1709
      %v1747 = vmul.f32 %v1521, %v1714
      %v1748 = vld [vmem:[%s9] sm:$0xff]
      %v1749 = vld [vmem:[%s9 + $0x8] sm:$0xff]
      %v1750 = vld [vmem:[%s9 + $0x10] sm:$0xff]
      %v1751 = vld [vmem:[%s9 + $0x18] sm:$0xff]
      %v1752 = vld [vmem:[%s9 + $0x20] sm:$0xff]
      %v1753 = vld [vmem:[%s9 + $0x28] sm:$0xff]
      %v1754 = vld [vmem:[%s9 + $0x30] sm:$0xff]
      %v1755 = vld [vmem:[%s9 + $0x38] sm:$0xff]
      %v1756 = vld [vmem:[%s9 + $0x40] sm:$0xff]
      %v1757 = vld [vmem:[%s9 + $0x48] sm:$0xff]
      %v1758 = vld [vmem:[%s9 + $0x50] sm:$0xff]
      %v1759 = vld [vmem:[%s9 + $0x58] sm:$0xff]
      %v1760 = vld [vmem:[%s9 + $0x60] sm:$0xff]
      %v1761 = vld [vmem:[%s9 + $0x68] sm:$0xff]
      %v1762 = vld [vmem:[%s9 + $0x70] sm:$0xff]
      %v1763 = vld [vmem:[%s9 + $0x78] sm:$0xff]
      %v1764 = vld [vmem:[%s9 + $0x80] sm:$0xff]
      %v1765 = vld [vmem:[%s9 + $0x88] sm:$0xff]
      %v1766 = vld [vmem:[%s9 + $0x90] sm:$0xff]
      %v1767 = vld [vmem:[%s9 + $0x98] sm:$0xff]
      %v1768 = vld [vmem:[%s9 + $0xa0] sm:$0xff]
      %v1769 = vld [vmem:[%s9 + $0xa8] sm:$0xff]
      %v1770 = vld [vmem:[%s9 + $0xb0] sm:$0xff]
      %v1771 = vld [vmem:[%s9 + $0xb8] sm:$0xff]
      %v1772 = vld [vmem:[%s9 + $0xc0] sm:$0xff]
      %v1773 = vld [vmem:[%s9 + $0xc8] sm:$0xff]
      %v1774 = vld [vmem:[%s9 + $0xd0] sm:$0xff]
      %v1775 = vld [vmem:[%s9 + $0xd8] sm:$0xff]
      %v1776 = vld [vmem:[%s9 + $0xe0] sm:$0xff]
      %v1777 = vld [vmem:[%s9 + $0xe8] sm:$0xff]
      %v1778 = vld [vmem:[%s9 + $0xf0] sm:$0xff]
      %v1779 = vld [vmem:[%s9 + $0xf8] sm:$0xff]
      %1781 = vset.pattern.permute.xlu0 0
      %1782 = vperm.xlu0 %1781, %v1748
      %v1783 = vpop.permute.xlu0 %1782
      %1786 = vset.pattern.permute.xlu0 0
      %1787 = vperm.xlu0 %1786, %v1749
      %v1788 = vpop.permute.xlu0 %1787
      %1791 = vset.pattern.permute.xlu0 0
      %1792 = vperm.xlu0 %1791, %v1750
      %v1793 = vpop.permute.xlu0 %1792
      %1796 = vset.pattern.permute.xlu0 0
      %1797 = vperm.xlu0 %1796, %v1751
      %v1798 = vpop.permute.xlu0 %1797
      %1801 = vset.pattern.permute.xlu0 0
      %1802 = vperm.xlu0 %1801, %v1752
      %v1803 = vpop.permute.xlu0 %1802
      %1806 = vset.pattern.permute.xlu0 0
      %1807 = vperm.xlu0 %1806, %v1753
      %v1808 = vpop.permute.xlu0 %1807
      %1811 = vset.pattern.permute.xlu0 0
      %1812 = vperm.xlu0 %1811, %v1754
      %v1813 = vpop.permute.xlu0 %1812
      %1816 = vset.pattern.permute.xlu0 0
      %1817 = vperm.xlu0 %1816, %v1755
      %v1818 = vpop.permute.xlu0 %1817
      %1821 = vset.pattern.permute.xlu0 0
      %1822 = vperm.xlu0 %1821, %v1756
      %v1823 = vpop.permute.xlu0 %1822
      %1826 = vset.pattern.permute.xlu0 0
      %1827 = vperm.xlu0 %1826, %v1757
      %v1828 = vpop.permute.xlu0 %1827
      %1831 = vset.pattern.permute.xlu0 0
      %1832 = vperm.xlu0 %1831, %v1758
      %v1833 = vpop.permute.xlu0 %1832
      %1836 = vset.pattern.permute.xlu0 0
      %1837 = vperm.xlu0 %1836, %v1759
      %v1838 = vpop.permute.xlu0 %1837
      %1841 = vset.pattern.permute.xlu0 0
      %1842 = vperm.xlu0 %1841, %v1760
      %v1843 = vpop.permute.xlu0 %1842
      %1846 = vset.pattern.permute.xlu0 0
      %1847 = vperm.xlu0 %1846, %v1761
      %v1848 = vpop.permute.xlu0 %1847
      %1851 = vset.pattern.permute.xlu0 0
      %1852 = vperm.xlu0 %1851, %v1762
      %v1853 = vpop.permute.xlu0 %1852
      %1856 = vset.pattern.permute.xlu0 0
      %1857 = vperm.xlu0 %1856, %v1763
      %v1858 = vpop.permute.xlu0 %1857
      %1861 = vset.pattern.permute.xlu0 0
      %1862 = vperm.xlu0 %1861, %v1764
      %v1863 = vpop.permute.xlu0 %1862
      %1866 = vset.pattern.permute.xlu0 0
      %1867 = vperm.xlu0 %1866, %v1765
      %v1868 = vpop.permute.xlu0 %1867
      %1871 = vset.pattern.permute.xlu0 0
      %1872 = vperm.xlu0 %1871, %v1766
      %v1873 = vpop.permute.xlu0 %1872
      %1876 = vset.pattern.permute.xlu0 0
      %1877 = vperm.xlu0 %1876, %v1767
      %v1878 = vpop.permute.xlu0 %1877
      %1881 = vset.pattern.permute.xlu0 0
      %1882 = vperm.xlu0 %1881, %v1768
      %v1883 = vpop.permute.xlu0 %1882
      %1886 = vset.pattern.permute.xlu0 0
      %1887 = vperm.xlu0 %1886, %v1769
      %v1888 = vpop.permute.xlu0 %1887
      %1891 = vset.pattern.permute.xlu0 0
      %1892 = vperm.xlu0 %1891, %v1770
      %v1893 = vpop.permute.xlu0 %1892
      %1896 = vset.pattern.permute.xlu0 0
      %1897 = vperm.xlu0 %1896, %v1771
      %v1898 = vpop.permute.xlu0 %1897
      %1901 = vset.pattern.permute.xlu0 0
      %1902 = vperm.xlu0 %1901, %v1772
      %v1903 = vpop.permute.xlu0 %1902
      %1906 = vset.pattern.permute.xlu0 0
      %1907 = vperm.xlu0 %1906, %v1773
      %v1908 = vpop.permute.xlu0 %1907
      %1911 = vset.pattern.permute.xlu0 0
      %1912 = vperm.xlu0 %1911, %v1774
      %v1913 = vpop.permute.xlu0 %1912
      %1916 = vset.pattern.permute.xlu0 0
      %1917 = vperm.xlu0 %1916, %v1775
      %v1918 = vpop.permute.xlu0 %1917
      %1921 = vset.pattern.permute.xlu0 0
      %1922 = vperm.xlu0 %1921, %v1776
      %v1923 = vpop.permute.xlu0 %1922
      %1926 = vset.pattern.permute.xlu0 0
      %1927 = vperm.xlu0 %1926, %v1777
      %v1928 = vpop.permute.xlu0 %1927
      %1931 = vset.pattern.permute.xlu0 0
      %1932 = vperm.xlu0 %1931, %v1778
      %v1933 = vpop.permute.xlu0 %1932
      %1936 = vset.pattern.permute.xlu0 0
      %1937 = vperm.xlu0 %1936, %v1779
      %v1938 = vpop.permute.xlu0 %1937
      %v1940 = vadd.f32 %v1716, %v1783
      %v1941 = vadd.f32 %v1717, %v1788
      %v1942 = vadd.f32 %v1718, %v1793
      %v1943 = vadd.f32 %v1719, %v1798
      %v1944 = vadd.f32 %v1720, %v1803
      %v1945 = vadd.f32 %v1721, %v1808
      %v1946 = vadd.f32 %v1722, %v1813
      %v1947 = vadd.f32 %v1723, %v1818
      %v1948 = vadd.f32 %v1724, %v1823
      %v1949 = vadd.f32 %v1725, %v1828
      %v1950 = vadd.f32 %v1726, %v1833
      %v1951 = vadd.f32 %v1727, %v1838
      %v1952 = vadd.f32 %v1728, %v1843
      %v1953 = vadd.f32 %v1729, %v1848
      %v1954 = vadd.f32 %v1730, %v1853
      %v1955 = vadd.f32 %v1731, %v1858
      %v1956 = vadd.f32 %v1732, %v1863
      %v1957 = vadd.f32 %v1733, %v1868
      %v1958 = vadd.f32 %v1734, %v1873
      %v1959 = vadd.f32 %v1735, %v1878
      %v1960 = vadd.f32 %v1736, %v1883
      %v1961 = vadd.f32 %v1737, %v1888
      %v1962 = vadd.f32 %v1738, %v1893
      %v1963 = vadd.f32 %v1739, %v1898
      %v1964 = vadd.f32 %v1740, %v1903
      %v1965 = vadd.f32 %v1741, %v1908
      %v1966 = vadd.f32 %v1742, %v1913
      %v1967 = vadd.f32 %v1743, %v1918
      %v1968 = vadd.f32 %v1744, %v1923
      %v1969 = vadd.f32 %v1745, %v1928
      %v1970 = vadd.f32 %v1746, %v1933
      %v1971 = vadd.f32 %v1747, %v1938
      %v1972 = vsel %vm865, %v1940, -inf
      %1973 = vmax.xlane.f32.xlu0 %v1972
      %v1974 = vpop.xlane.xlu0 %1973
      %v1975 = vsel %vm865, %v1941, -inf
      %1976 = vmax.xlane.f32.xlu0 %v1975
      %v1977 = vpop.xlane.xlu0 %1976
      %v1978 = vsel %vm865, %v1942, -inf
      %1979 = vmax.xlane.f32.xlu0 %v1978
      %v1980 = vpop.xlane.xlu0 %1979
      %v1981 = vsel %vm865, %v1943, -inf
      %1982 = vmax.xlane.f32.xlu0 %v1981
      %v1983 = vpop.xlane.xlu0 %1982
      %v1984 = vsel %vm865, %v1944, -inf
      %1985 = vmax.xlane.f32.xlu0 %v1984
      %v1986 = vpop.xlane.xlu0 %1985
      %v1987 = vsel %vm865, %v1945, -inf
      %1988 = vmax.xlane.f32.xlu0 %v1987
      %v1989 = vpop.xlane.xlu0 %1988
      %v1990 = vsel %vm865, %v1946, -inf
      %1991 = vmax.xlane.f32.xlu0 %v1990
      %v1992 = vpop.xlane.xlu0 %1991
      %v1993 = vsel %vm865, %v1947, -inf
      %1994 = vmax.xlane.f32.xlu0 %v1993
      %v1995 = vpop.xlane.xlu0 %1994
      %v1996 = vsel %vm865, %v1948, -inf
      %1997 = vmax.xlane.f32.xlu0 %v1996
      %v1998 = vpop.xlane.xlu0 %1997
      %v1999 = vsel %vm865, %v1949, -inf
      %2000 = vmax.xlane.f32.xlu0 %v1999
      %v2001 = vpop.xlane.xlu0 %2000
      %v2002 = vsel %vm865, %v1950, -inf
      %2003 = vmax.xlane.f32.xlu0 %v2002
      %v2004 = vpop.xlane.xlu0 %2003
      %v2005 = vsel %vm865, %v1951, -inf
      %2006 = vmax.xlane.f32.xlu0 %v2005
      %v2007 = vpop.xlane.xlu0 %2006
      %v2008 = vsel %vm865, %v1952, -inf
      %2009 = vmax.xlane.f32.xlu0 %v2008
      %v2010 = vpop.xlane.xlu0 %2009
      %v2011 = vsel %vm865, %v1953, -inf
      %2012 = vmax.xlane.f32.xlu0 %v2011
      %v2013 = vpop.xlane.xlu0 %2012
      %v2014 = vsel %vm865, %v1954, -inf
      %2015 = vmax.xlane.f32.xlu0 %v2014
      %v2016 = vpop.xlane.xlu0 %2015
      %v2017 = vsel %vm865, %v1955, -inf
      %2018 = vmax.xlane.f32.xlu0 %v2017
      %v2019 = vpop.xlane.xlu0 %2018
      %v2020 = vsel %vm865, %v1956, -inf
      %2021 = vmax.xlane.f32.xlu0 %v2020
      %v2022 = vpop.xlane.xlu0 %2021
      %v2023 = vsel %vm865, %v1957, -inf
      %2024 = vmax.xlane.f32.xlu0 %v2023
      %v2025 = vpop.xlane.xlu0 %2024
      %v2026 = vsel %vm865, %v1958, -inf
      %2027 = vmax.xlane.f32.xlu0 %v2026
      %v2028 = vpop.xlane.xlu0 %2027
      %v2029 = vsel %vm865, %v1959, -inf
      %2030 = vmax.xlane.f32.xlu0 %v2029
      %v2031 = vpop.xlane.xlu0 %2030
      %v2032 = vsel %vm865, %v1960, -inf
      %2033 = vmax.xlane.f32.xlu0 %v2032
      %v2034 = vpop.xlane.xlu0 %2033
      %v2035 = vsel %vm865, %v1961, -inf
      %2036 = vmax.xlane.f32.xlu0 %v2035
      %v2037 = vpop.xlane.xlu0 %2036
      %v2038 = vsel %vm865, %v1962, -inf
      %2039 = vmax.xlane.f32.xlu0 %v2038
      %v2040 = vpop.xlane.xlu0 %2039
      %v2041 = vsel %vm865, %v1963, -inf
      %2042 = vmax.xlane.f32.xlu0 %v2041
      %v2043 = vpop.xlane.xlu0 %2042
      %v2044 = vsel %vm865, %v1964, -inf
      %2045 = vmax.xlane.f32.xlu0 %v2044
      %v2046 = vpop.xlane.xlu0 %2045
      %v2047 = vsel %vm865, %v1965, -inf
      %2048 = vmax.xlane.f32.xlu0 %v2047
      %v2049 = vpop.xlane.xlu0 %2048
      %v2050 = vsel %vm865, %v1966, -inf
      %2051 = vmax.xlane.f32.xlu0 %v2050
      %v2052 = vpop.xlane.xlu0 %2051
      %v2053 = vsel %vm865, %v1967, -inf
      %2054 = vmax.xlane.f32.xlu0 %v2053
      %v2055 = vpop.xlane.xlu0 %2054
      %v2056 = vsel %vm865, %v1968, -inf
      %2057 = vmax.xlane.f32.xlu0 %v2056
      %v2058 = vpop.xlane.xlu0 %2057
      %v2059 = vsel %vm865, %v1969, -inf
      %2060 = vmax.xlane.f32.xlu0 %v2059
      %v2061 = vpop.xlane.xlu0 %2060
      %v2062 = vsel %vm865, %v1970, -inf
      %2063 = vmax.xlane.f32.xlu0 %v2062
      %v2064 = vpop.xlane.xlu0 %2063
      %v2065 = vsel %vm865, %v1971, -inf
      %2066 = vmax.xlane.f32.xlu0 %v2065
      %v2067 = vpop.xlane.xlu0 %2066
      %v2068 = vld [vmem:[%s10] sm:$0xff]
      %v2069 = vld [vmem:[%s10 + $0x8] sm:$0xff]
      %v2070 = vld [vmem:[%s10 + $0x10] sm:$0xff]
      %v2071 = vld [vmem:[%s10 + $0x18] sm:$0xff]
      %v2072 = vld [vmem:[%s10 + $0x20] sm:$0xff]
      %v2073 = vld [vmem:[%s10 + $0x28] sm:$0xff]
      %v2074 = vld [vmem:[%s10 + $0x30] sm:$0xff]
      %v2075 = vld [vmem:[%s10 + $0x38] sm:$0xff]
      %v2076 = vld [vmem:[%s10 + $0x40] sm:$0xff]
      %v2077 = vld [vmem:[%s10 + $0x48] sm:$0xff]
      %v2078 = vld [vmem:[%s10 + $0x50] sm:$0xff]
      %v2079 = vld [vmem:[%s10 + $0x58] sm:$0xff]
      %v2080 = vld [vmem:[%s10 + $0x60] sm:$0xff]
      %v2081 = vld [vmem:[%s10 + $0x68] sm:$0xff]
      %v2082 = vld [vmem:[%s10 + $0x70] sm:$0xff]
      %v2083 = vld [vmem:[%s10 + $0x78] sm:$0xff]
      %v2084 = vld [vmem:[%s10 + $0x80] sm:$0xff]
      %v2085 = vld [vmem:[%s10 + $0x88] sm:$0xff]
      %v2086 = vld [vmem:[%s10 + $0x90] sm:$0xff]
      %v2087 = vld [vmem:[%s10 + $0x98] sm:$0xff]
      %v2088 = vld [vmem:[%s10 + $0xa0] sm:$0xff]
      %v2089 = vld [vmem:[%s10 + $0xa8] sm:$0xff]
      %v2090 = vld [vmem:[%s10 + $0xb0] sm:$0xff]
      %v2091 = vld [vmem:[%s10 + $0xb8] sm:$0xff]
      %v2092 = vld [vmem:[%s10 + $0xc0] sm:$0xff]
      %v2093 = vld [vmem:[%s10 + $0xc8] sm:$0xff]
      %v2094 = vld [vmem:[%s10 + $0xd0] sm:$0xff]
      %v2095 = vld [vmem:[%s10 + $0xd8] sm:$0xff]
      %v2096 = vld [vmem:[%s10 + $0xe0] sm:$0xff]
      %v2097 = vld [vmem:[%s10 + $0xe8] sm:$0xff]
      %v2098 = vld [vmem:[%s10 + $0xf0] sm:$0xff]
      %v2099 = vld [vmem:[%s10 + $0xf8] sm:$0xff]
      %v2100 = vpack.c.bf16 %v1977, %v1974
      %v2101 = vpack.c.bf16 %v1983, %v1980
      %v2102 = vpack.c.bf16 %v1989, %v1986
      %v2103 = vpack.c.bf16 %v1995, %v1992
      %v2104 = vpack.c.bf16 %v2001, %v1998
      %v2105 = vpack.c.bf16 %v2007, %v2004
      %v2106 = vpack.c.bf16 %v2013, %v2010
      %v2107 = vpack.c.bf16 %v2019, %v2016
      %v2108 = vpack.c.bf16 %v2025, %v2022
      %v2109 = vpack.c.bf16 %v2031, %v2028
      %v2110 = vpack.c.bf16 %v2037, %v2034
      %v2111 = vpack.c.bf16 %v2043, %v2040
      %v2112 = vpack.c.bf16 %v2049, %v2046
      %v2113 = vpack.c.bf16 %v2055, %v2052
      %v2114 = vpack.c.bf16 %v2061, %v2058
      %v2115 = vpack.c.bf16 %v2067, %v2064
      %v2148 = vunpack.c.l.b16 %v2068
      %v2149 = vunpack.c.h.b16 %v2068
      %v2150 = vunpack.c.l.b16 %v2069
      %v2151 = vunpack.c.h.b16 %v2069
      %v2152 = vunpack.c.l.b16 %v2070
      %v2153 = vunpack.c.h.b16 %v2070
      %v2154 = vunpack.c.l.b16 %v2071
      %v2155 = vunpack.c.h.b16 %v2071
      %v2156 = vunpack.c.l.b16 %v2072
      %v2157 = vunpack.c.h.b16 %v2072
      %v2158 = vunpack.c.l.b16 %v2073
      %v2159 = vunpack.c.h.b16 %v2073
      %v2160 = vunpack.c.l.b16 %v2074
      %v2161 = vunpack.c.h.b16 %v2074
      %v2162 = vunpack.c.l.b16 %v2075
      %v2163 = vunpack.c.h.b16 %v2075
      %v2164 = vunpack.c.l.b16 %v2076
      %v2165 = vunpack.c.h.b16 %v2076
      %v2166 = vunpack.c.l.b16 %v2077
      %v2167 = vunpack.c.h.b16 %v2077
      %v2168 = vunpack.c.l.b16 %v2078
      %v2169 = vunpack.c.h.b16 %v2078
      %v2170 = vunpack.c.l.b16 %v2079
      %v2171 = vunpack.c.h.b16 %v2079
      %v2172 = vunpack.c.l.b16 %v2080
      %v2173 = vunpack.c.h.b16 %v2080
      %v2174 = vunpack.c.l.b16 %v2081
      %v2175 = vunpack.c.h.b16 %v2081
      %v2176 = vunpack.c.l.b16 %v2082
      %v2177 = vunpack.c.h.b16 %v2082
      %v2178 = vunpack.c.l.b16 %v2083
      %v2179 = vunpack.c.h.b16 %v2083
      %v2180 = vunpack.c.l.b16 %v2084
      %v2181 = vunpack.c.h.b16 %v2084
      %v2182 = vunpack.c.l.b16 %v2085
      %v2183 = vunpack.c.h.b16 %v2085
      %v2184 = vunpack.c.l.b16 %v2086
      %v2185 = vunpack.c.h.b16 %v2086
      %v2186 = vunpack.c.l.b16 %v2087
      %v2187 = vunpack.c.h.b16 %v2087
      %v2188 = vunpack.c.l.b16 %v2088
      %v2189 = vunpack.c.h.b16 %v2088
      %v2190 = vunpack.c.l.b16 %v2089
      %v2191 = vunpack.c.h.b16 %v2089
      %v2192 = vunpack.c.l.b16 %v2090
      %v2193 = vunpack.c.h.b16 %v2090
      %v2194 = vunpack.c.l.b16 %v2091
      %v2195 = vunpack.c.h.b16 %v2091
      %v2196 = vunpack.c.l.b16 %v2092
      %v2197 = vunpack.c.h.b16 %v2092
      %v2198 = vunpack.c.l.b16 %v2093
      %v2199 = vunpack.c.h.b16 %v2093
      %v2200 = vunpack.c.l.b16 %v2094
      %v2201 = vunpack.c.h.b16 %v2094
      %v2202 = vunpack.c.l.b16 %v2095
      %v2203 = vunpack.c.h.b16 %v2095
      %v2204 = vunpack.c.l.b16 %v2096
      %v2205 = vunpack.c.h.b16 %v2096
      %v2206 = vunpack.c.l.b16 %v2097
      %v2207 = vunpack.c.h.b16 %v2097
      %v2208 = vunpack.c.l.b16 %v2098
      %v2209 = vunpack.c.h.b16 %v2098
      %v2210 = vunpack.c.l.b16 %v2099
      %v2211 = vunpack.c.h.b16 %v2099
      %v2212 = vpack.c.b16 %v2150, %v2148
      %v2213 = vpack.c.b16 %v2151, %v2149
      %v2214 = vpack.c.b16 %v2154, %v2152
      %v2215 = vpack.c.b16 %v2155, %v2153
      %v2216 = vpack.c.b16 %v2158, %v2156
      %v2217 = vpack.c.b16 %v2159, %v2157
      %v2218 = vpack.c.b16 %v2162, %v2160
      %v2219 = vpack.c.b16 %v2163, %v2161
      %v2220 = vpack.c.b16 %v2166, %v2164
      %v2221 = vpack.c.b16 %v2167, %v2165
      %v2222 = vpack.c.b16 %v2170, %v2168
      %v2223 = vpack.c.b16 %v2171, %v2169
      %v2224 = vpack.c.b16 %v2174, %v2172
      %v2225 = vpack.c.b16 %v2175, %v2173
      %v2226 = vpack.c.b16 %v2178, %v2176
      %v2227 = vpack.c.b16 %v2179, %v2177
      %v2228 = vpack.c.b16 %v2182, %v2180
      %v2229 = vpack.c.b16 %v2183, %v2181
      %v2230 = vpack.c.b16 %v2186, %v2184
      %v2231 = vpack.c.b16 %v2187, %v2185
      %v2232 = vpack.c.b16 %v2190, %v2188
      %v2233 = vpack.c.b16 %v2191, %v2189
      %v2234 = vpack.c.b16 %v2194, %v2192
      %v2235 = vpack.c.b16 %v2195, %v2193
      %v2236 = vpack.c.b16 %v2198, %v2196
      %v2237 = vpack.c.b16 %v2199, %v2197
      %v2238 = vpack.c.b16 %v2202, %v2200
      %v2239 = vpack.c.b16 %v2203, %v2201
      %v2240 = vpack.c.b16 %v2206, %v2204
      %v2241 = vpack.c.b16 %v2207, %v2205
      %v2242 = vpack.c.b16 %v2210, %v2208
      %v2243 = vpack.c.b16 %v2211, %v2209
      %2276 = vmatprep.subr.bf16.mxu0 0
      %2277 = vmatpush1.bf16.msra.mxu0 %v2100
      %2278 = vmatprep.subr.bf16.mxu0 0
      %2279 = vmatpush1.bf16.msra.mxu0 %v2101
      %2280 = vmatprep.subr.bf16.mxu0 0
      %2281 = vmatpush1.bf16.msra.mxu0 %v2102
      %2282 = vmatprep.subr.bf16.mxu0 0
      %2283 = vmatpush1.bf16.msra.mxu0 %v2103
      %2284 = vmatprep.subr.bf16.mxu0 0
      %2285 = vmatpush1.bf16.msra.mxu0 %v2104
      %2286 = vmatprep.subr.bf16.mxu0 0
      %2287 = vmatpush1.bf16.msra.mxu0 %v2105
      %2288 = vmatprep.subr.bf16.mxu0 0
      %2289 = vmatpush1.bf16.msra.mxu0 %v2106
      %2290 = vmatprep.subr.bf16.mxu0 0
      %2291 = vmatpush1.bf16.msra.mxu0 %v2107
      %2292 = vmatprep.subr.bf16.mxu0 0
      %2293 = vmatpush1.bf16.msra.mxu0 %v2108
      %2294 = vmatprep.subr.bf16.mxu0 0
      %2295 = vmatpush1.bf16.msra.mxu0 %v2109
      %2296 = vmatprep.subr.bf16.mxu0 0
      %2297 = vmatpush1.bf16.msra.mxu0 %v2110
      %2298 = vmatprep.subr.bf16.mxu0 0
      %2299 = vmatpush1.bf16.msra.mxu0 %v2111
      %2300 = vmatprep.subr.bf16.mxu0 0
      %2301 = vmatpush1.bf16.msra.mxu0 %v2112
      %2302 = vmatprep.subr.bf16.mxu0 0
      %2303 = vmatpush1.bf16.msra.mxu0 %v2113
      %2304 = vmatprep.subr.bf16.mxu0 0
      %2305 = vmatpush1.bf16.msra.mxu0 %v2114
      %2306 = vmatprep.subr.bf16.mxu0 0
      %2307 = vmatpush1.bf16.msra.mxu0 %v2115
      %2308 = vmatprep.mubr.bf16.mxu0 %v2213
      %2309 = vmatmul.mubr.bf16.gmra.mrb[0].mxu0 %v2212
      %v2310 = vpop.f32.mrb[0].mxu0
      %v2311 = vadd.f32 0.0, %v2310
      %v2312 = vpop.f32.mrb[0].mxu0
      %v2313 = vpop.f32.mrb[0].mxu0
      %v2314 = vadd.f32 0.0, %v2313
      %v2315 = vpop.f32.mrb[0].mxu0
      %2316 = vmatprep.mubr.bf16.mxu0 %v2215
      %2317 = vmatmul.mubr.bf16.gmra.mrb[0].mxu0 %v2214
      %v2318 = vpop.f32.mrb[0].mxu0
      %v2319 = vadd.f32 0.0, %v2318
      %v2320 = vpop.f32.mrb[0].mxu0
      %v2321 = vpop.f32.mrb[0].mxu0
      %v2322 = vadd.f32 0.0, %v2321
      %v2323 = vpop.f32.mrb[0].mxu0
      %2324 = vmatprep.mubr.bf16.mxu0 %v2217
      %2325 = vmatmul.mubr.bf16.gmra.mrb[0].mxu0 %v2216
      %v2326 = vpop.f32.mrb[0].mxu0
      %v2327 = vadd.f32 0.0, %v2326
      %v2328 = vpop.f32.mrb[0].mxu0
      %v2329 = vpop.f32.mrb[0].mxu0
      %v2330 = vadd.f32 0.0, %v2329
      %v2331 = vpop.f32.mrb[0].mxu0
      %2332 = vmatprep.mubr.bf16.mxu0 %v2219
      %2333 = vmatmul.mubr.bf16.gmra.mrb[0].mxu0 %v2218
      %v2334 = vpop.f32.mrb[0].mxu0
      %v2335 = vadd.f32 0.0, %v2334
      %v2336 = vpop.f32.mrb[0].mxu0
      %v2337 = vpop.f32.mrb[0].mxu0
      %v2338 = vadd.f32 0.0, %v2337
      %v2339 = vpop.f32.mrb[0].mxu0
      %2340 = vmatprep.mubr.bf16.mxu0 %v2221
      %2341 = vmatmul.mubr.bf16.gmra.mrb[0].mxu0 %v2220
      %v2342 = vpop.f32.mrb[0].mxu0
      %v2343 = vadd.f32 0.0, %v2342
      %v2344 = vpop.f32.mrb[0].mxu0
      %v2345 = vpop.f32.mrb[0].mxu0
      %v2346 = vadd.f32 0.0, %v2345
      %v2347 = vpop.f32.mrb[0].mxu0
      %2348 = vmatprep.mubr.bf16.mxu0 %v2223
      %2349 = vmatmul.mubr.bf16.gmra.mrb[0].mxu0 %v2222
      %v2350 = vpop.f32.mrb[0].mxu0
      %v2351 = vadd.f32 0.0, %v2350
      %v2352 = vpop.f32.mrb[0].mxu0
      %v2353 = vpop.f32.mrb[0].mxu0
      %v2354 = vadd.f32 0.0, %v2353
      %v2355 = vpop.f32.mrb[0].mxu0
      %2356 = vmatprep.mubr.bf16.mxu0 %v2225
      %2357 = vmatmul.mubr.bf16.gmra.mrb[0].mxu0 %v2224
      %v2358 = vpop.f32.mrb[0].mxu0
      %v2359 = vadd.f32 0.0, %v2358
      %v2360 = vpop.f32.mrb[0].mxu0
      %v2361 = vpop.f32.mrb[0].mxu0
      %v2362 = vadd.f32 0.0, %v2361
      %v2363 = vpop.f32.mrb[0].mxu0
      %2364 = vmatprep.mubr.bf16.mxu0 %v2227
      %2365 = vmatmul.mubr.bf16.gmra.mrb[0].mxu0 %v2226
      %v2366 = vpop.f32.mrb[0].mxu0
      %v2367 = vadd.f32 0.0, %v2366
      %v2368 = vpop.f32.mrb[0].mxu0
      %v2369 = vpop.f32.mrb[0].mxu0
      %v2370 = vadd.f32 0.0, %v2369
      %v2371 = vpop.f32.mrb[0].mxu0
      %2372 = vmatprep.mubr.bf16.mxu0 %v2229
      %2373 = vmatmul.mubr.bf16.gmra.mrb[0].mxu0 %v2228
      %v2374 = vpop.f32.mrb[0].mxu0
      %v2375 = vadd.f32 0.0, %v2374
      %v2376 = vpop.f32.mrb[0].mxu0
      %v2377 = vpop.f32.mrb[0].mxu0
      %v2378 = vadd.f32 0.0, %v2377
      %v2379 = vpop.f32.mrb[0].mxu0
      %2380 = vmatprep.mubr.bf16.mxu0 %v2231
      %2381 = vmatmul.mubr.bf16.gmra.mrb[0].mxu0 %v2230
      %v2382 = vpop.f32.mrb[0].mxu0
      %v2383 = vadd.f32 0.0, %v2382
      %v2384 = vpop.f32.mrb[0].mxu0
      %v2385 = vpop.f32.mrb[0].mxu0
      %v2386 = vadd.f32 0.0, %v2385
      %v2387 = vpop.f32.mrb[0].mxu0
      %2388 = vmatprep.mubr.bf16.mxu0 %v2233
      %2389 = vmatmul.mubr.bf16.gmra.mrb[0].mxu0 %v2232
      %v2390 = vpop.f32.mrb[0].mxu0
      %v2391 = vadd.f32 0.0, %v2390
      %v2392 = vpop.f32.mrb[0].mxu0
      %v2393 = vpop.f32.mrb[0].mxu0
      %v2394 = vadd.f32 0.0, %v2393
      %v2395 = vpop.f32.mrb[0].mxu0
      %2396 = vmatprep.mubr.bf16.mxu0 %v2235
      %2397 = vmatmul.mubr.bf16.gmra.mrb[0].mxu0 %v2234
      %v2398 = vpop.f32.mrb[0].mxu0
      %v2399 = vadd.f32 0.0, %v2398
      %v2400 = vpop.f32.mrb[0].mxu0
      %v2401 = vpop.f32.mrb[0].mxu0
      %v2402 = vadd.f32 0.0, %v2401
      %v2403 = vpop.f32.mrb[0].mxu0
      %2404 = vmatprep.mubr.bf16.mxu0 %v2237
      %2405 = vmatmul.mubr.bf16.gmra.mrb[0].mxu0 %v2236
      %v2406 = vpop.f32.mrb[0].mxu0
      %v2407 = vadd.f32 0.0, %v2406
      %v2408 = vpop.f32.mrb[0].mxu0
      %v2409 = vpop.f32.mrb[0].mxu0
      %v2410 = vadd.f32 0.0, %v2409
      %v2411 = vpop.f32.mrb[0].mxu0
      %2412 = vmatprep.mubr.bf16.mxu0 %v2239
      %2413 = vmatmul.mubr.bf16.gmra.mrb[0].mxu0 %v2238
      %v2414 = vpop.f32.mrb[0].mxu0
      %v2415 = vadd.f32 0.0, %v2414
      %v2416 = vpop.f32.mrb[0].mxu0
      %v2417 = vpop.f32.mrb[0].mxu0
      %v2418 = vadd.f32 0.0, %v2417
      %v2419 = vpop.f32.mrb[0].mxu0
      %2420 = vmatprep.mubr.bf16.mxu0 %v2241
      %2421 = vmatmul.mubr.bf16.gmra.mrb[0].mxu0 %v2240
      %v2422 = vpop.f32.mrb[0].mxu0
      %v2423 = vadd.f32 0.0, %v2422
      %v2424 = vpop.f32.mrb[0].mxu0
      %v2425 = vpop.f32.mrb[0].mxu0
      %v2426 = vadd.f32 0.0, %v2425
      %v2427 = vpop.f32.mrb[0].mxu0
      %2428 = vmatprep.mubr.bf16.mxu0 %v2243
      %2429 = vmatmul.mubr.bf16.gmra.mrb[0].mxu0 %v2242
      %v2430 = vpop.f32.mrb[0].mxu0
      %v2431 = vadd.f32 0.0, %v2430
      %v2432 = vpop.f32.mrb[0].mxu0
      %v2433 = vpop.f32.mrb[0].mxu0
      %v2434 = vadd.f32 0.0, %v2433
      %v2435 = vpop.f32.mrb[0].mxu0
      %2436 = vdwg.mxu0
      %v2437 = vld [vmem:[%s11] sm:$0xff]
      %v2438 = vld [vmem:[%s11 + $0x8] sm:$0xff]
      %v2439 = vld [vmem:[%s11 + $0x10] sm:$0xff]
      %v2440 = vld [vmem:[%s11 + $0x18] sm:$0xff]
      %v2441 = vld [vmem:[%s11 + $0x20] sm:$0xff]
      %v2442 = vld [vmem:[%s11 + $0x28] sm:$0xff]
      %v2443 = vld [vmem:[%s11 + $0x30] sm:$0xff]
      %v2444 = vld [vmem:[%s11 + $0x38] sm:$0xff]
      %v2445 = vld [vmem:[%s11 + $0x40] sm:$0xff]
      %v2446 = vld [vmem:[%s11 + $0x48] sm:$0xff]
      %v2447 = vld [vmem:[%s11 + $0x50] sm:$0xff]
      %v2448 = vld [vmem:[%s11 + $0x58] sm:$0xff]
      %v2449 = vld [vmem:[%s11 + $0x60] sm:$0xff]
      %v2450 = vld [vmem:[%s11 + $0x68] sm:$0xff]
      %v2451 = vld [vmem:[%s11 + $0x70] sm:$0xff]
      %v2452 = vld [vmem:[%s11 + $0x78] sm:$0xff]
      %v2453 = vld [vmem:[%s11 + $0x80] sm:$0xff]
      %v2454 = vld [vmem:[%s11 + $0x88] sm:$0xff]
      %v2455 = vld [vmem:[%s11 + $0x90] sm:$0xff]
      %v2456 = vld [vmem:[%s11 + $0x98] sm:$0xff]
      %v2457 = vld [vmem:[%s11 + $0xa0] sm:$0xff]
      %v2458 = vld [vmem:[%s11 + $0xa8] sm:$0xff]
      %v2459 = vld [vmem:[%s11 + $0xb0] sm:$0xff]
      %v2460 = vld [vmem:[%s11 + $0xb8] sm:$0xff]
      %v2461 = vld [vmem:[%s11 + $0xc0] sm:$0xff]
      %v2462 = vld [vmem:[%s11 + $0xc8] sm:$0xff]
      %v2463 = vld [vmem:[%s11 + $0xd0] sm:$0xff]
      %v2464 = vld [vmem:[%s11 + $0xd8] sm:$0xff]
      %v2465 = vld [vmem:[%s11 + $0xe0] sm:$0xff]
      %v2466 = vld [vmem:[%s11 + $0xe8] sm:$0xff]
      %v2467 = vld [vmem:[%s11 + $0xf0] sm:$0xff]
      %v2468 = vld [vmem:[%s11 + $0xf8] sm:$0xff]
      %v2469 = vmul.f32 %v2311, %v2437
      %v2470 = vmul.f32 %v2314, %v2438
      %v2471 = vmul.f32 %v2319, %v2439
      %v2472 = vmul.f32 %v2322, %v2440
      %v2473 = vmul.f32 %v2327, %v2441
      %v2474 = vmul.f32 %v2330, %v2442
      %v2475 = vmul.f32 %v2335, %v2443
      %v2476 = vmul.f32 %v2338, %v2444
      %v2477 = vmul.f32 %v2343, %v2445
      %v2478 = vmul.f32 %v2346, %v2446
      %v2479 = vmul.f32 %v2351, %v2447
      %v2480 = vmul.f32 %v2354, %v2448
      %v2481 = vmul.f32 %v2359, %v2449
      %v2482 = vmul.f32 %v2362, %v2450
      %v2483 = vmul.f32 %v2367, %v2451
      %v2484 = vmul.f32 %v2370, %v2452
      %v2485 = vmul.f32 %v2375, %v2453
      %v2486 = vmul.f32 %v2378, %v2454
      %v2487 = vmul.f32 %v2383, %v2455
      %v2488 = vmul.f32 %v2386, %v2456
      %v2489 = vmul.f32 %v2391, %v2457
      %v2490 = vmul.f32 %v2394, %v2458
      %v2491 = vmul.f32 %v2399, %v2459
      %v2492 = vmul.f32 %v2402, %v2460
      %v2493 = vmul.f32 %v2407, %v2461
      %v2494 = vmul.f32 %v2410, %v2462
      %v2495 = vmul.f32 %v2415, %v2463
      %v2496 = vmul.f32 %v2418, %v2464
      %v2497 = vmul.f32 %v2423, %v2465
      %v2498 = vmul.f32 %v2426, %v2466
      %v2499 = vmul.f32 %v2431, %v2467
      %v2500 = vmul.f32 %v2434, %v2468
      %v2501 = vld [vmem:[%s12] sm:$0xff]
      %v2502 = vld [vmem:[%s12 + $0x8] sm:$0xff]
      %v2503 = vld [vmem:[%s12 + $0x10] sm:$0xff]
      %v2504 = vld [vmem:[%s12 + $0x18] sm:$0xff]
      %v2505 = vld [vmem:[%s12 + $0x20] sm:$0xff]
      %v2506 = vld [vmem:[%s12 + $0x28] sm:$0xff]
      %v2507 = vld [vmem:[%s12 + $0x30] sm:$0xff]
      %v2508 = vld [vmem:[%s12 + $0x38] sm:$0xff]
      %v2509 = vld [vmem:[%s12 + $0x40] sm:$0xff]
      %v2510 = vld [vmem:[%s12 + $0x48] sm:$0xff]
      %v2511 = vld [vmem:[%s12 + $0x50] sm:$0xff]
      %v2512 = vld [vmem:[%s12 + $0x58] sm:$0xff]
      %v2513 = vld [vmem:[%s12 + $0x60] sm:$0xff]
      %v2514 = vld [vmem:[%s12 + $0x68] sm:$0xff]
      %v2515 = vld [vmem:[%s12 + $0x70] sm:$0xff]
      %v2516 = vld [vmem:[%s12 + $0x78] sm:$0xff]
      %v2517 = vld [vmem:[%s12 + $0x80] sm:$0xff]
      %v2518 = vld [vmem:[%s12 + $0x88] sm:$0xff]
      %v2519 = vld [vmem:[%s12 + $0x90] sm:$0xff]
      %v2520 = vld [vmem:[%s12 + $0x98] sm:$0xff]
      %v2521 = vld [vmem:[%s12 + $0xa0] sm:$0xff]
      %v2522 = vld [vmem:[%s12 + $0xa8] sm:$0xff]
      %v2523 = vld [vmem:[%s12 + $0xb0] sm:$0xff]
      %v2524 = vld [vmem:[%s12 + $0xb8] sm:$0xff]
      %v2525 = vld [vmem:[%s12 + $0xc0] sm:$0xff]
      %v2526 = vld [vmem:[%s12 + $0xc8] sm:$0xff]
      %v2527 = vld [vmem:[%s12 + $0xd0] sm:$0xff]
      %v2528 = vld [vmem:[%s12 + $0xd8] sm:$0xff]
      %v2529 = vld [vmem:[%s12 + $0xe0] sm:$0xff]
      %v2530 = vld [vmem:[%s12 + $0xe8] sm:$0xff]
      %v2531 = vld [vmem:[%s12 + $0xf0] sm:$0xff]
      %v2532 = vld [vmem:[%s12 + $0xf8] sm:$0xff]
      %v2533 = vadd.f32 %v2469, %v2501
      %v2534 = vadd.f32 %v2470, %v2502
      %v2535 = vadd.f32 %v2471, %v2503
      %v2536 = vadd.f32 %v2472, %v2504
      %v2537 = vadd.f32 %v2473, %v2505
      %v2538 = vadd.f32 %v2474, %v2506
      %v2539 = vadd.f32 %v2475, %v2507
      %v2540 = vadd.f32 %v2476, %v2508
      %v2541 = vadd.f32 %v2477, %v2509
      %v2542 = vadd.f32 %v2478, %v2510
      %v2543 = vadd.f32 %v2479, %v2511
      %v2544 = vadd.f32 %v2480, %v2512
      %v2545 = vadd.f32 %v2481, %v2513
      %v2546 = vadd.f32 %v2482, %v2514
      %v2547 = vadd.f32 %v2483, %v2515
      %v2548 = vadd.f32 %v2484, %v2516
      %v2549 = vadd.f32 %v2485, %v2517
      %v2550 = vadd.f32 %v2486, %v2518
      %v2551 = vadd.f32 %v2487, %v2519
      %v2552 = vadd.f32 %v2488, %v2520
      %v2553 = vadd.f32 %v2489, %v2521
      %v2554 = vadd.f32 %v2490, %v2522
      %v2555 = vadd.f32 %v2491, %v2523
      %v2556 = vadd.f32 %v2492, %v2524
      %v2557 = vadd.f32 %v2493, %v2525
      %v2558 = vadd.f32 %v2494, %v2526
      %v2559 = vadd.f32 %v2495, %v2527
      %v2560 = vadd.f32 %v2496, %v2528
      %v2561 = vadd.f32 %v2497, %v2529
      %v2562 = vadd.f32 %v2498, %v2530
      %v2563 = vadd.f32 %v2499, %v2531
      %v2564 = vadd.f32 %v2500, %v2532
      %v2565 = vmax.f32 %v2533, 0.0
      %v2566 = vmax.f32 %v2534, 0.0
      %v2567 = vmax.f32 %v2535, 0.0
      %v2568 = vmax.f32 %v2536, 0.0
      %v2569 = vmax.f32 %v2537, 0.0
      %v2570 = vmax.f32 %v2538, 0.0
      %v2571 = vmax.f32 %v2539, 0.0
      %v2572 = vmax.f32 %v2540, 0.0
      %v2573 = vmax.f32 %v2541, 0.0
      %v2574 = vmax.f32 %v2542, 0.0
      %v2575 = vmax.f32 %v2543, 0.0
      %v2576 = vmax.f32 %v2544, 0.0
      %v2577 = vmax.f32 %v2545, 0.0
      %v2578 = vmax.f32 %v2546, 0.0
      %v2579 = vmax.f32 %v2547, 0.0
      %v2580 = vmax.f32 %v2548, 0.0
      %v2581 = vmax.f32 %v2549, 0.0
      %v2582 = vmax.f32 %v2550, 0.0
      %v2583 = vmax.f32 %v2551, 0.0
      %v2584 = vmax.f32 %v2552, 0.0
      %v2585 = vmax.f32 %v2553, 0.0
      %v2586 = vmax.f32 %v2554, 0.0
      %v2587 = vmax.f32 %v2555, 0.0
      %v2588 = vmax.f32 %v2556, 0.0
      %v2589 = vmax.f32 %v2557, 0.0
      %v2590 = vmax.f32 %v2558, 0.0
      %v2591 = vmax.f32 %v2559, 0.0
      %v2592 = vmax.f32 %v2560, 0.0
      %v2593 = vmax.f32 %v2561, 0.0
      %v2594 = vmax.f32 %v2562, 0.0
      %v2595 = vmax.f32 %v2563, 0.0
      %v2596 = vmax.f32 %v2564, 0.0
      %v2597 = vld [vmem:[%s13] sm:$0xff]
      %v2598 = vld [vmem:[%s13 + $0x8] sm:$0xff]
      %v2599 = vld [vmem:[%s13 + $0x10] sm:$0xff]
      %v2600 = vld [vmem:[%s13 + $0x18] sm:$0xff]
      %v2601 = vld [vmem:[%s13 + $0x20] sm:$0xff]
      %v2602 = vld [vmem:[%s13 + $0x28] sm:$0xff]
      %v2603 = vld [vmem:[%s13 + $0x30] sm:$0xff]
      %v2604 = vld [vmem:[%s13 + $0x38] sm:$0xff]
      %v2605 = vld [vmem:[%s13 + $0x40] sm:$0xff]
      %v2606 = vld [vmem:[%s13 + $0x48] sm:$0xff]
      %v2607 = vld [vmem:[%s13 + $0x50] sm:$0xff]
      %v2608 = vld [vmem:[%s13 + $0x58] sm:$0xff]
      %v2609 = vld [vmem:[%s13 + $0x60] sm:$0xff]
      %v2610 = vld [vmem:[%s13 + $0x68] sm:$0xff]
      %v2611 = vld [vmem:[%s13 + $0x70] sm:$0xff]
      %v2612 = vld [vmem:[%s13 + $0x78] sm:$0xff]
      %v2613 = vld [vmem:[%s13 + $0x80] sm:$0xff]
      %v2614 = vld [vmem:[%s13 + $0x88] sm:$0xff]
      %v2615 = vld [vmem:[%s13 + $0x90] sm:$0xff]
      %v2616 = vld [vmem:[%s13 + $0x98] sm:$0xff]
      %v2617 = vld [vmem:[%s13 + $0xa0] sm:$0xff]
      %v2618 = vld [vmem:[%s13 + $0xa8] sm:$0xff]
      %v2619 = vld [vmem:[%s13 + $0xb0] sm:$0xff]
      %v2620 = vld [vmem:[%s13 + $0xb8] sm:$0xff]
      %v2621 = vld [vmem:[%s13 + $0xc0] sm:$0xff]
      %v2622 = vld [vmem:[%s13 + $0xc8] sm:$0xff]
      %v2623 = vld [vmem:[%s13 + $0xd0] sm:$0xff]
      %v2624 = vld [vmem:[%s13 + $0xd8] sm:$0xff]
      %v2625 = vld [vmem:[%s13 + $0xe0] sm:$0xff]
      %v2626 = vld [vmem:[%s13 + $0xe8] sm:$0xff]
      %v2627 = vld [vmem:[%s13 + $0xf0] sm:$0xff]
      %v2628 = vld [vmem:[%s13 + $0xf8] sm:$0xff]
      %v2629 = vpack.c.bf16 %v2566, %v2565
      %v2630 = vpack.c.bf16 %v2568, %v2567
      %v2631 = vpack.c.bf16 %v2570, %v2569
      %v2632 = vpack.c.bf16 %v2572, %v2571
      %v2633 = vpack.c.bf16 %v2574, %v2573
      %v2634 = vpack.c.bf16 %v2576, %v2575
      %v2635 = vpack.c.bf16 %v2578, %v2577
      %v2636 = vpack.c.bf16 %v2580, %v2579
      %v2637 = vpack.c.bf16 %v2582, %v2581
      %v2638 = vpack.c.bf16 %v2584, %v2583
      %v2639 = vpack.c.bf16 %v2586, %v2585
      %v2640 = vpack.c.bf16 %v2588, %v2587
      %v2641 = vpack.c.bf16 %v2590, %v2589
      %v2642 = vpack.c.bf16 %v2592, %v2591
      %v2643 = vpack.c.bf16 %v2594, %v2593
      %v2644 = vpack.c.bf16 %v2596, %v2595
      %v2677 = vunpack.c.l.b16 %v2597
      %v2678 = vunpack.c.h.b16 %v2597
      %v2679 = vunpack.c.l.b16 %v2598
      %v2680 = vunpack.c.h.b16 %v2598
      %v2681 = vunpack.c.l.b16 %v2599
      %v2682 = vunpack.c.h.b16 %v2599
      %v2683 = vunpack.c.l.b16 %v2600
      %v2684 = vunpack.c.h.b16 %v2600
      %v2685 = vunpack.c.l.b16 %v2601
      %v2686 = vunpack.c.h.b16 %v2601
      %v2687 = vunpack.c.l.b16 %v2602
      %v2688 = vunpack.c.h.b16 %v2602
      %v2689 = vunpack.c.l.b16 %v2603
      %v2690 = vunpack.c.h.b16 %v2603
      %v2691 = vunpack.c.l.b16 %v2604
      %v2692 = vunpack.c.h.b16 %v2604
      %v2693 = vunpack.c.l.b16 %v2605
      %v2694 = vunpack.c.h.b16 %v2605
      %v2695 = vunpack.c.l.b16 %v2606
      %v2696 = vunpack.c.h.b16 %v2606
      %v2697 = vunpack.c.l.b16 %v2607
      %v2698 = vunpack.c.h.b16 %v2607
      %v2699 = vunpack.c.l.b16 %v2608
      %v2700 = vunpack.c.h.b16 %v2608
      %v2701 = vunpack.c.l.b16 %v2609
      %v2702 = vunpack.c.h.b16 %v2609
      %v2703 = vunpack.c.l.b16 %v2610
      %v2704 = vunpack.c.h.b16 %v2610
      %v2705 = vunpack.c.l.b16 %v2611
      %v2706 = vunpack.c.h.b16 %v2611
      %v2707 = vunpack.c.l.b16 %v2612
      %v2708 = vunpack.c.h.b16 %v2612
      %v2709 = vunpack.c.l.b16 %v2613
      %v2710 = vunpack.c.h.b16 %v2613
      %v2711 = vunpack.c.l.b16 %v2614
      %v2712 = vunpack.c.h.b16 %v2614
      %v2713 = vunpack.c.l.b16 %v2615
      %v2714 = vunpack.c.h.b16 %v2615
      %v2715 = vunpack.c.l.b16 %v2616
      %v2716 = vunpack.c.h.b16 %v2616
      %v2717 = vunpack.c.l.b16 %v2617
      %v2718 = vunpack.c.h.b16 %v2617
      %v2719 = vunpack.c.l.b16 %v2618
      %v2720 = vunpack.c.h.b16 %v2618
      %v2721 = vunpack.c.l.b16 %v2619
      %v2722 = vunpack.c.h.b16 %v2619
      %v2723 = vunpack.c.l.b16 %v2620
      %v2724 = vunpack.c.h.b16 %v2620
      %v2725 = vunpack.c.l.b16 %v2621
      %v2726 = vunpack.c.h.b16 %v2621
      %v2727 = vunpack.c.l.b16 %v2622
      %v2728 = vunpack.c.h.b16 %v2622
      %v2729 = vunpack.c.l.b16 %v2623
      %v2730 = vunpack.c.h.b16 %v2623
      %v2731 = vunpack.c.l.b16 %v2624
      %v2732 = vunpack.c.h.b16 %v2624
      %v2733 = vunpack.c.l.b16 %v2625
      %v2734 = vunpack.c.h.b16 %v2625
      %v2735 = vunpack.c.l.b16 %v2626
      %v2736 = vunpack.c.h.b16 %v2626
      %v2737 = vunpack.c.l.b16 %v2627
      %v2738 = vunpack.c.h.b16 %v2627
      %v2739 = vunpack.c.l.b16 %v2628
      %v2740 = vunpack.c.h.b16 %v2628
      %v2741 = vpack.c.b16 %v2679, %v2677
      %v2742 = vpack.c.b16 %v2680, %v2678
      %v2743 = vpack.c.b16 %v2683, %v2681
      %v2744 = vpack.c.b16 %v2684, %v2682
      %v2745 = vpack.c.b16 %v2687, %v2685
      %v2746 = vpack.c.b16 %v2688, %v2686
      %v2747 = vpack.c.b16 %v2691, %v2689
      %v2748 = vpack.c.b16 %v2692, %v2690
      %v2749 = vpack.c.b16 %v2695, %v2693
      %v2750 = vpack.c.b16 %v2696, %v2694
      %v2751 = vpack.c.b16 %v2699, %v2697
      %v2752 = vpack.c.b16 %v2700, %v2698
      %v2753 = vpack.c.b16 %v2703, %v2701
      %v2754 = vpack.c.b16 %v2704, %v2702
      %v2755 = vpack.c.b16 %v2707, %v2705
      %v2756 = vpack.c.b16 %v2708, %v2706
      %v2757 = vpack.c.b16 %v2711, %v2709
      %v2758 = vpack.c.b16 %v2712, %v2710
      %v2759 = vpack.c.b16 %v2715, %v2713
      %v2760 = vpack.c.b16 %v2716, %v2714
      %v2761 = vpack.c.b16 %v2719, %v2717
      %v2762 = vpack.c.b16 %v2720, %v2718
      %v2763 = vpack.c.b16 %v2723, %v2721
      %v2764 = vpack.c.b16 %v2724, %v2722
      %v2765 = vpack.c.b16 %v2727, %v2725
      %v2766 = vpack.c.b16 %v2728, %v2726
      %v2767 = vpack.c.b16 %v2731, %v2729
      %v2768 = vpack.c.b16 %v2732, %v2730
      %v2769 = vpack.c.b16 %v2735, %v2733
      %v2770 = vpack.c.b16 %v2736, %v2734
      %v2771 = vpack.c.b16 %v2739, %v2737
      %v2772 = vpack.c.b16 %v2740, %v2738
      %2805 = vmatprep.subr.bf16.mxu0 0
      %2806 = vmatpush1.bf16.msra.mxu0 %v2629
      %2807 = vmatprep.subr.bf16.mxu0 0
      %2808 = vmatpush1.bf16.msra.mxu0 %v2630
      %2809 = vmatprep.subr.bf16.mxu0 0
      %2810 = vmatpush1.bf16.msra.mxu0 %v2631
      %2811 = vmatprep.subr.bf16.mxu0 0
      %2812 = vmatpush1.bf16.msra.mxu0 %v2632
      %2813 = vmatprep.subr.bf16.mxu0 0
      %2814 = vmatpush1.bf16.msra.mxu0 %v2633
      %2815 = vmatprep.subr.bf16.mxu0 0
      %2816 = vmatpush1.bf16.msra.mxu0 %v2634
      %2817 = vmatprep.subr.bf16.mxu0 0
      %2818 = vmatpush1.bf16.msra.mxu0 %v2635
      %2819 = vmatprep.subr.bf16.mxu0 0
      %2820 = vmatpush1.bf16.msra.mxu0 %v2636
      %2821 = vmatprep.subr.bf16.mxu0 0
      %2822 = vmatpush1.bf16.msra.mxu0 %v2637
      %2823 = vmatprep.subr.bf16.mxu0 0
      %2824 = vmatpush1.bf16.msra.mxu0 %v2638
      %2825 = vmatprep.subr.bf16.mxu0 0
      %2826 = vmatpush1.bf16.msra.mxu0 %v2639
      %2827 = vmatprep.subr.bf16.mxu0 0
      %2828 = vmatpush1.bf16.msra.mxu0 %v2640
      %2829 = vmatprep.subr.bf16.mxu0 0
      %2830 = vmatpush1.bf16.msra.mxu0 %v2641
      %2831 = vmatprep.subr.bf16.mxu0 0
      %2832 = vmatpush1.bf16.msra.mxu0 %v2642
      %2833 = vmatprep.subr.bf16.mxu0 0
      %2834 = vmatpush1.bf16.msra.mxu0 %v2643
      %2835 = vmatprep.subr.bf16.mxu0 0
      %2836 = vmatpush1.bf16.msra.mxu0 %v2644
      %2837 = vmatprep.mubr.bf16.mxu0 %v2742
      %2838 = vmatmul.mubr.bf16.gmra.mrb[0].mxu0 %v2741
      %v2839 = vpop.f32.mrb[0].mxu0
      %v2840 = vadd.f32 0.0, %v2839
      %v2841 = vpop.f32.mrb[0].mxu0
      %v2842 = vpop.f32.mrb[0].mxu0
      %v2843 = vadd.f32 0.0, %v2842
      %v2844 = vpop.f32.mrb[0].mxu0
      %2845 = vmatprep.mubr.bf16.mxu0 %v2744
      %2846 = vmatmul.mubr.bf16.gmra.mrb[0].mxu0 %v2743
      %v2847 = vpop.f32.mrb[0].mxu0
      %v2848 = vadd.f32 0.0, %v2847
      %v2849 = vpop.f32.mrb[0].mxu0
      %v2850 = vpop.f32.mrb[0].mxu0
      %v2851 = vadd.f32 0.0, %v2850
      %v2852 = vpop.f32.mrb[0].mxu0
      %2853 = vmatprep.mubr.bf16.mxu0 %v2746
      %2854 = vmatmul.mubr.bf16.gmra.mrb[0].mxu0 %v2745
      %v2855 = vpop.f32.mrb[0].mxu0
      %v2856 = vadd.f32 0.0, %v2855
      %v2857 = vpop.f32.mrb[0].mxu0
      %v2858 = vpop.f32.mrb[0].mxu0
      %v2859 = vadd.f32 0.0, %v2858
      %v2860 = vpop.f32.mrb[0].mxu0
      %2861 = vmatprep.mubr.bf16.mxu0 %v2748
      %2862 = vmatmul.mubr.bf16.gmra.mrb[0].mxu0 %v2747
      %v2863 = vpop.f32.mrb[0].mxu0
      %v2864 = vadd.f32 0.0, %v2863
      %v2865 = vpop.f32.mrb[0].mxu0
      %v2866 = vpop.f32.mrb[0].mxu0
      %v2867 = vadd.f32 0.0, %v2866
      %v2868 = vpop.f32.mrb[0].mxu0
      %2869 = vmatprep.mubr.bf16.mxu0 %v2750
      %2870 = vmatmul.mubr.bf16.gmra.mrb[0].mxu0 %v2749
      %v2871 = vpop.f32.mrb[0].mxu0
      %v2872 = vadd.f32 0.0, %v2871
      %v2873 = vpop.f32.mrb[0].mxu0
      %v2874 = vpop.f32.mrb[0].mxu0
      %v2875 = vadd.f32 0.0, %v2874
      %v2876 = vpop.f32.mrb[0].mxu0
      %2877 = vmatprep.mubr.bf16.mxu0 %v2752
      %2878 = vmatmul.mubr.bf16.gmra.mrb[0].mxu0 %v2751
      %v2879 = vpop.f32.mrb[0].mxu0
      %v2880 = vadd.f32 0.0, %v2879
      %v2881 = vpop.f32.mrb[0].mxu0
      %v2882 = vpop.f32.mrb[0].mxu0
      %v2883 = vadd.f32 0.0, %v2882
      %v2884 = vpop.f32.mrb[0].mxu0
      %2885 = vmatprep.mubr.bf16.mxu0 %v2754
      %2886 = vmatmul.mubr.bf16.gmra.mrb[0].mxu0 %v2753
      %v2887 = vpop.f32.mrb[0].mxu0
      %v2888 = vadd.f32 0.0, %v2887
      %v2889 = vpop.f32.mrb[0].mxu0
      %v2890 = vpop.f32.mrb[0].mxu0
      %v2891 = vadd.f32 0.0, %v2890
      %v2892 = vpop.f32.mrb[0].mxu0
      %2893 = vmatprep.mubr.bf16.mxu0 %v2756
      %2894 = vmatmul.mubr.bf16.gmra.mrb[0].mxu0 %v2755
      %v2895 = vpop.f32.mrb[0].mxu0
      %v2896 = vadd.f32 0.0, %v2895
      %v2897 = vpop.f32.mrb[0].mxu0
      %v2898 = vpop.f32.mrb[0].mxu0
      %v2899 = vadd.f32 0.0, %v2898
      %v2900 = vpop.f32.mrb[0].mxu0
      %2901 = vmatprep.mubr.bf16.mxu0 %v2758
      %2902 = vmatmul.mubr.bf16.gmra.mrb[0].mxu0 %v2757
      %v2903 = vpop.f32.mrb[0].mxu0
      %v2904 = vadd.f32 0.0, %v2903
      %v2905 = vpop.f32.mrb[0].mxu0
      %v2906 = vpop.f32.mrb[0].mxu0
      %v2907 = vadd.f32 0.0, %v2906
      %v2908 = vpop.f32.mrb[0].mxu0
      %2909 = vmatprep.mubr.bf16.mxu0 %v2760
      %2910 = vmatmul.mubr.bf16.gmra.mrb[0].mxu0 %v2759
      %v2911 = vpop.f32.mrb[0].mxu0
      %v2912 = vadd.f32 0.0, %v2911
      %v2913 = vpop.f32.mrb[0].mxu0
      %v2914 = vpop.f32.mrb[0].mxu0
      %v2915 = vadd.f32 0.0, %v2914
      %v2916 = vpop.f32.mrb[0].mxu0
      %2917 = vmatprep.mubr.bf16.mxu0 %v2762
      %2918 = vmatmul.mubr.bf16.gmra.mrb[0].mxu0 %v2761
      %v2919 = vpop.f32.mrb[0].mxu0
      %v2920 = vadd.f32 0.0, %v2919
      %v2921 = vpop.f32.mrb[0].mxu0
      %v2922 = vpop.f32.mrb[0].mxu0
      %v2923 = vadd.f32 0.0, %v2922
      %v2924 = vpop.f32.mrb[0].mxu0
      %2925 = vmatprep.mubr.bf16.mxu0 %v2764
      %2926 = vmatmul.mubr.bf16.gmra.mrb[0].mxu0 %v2763
      %v2927 = vpop.f32.mrb[0].mxu0
      %v2928 = vadd.f32 0.0, %v2927
      %v2929 = vpop.f32.mrb[0].mxu0
      %v2930 = vpop.f32.mrb[0].mxu0
      %v2931 = vadd.f32 0.0, %v2930
      %v2932 = vpop.f32.mrb[0].mxu0
      %2933 = vmatprep.mubr.bf16.mxu0 %v2766
      %2934 = vmatmul.mubr.bf16.gmra.mrb[0].mxu0 %v2765
      %v2935 = vpop.f32.mrb[0].mxu0
      %v2936 = vadd.f32 0.0, %v2935
      %v2937 = vpop.f32.mrb[0].mxu0
      %v2938 = vpop.f32.mrb[0].mxu0
      %v2939 = vadd.f32 0.0, %v2938
      %v2940 = vpop.f32.mrb[0].mxu0
      %2941 = vmatprep.mubr.bf16.mxu0 %v2768
      %2942 = vmatmul.mubr.bf16.gmra.mrb[0].mxu0 %v2767
      %v2943 = vpop.f32.mrb[0].mxu0
      %v2944 = vadd.f32 0.0, %v2943
      %v2945 = vpop.f32.mrb[0].mxu0
      %v2946 = vpop.f32.mrb[0].mxu0
      %v2947 = vadd.f32 0.0, %v2946
      %v2948 = vpop.f32.mrb[0].mxu0
      %2949 = vmatprep.mubr.bf16.mxu0 %v2770
      %2950 = vmatmul.mubr.bf16.gmra.mrb[0].mxu0 %v2769
      %v2951 = vpop.f32.mrb[0].mxu0
      %v2952 = vadd.f32 0.0, %v2951
      %v2953 = vpop.f32.mrb[0].mxu0
      %v2954 = vpop.f32.mrb[0].mxu0
      %v2955 = vadd.f32 0.0, %v2954
      %v2956 = vpop.f32.mrb[0].mxu0
      %2957 = vmatprep.mubr.bf16.mxu0 %v2772
      %2958 = vmatmul.mubr.bf16.gmra.mrb[0].mxu0 %v2771
      %v2959 = vpop.f32.mrb[0].mxu0
      %v2960 = vadd.f32 0.0, %v2959
      %v2961 = vpop.f32.mrb[0].mxu0
      %v2962 = vpop.f32.mrb[0].mxu0
      %v2963 = vadd.f32 0.0, %v2962
      %v2964 = vpop.f32.mrb[0].mxu0
      %2965 = vdwg.mxu0
      %v2966 = vld [vmem:[%s14] sm:$0xff]
      %v2967 = vld [vmem:[%s14 + $0x8] sm:$0xff]
      %v2968 = vld [vmem:[%s14 + $0x10] sm:$0xff]
      %v2969 = vld [vmem:[%s14 + $0x18] sm:$0xff]
      %v2970 = vld [vmem:[%s14 + $0x20] sm:$0xff]
      %v2971 = vld [vmem:[%s14 + $0x28] sm:$0xff]
      %v2972 = vld [vmem:[%s14 + $0x30] sm:$0xff]
      %v2973 = vld [vmem:[%s14 + $0x38] sm:$0xff]
      %v2974 = vld [vmem:[%s14 + $0x40] sm:$0xff]
      %v2975 = vld [vmem:[%s14 + $0x48] sm:$0xff]
      %v2976 = vld [vmem:[%s14 + $0x50] sm:$0xff]
      %v2977 = vld [vmem:[%s14 + $0x58] sm:$0xff]
      %v2978 = vld [vmem:[%s14 + $0x60] sm:$0xff]
      %v2979 = vld [vmem:[%s14 + $0x68] sm:$0xff]
      %v2980 = vld [vmem:[%s14 + $0x70] sm:$0xff]
      %v2981 = vld [vmem:[%s14 + $0x78] sm:$0xff]
      %v2982 = vld [vmem:[%s14 + $0x80] sm:$0xff]
      %v2983 = vld [vmem:[%s14 + $0x88] sm:$0xff]
      %v2984 = vld [vmem:[%s14 + $0x90] sm:$0xff]
      %v2985 = vld [vmem:[%s14 + $0x98] sm:$0xff]
      %v2986 = vld [vmem:[%s14 + $0xa0] sm:$0xff]
      %v2987 = vld [vmem:[%s14 + $0xa8] sm:$0xff]
      %v2988 = vld [vmem:[%s14 + $0xb0] sm:$0xff]
      %v2989 = vld [vmem:[%s14 + $0xb8] sm:$0xff]
      %v2990 = vld [vmem:[%s14 + $0xc0] sm:$0xff]
      %v2991 = vld [vmem:[%s14 + $0xc8] sm:$0xff]
      %v2992 = vld [vmem:[%s14 + $0xd0] sm:$0xff]
      %v2993 = vld [vmem:[%s14 + $0xd8] sm:$0xff]
      %v2994 = vld [vmem:[%s14 + $0xe0] sm:$0xff]
      %v2995 = vld [vmem:[%s14 + $0xe8] sm:$0xff]
      %v2996 = vld [vmem:[%s14 + $0xf0] sm:$0xff]
      %v2997 = vld [vmem:[%s14 + $0xf8] sm:$0xff]
      %v2998 = vmul.f32 %v2840, %v2966
      %v2999 = vmul.f32 %v2843, %v2967
      %v3000 = vmul.f32 %v2848, %v2968
      %v3001 = vmul.f32 %v2851, %v2969
      %v3002 = vmul.f32 %v2856, %v2970
      %v3003 = vmul.f32 %v2859, %v2971
      %v3004 = vmul.f32 %v2864, %v2972
      %v3005 = vmul.f32 %v2867, %v2973
      %v3006 = vmul.f32 %v2872, %v2974
      %v3007 = vmul.f32 %v2875, %v2975
      %v3008 = vmul.f32 %v2880, %v2976
      %v3009 = vmul.f32 %v2883, %v2977
      %v3010 = vmul.f32 %v2888, %v2978
      %v3011 = vmul.f32 %v2891, %v2979
      %v3012 = vmul.f32 %v2896, %v2980
      %v3013 = vmul.f32 %v2899, %v2981
      %v3014 = vmul.f32 %v2904, %v2982
      %v3015 = vmul.f32 %v2907, %v2983
      %v3016 = vmul.f32 %v2912, %v2984
      %v3017 = vmul.f32 %v2915, %v2985
      %v3018 = vmul.f32 %v2920, %v2986
      %v3019 = vmul.f32 %v2923, %v2987
      %v3020 = vmul.f32 %v2928, %v2988
      %v3021 = vmul.f32 %v2931, %v2989
      %v3022 = vmul.f32 %v2936, %v2990
      %v3023 = vmul.f32 %v2939, %v2991
      %v3024 = vmul.f32 %v2944, %v2992
      %v3025 = vmul.f32 %v2947, %v2993
      %v3026 = vmul.f32 %v2952, %v2994
      %v3027 = vmul.f32 %v2955, %v2995
      %v3028 = vmul.f32 %v2960, %v2996
      %v3029 = vmul.f32 %v2963, %v2997
      %v3030 = vld [vmem:[%s15] sm:$0xff]
      %v3031 = vld [vmem:[%s15 + $0x8] sm:$0xff]
      %v3032 = vld [vmem:[%s15 + $0x10] sm:$0xff]
      %v3033 = vld [vmem:[%s15 + $0x18] sm:$0xff]
      %v3034 = vld [vmem:[%s15 + $0x20] sm:$0xff]
      %v3035 = vld [vmem:[%s15 + $0x28] sm:$0xff]
      %v3036 = vld [vmem:[%s15 + $0x30] sm:$0xff]
      %v3037 = vld [vmem:[%s15 + $0x38] sm:$0xff]
      %v3038 = vld [vmem:[%s15 + $0x40] sm:$0xff]
      %v3039 = vld [vmem:[%s15 + $0x48] sm:$0xff]
      %v3040 = vld [vmem:[%s15 + $0x50] sm:$0xff]
      %v3041 = vld [vmem:[%s15 + $0x58] sm:$0xff]
      %v3042 = vld [vmem:[%s15 + $0x60] sm:$0xff]
      %v3043 = vld [vmem:[%s15 + $0x68] sm:$0xff]
      %v3044 = vld [vmem:[%s15 + $0x70] sm:$0xff]
      %v3045 = vld [vmem:[%s15 + $0x78] sm:$0xff]
      %v3046 = vld [vmem:[%s15 + $0x80] sm:$0xff]
      %v3047 = vld [vmem:[%s15 + $0x88] sm:$0xff]
      %v3048 = vld [vmem:[%s15 + $0x90] sm:$0xff]
      %v3049 = vld [vmem:[%s15 + $0x98] sm:$0xff]
      %v3050 = vld [vmem:[%s15 + $0xa0] sm:$0xff]
      %v3051 = vld [vmem:[%s15 + $0xa8] sm:$0xff]
      %v3052 = vld [vmem:[%s15 + $0xb0] sm:$0xff]
      %v3053 = vld [vmem:[%s15 + $0xb8] sm:$0xff]
      %v3054 = vld [vmem:[%s15 + $0xc0] sm:$0xff]
      %v3055 = vld [vmem:[%s15 + $0xc8] sm:$0xff]
      %v3056 = vld [vmem:[%s15 + $0xd0] sm:$0xff]
      %v3057 = vld [vmem:[%s15 + $0xd8] sm:$0xff]
      %v3058 = vld [vmem:[%s15 + $0xe0] sm:$0xff]
      %v3059 = vld [vmem:[%s15 + $0xe8] sm:$0xff]
      %v3060 = vld [vmem:[%s15 + $0xf0] sm:$0xff]
      %v3061 = vld [vmem:[%s15 + $0xf8] sm:$0xff]
      %v3062 = vadd.f32 %v2998, %v3030
      %v3063 = vadd.f32 %v2999, %v3031
      %v3064 = vadd.f32 %v3000, %v3032
      %v3065 = vadd.f32 %v3001, %v3033
      %v3066 = vadd.f32 %v3002, %v3034
      %v3067 = vadd.f32 %v3003, %v3035
      %v3068 = vadd.f32 %v3004, %v3036
      %v3069 = vadd.f32 %v3005, %v3037
      %v3070 = vadd.f32 %v3006, %v3038
      %v3071 = vadd.f32 %v3007, %v3039
      %v3072 = vadd.f32 %v3008, %v3040
      %v3073 = vadd.f32 %v3009, %v3041
      %v3074 = vadd.f32 %v3010, %v3042
      %v3075 = vadd.f32 %v3011, %v3043
      %v3076 = vadd.f32 %v3012, %v3044
      %v3077 = vadd.f32 %v3013, %v3045
      %v3078 = vadd.f32 %v3014, %v3046
      %v3079 = vadd.f32 %v3015, %v3047
      %v3080 = vadd.f32 %v3016, %v3048
      %v3081 = vadd.f32 %v3017, %v3049
      %v3082 = vadd.f32 %v3018, %v3050
      %v3083 = vadd.f32 %v3019, %v3051
      %v3084 = vadd.f32 %v3020, %v3052
      %v3085 = vadd.f32 %v3021, %v3053
      %v3086 = vadd.f32 %v3022, %v3054
      %v3087 = vadd.f32 %v3023, %v3055
      %v3088 = vadd.f32 %v3024, %v3056
      %v3089 = vadd.f32 %v3025, %v3057
      %v3090 = vadd.f32 %v3026, %v3058
      %v3091 = vadd.f32 %v3027, %v3059
      %v3092 = vadd.f32 %v3028, %v3060
      %v3093 = vadd.f32 %v3029, %v3061
      %v3094 = vmax.f32 %v3062, 0.0
      %v3095 = vmax.f32 %v3063, 0.0
      %v3096 = vmax.f32 %v3064, 0.0
      %v3097 = vmax.f32 %v3065, 0.0
      %v3098 = vmax.f32 %v3066, 0.0
      %v3099 = vmax.f32 %v3067, 0.0
      %v3100 = vmax.f32 %v3068, 0.0
      %v3101 = vmax.f32 %v3069, 0.0
      %v3102 = vmax.f32 %v3070, 0.0
      %v3103 = vmax.f32 %v3071, 0.0
      %v3104 = vmax.f32 %v3072, 0.0
      %v3105 = vmax.f32 %v3073, 0.0
      %v3106 = vmax.f32 %v3074, 0.0
      %v3107 = vmax.f32 %v3075, 0.0
      %v3108 = vmax.f32 %v3076, 0.0
      %v3109 = vmax.f32 %v3077, 0.0
      %v3110 = vmax.f32 %v3078, 0.0
      %v3111 = vmax.f32 %v3079, 0.0
      %v3112 = vmax.f32 %v3080, 0.0
      %v3113 = vmax.f32 %v3081, 0.0
      %v3114 = vmax.f32 %v3082, 0.0
      %v3115 = vmax.f32 %v3083, 0.0
      %v3116 = vmax.f32 %v3084, 0.0
      %v3117 = vmax.f32 %v3085, 0.0
      %v3118 = vmax.f32 %v3086, 0.0
      %v3119 = vmax.f32 %v3087, 0.0
      %v3120 = vmax.f32 %v3088, 0.0
      %v3121 = vmax.f32 %v3089, 0.0
      %v3122 = vmax.f32 %v3090, 0.0
      %v3123 = vmax.f32 %v3091, 0.0
      %v3124 = vmax.f32 %v3092, 0.0
      %v3125 = vmax.f32 %v3093, 0.0
      %vm3126 = vcmask 7168
      %3127 = vst.msk [vmem:[%s518] sm:$0xff] %vm3126, %v3094
      %3128 = vst.msk [vmem:[%s518 + $0x8] sm:$0xff] %vm3126, %v3095
      %3129 = vst.msk [vmem:[%s518 + $0x10] sm:$0xff] %vm3126, %v3096
      %3130 = vst.msk [vmem:[%s518 + $0x18] sm:$0xff] %vm3126, %v3097
      %3131 = vst.msk [vmem:[%s518 + $0x20] sm:$0xff] %vm3126, %v3098
      %3132 = vst.msk [vmem:[%s518 + $0x28] sm:$0xff] %vm3126, %v3099
      %3133 = vst.msk [vmem:[%s518 + $0x30] sm:$0xff] %vm3126, %v3100
      %3134 = vst.msk [vmem:[%s518 + $0x38] sm:$0xff] %vm3126, %v3101
      %3135 = vst.msk [vmem:[%s518 + $0x40] sm:$0xff] %vm3126, %v3102
      %3136 = vst.msk [vmem:[%s518 + $0x48] sm:$0xff] %vm3126, %v3103
      %3137 = vst.msk [vmem:[%s518 + $0x50] sm:$0xff] %vm3126, %v3104
      %3138 = vst.msk [vmem:[%s518 + $0x58] sm:$0xff] %vm3126, %v3105
      %3139 = vst.msk [vmem:[%s518 + $0x60] sm:$0xff] %vm3126, %v3106
      %3140 = vst.msk [vmem:[%s518 + $0x68] sm:$0xff] %vm3126, %v3107
      %3141 = vst.msk [vmem:[%s518 + $0x70] sm:$0xff] %vm3126, %v3108
      %3142 = vst.msk [vmem:[%s518 + $0x78] sm:$0xff] %vm3126, %v3109
      %3143 = vst.msk [vmem:[%s518 + $0x80] sm:$0xff] %vm3126, %v3110
      %3144 = vst.msk [vmem:[%s518 + $0x88] sm:$0xff] %vm3126, %v3111
      %3145 = vst.msk [vmem:[%s518 + $0x90] sm:$0xff] %vm3126, %v3112
      %3146 = vst.msk [vmem:[%s518 + $0x98] sm:$0xff] %vm3126, %v3113
      %3147 = vst.msk [vmem:[%s518 + $0xa0] sm:$0xff] %vm3126, %v3114
      %3148 = vst.msk [vmem:[%s518 + $0xa8] sm:$0xff] %vm3126, %v3115
      %3149 = vst.msk [vmem:[%s518 + $0xb0] sm:$0xff] %vm3126, %v3116
      %3150 = vst.msk [vmem:[%s518 + $0xb8] sm:$0xff] %vm3126, %v3117
      %3151 = vst.msk [vmem:[%s518 + $0xc0] sm:$0xff] %vm3126, %v3118
      %3152 = vst.msk [vmem:[%s518 + $0xc8] sm:$0xff] %vm3126, %v3119
      %3153 = vst.msk [vmem:[%s518 + $0xd0] sm:$0xff] %vm3126, %v3120
      %3154 = vst.msk [vmem:[%s518 + $0xd8] sm:$0xff] %vm3126, %v3121
      %3155 = vst.msk [vmem:[%s518 + $0xe0] sm:$0xff] %vm3126, %v3122
      %3156 = vst.msk [vmem:[%s518 + $0xe8] sm:$0xff] %vm3126, %v3123
      %3157 = vst.msk [vmem:[%s518 + $0xf0] sm:$0xff] %vm3126, %v3124
      %3158 = vst.msk [vmem:[%s518 + $0xf8] sm:$0xff] %vm3126, %v3125
      %p3159 = scmp.lt.s32.totalorder %s27, 1
      %s3160 = scalar_select %p3159, %s27, 1
      %s3161 = smul.addr %s3160, 32
      %s3162 = smul.addr %s3161, 8
      %s3163 = scalar_lea.vmem %s16, %s3162
      // Predicated region
      $region85: #{tpu_custom_call.1} parent=83 // pred_check
        %p3164 = pneg %p386
      $region86: #{tpu_custom_call.1} parent=83 // pred_check_branch
        %3166 = sbr.rel (%p3164) target = $region88
      $region87: #{tpu_custom_call.1} parent=83 // pred_region
        _
      $region88: #{tpu_custom_call.1} parent=83 // pred_fallthru
        _
    $region84: #{tpu_custom_call.1} parent=5 // pred_fallthru
      _
    %p3167 = scmp.le.s32.totalorder 2, %s22
    // Predicated region
    $region89: #{tpu_custom_call.1} parent=5 // pred_check
      %p3168 = pneg %p3167
    $region90: #{tpu_custom_call.1} parent=5 // pred_check_branch
      %3170 = sbr.rel (%p3168) target = $region92
    $region91: #{tpu_custom_call.1} parent=5 // pred_region
      %s3171 = ssub.s32 %s22, 2
      // Predicated region
      $region93: #{tpu_custom_call.1} parent=91 // pred_check
        %p3172 = pneg %p392
      $region94: #{tpu_custom_call.1} parent=91 // pred_check_branch
        %3174 = sbr.rel (%p3172) target = $region96
      $region95: #{tpu_custom_call.1} parent=91 // pred_region
        %p3175 = scmp.lt.s32.totalorder %s28, 1
        %s3176 = scalar_select %p3175, %s28, 1
        %s3177 = smul.addr %s3176, 32
        %s3178 = smul.addr %s3177, 8
        %s3179 = scalar_lea.vmem %s16, %s3178
      $region96: #{tpu_custom_call.1} parent=91 // pred_fallthru
        _
    $region92: #{tpu_custom_call.1} parent=5 // pred_fallthru
      _
  $region6: #{tpu_custom_call.1} parent=0 // loop_footer
    %s26 = sadd.s32 1, %s22
  $region7: #{tpu_custom_call.1} parent=0 // loop_footer_branch
    %21 = sbr.rel target = $region3
  $region8: #{tpu_custom_call.1} parent=0 // loop_exit
    _

</llo_original>
